<compile_context>
chip_gen: v5e
topology: v5e:2x2
jax: 0.10.0
libtpu: 0.0.40
codegen_flags: <defaults>
</compile_context>

<pallas_src>
import math
from functools import partial

import numpy as np
import jax
import jax.numpy as jnp
from jax.experimental import pallas as pl
from jax.experimental.pallas import tpu as pltpu

# ------------------------------------------------------------------
# Config (mirrors the config.model.* fields DiffusionDenoise reads)
# ------------------------------------------------------------------
DATA_CHANNELS   = 2
INPUT_STEPS     = 2
COND_CHANNELS   = INPUT_STEPS * DATA_CHANNELS        # 4
IN_CHANNELS     = COND_CHANNELS + DATA_CHANNELS      # 6 (concat(cond, x_t) on channels)
DIM             = 32                                 # config.model.dim
DIFFUSION_STEPS = 8
BETA_SCHEDULE   = "cosine"
CLIP_DENOISED   = True
N_TAPS          = 9                                  # 3x3 conv taps


# ------------------------------------------------------------------
# Diffusion schedule buffers (numpy, float64 -> float32, like the module)
# ------------------------------------------------------------------
def cosine_beta_schedule(timesteps, s=0.008):
    steps = timesteps + 1
    x = np.linspace(0, timesteps, steps, dtype=np.float64)
    ac = np.cos((x / timesteps + s) / (1 + s) * math.pi * 0.5) ** 2
    ac = ac / ac[0]
    betas = 1.0 - ac[1:] / ac[:-1]
    return np.clip(betas, 0.0, 0.999)


def linear_beta_schedule(timesteps):
    scale = 1000.0 / timesteps
    return np.linspace(scale * 1e-4, scale * 2e-2, timesteps, dtype=np.float64)


def make_diffusion_buffers(timesteps, schedule="cosine"):
    betas = cosine_beta_schedule(timesteps) if schedule == "cosine" else linear_beta_schedule(timesteps)
    alphas = 1.0 - betas
    ac = np.cumprod(alphas)
    ac_prev = np.concatenate([[1.0], ac[:-1]])
    post_var = betas * (1.0 - ac_prev) / (1.0 - ac)
    return dict(
        sqrt_alphas_cumprod=np.sqrt(ac).astype(np.float32),
        sqrt_one_minus_alphas_cumprod=np.sqrt(1.0 - ac).astype(np.float32),
        posterior_mean_coef1=(betas * np.sqrt(ac_prev) / (1.0 - ac)).astype(np.float32),
        posterior_mean_coef2=((1.0 - ac_prev) * np.sqrt(alphas) / (1.0 - ac)).astype(np.float32),
        posterior_log_variance_clipped=np.log(np.clip(post_var, 1e-20, None)).astype(np.float32),
    )


# ------------------------------------------------------------------
# Vectorized build of the concatenated 0/1 shift matrices.
# ST_cat[:, k*N:(k+1)*N] = S_k^T  with  (x @ S_k^T)[c, n] = x[c, neighbor_k(n)]
# (zero outside the image).  Tap order matches im2col_3x3: k = 3*(dy+1)+(dx+1).
# ------------------------------------------------------------------
def make_shift_cat_T(b, h, w):
    n = b * h * w
    st = np.zeros((n, N_TAPS * n), np.float32)
    bi, yy, xx = np.meshgrid(np.arange(b), np.arange(h), np.arange(w), indexing="ij")
    dst = ((bi * h + yy) * w + xx).ravel()
    k = 0
    for dy in (-1, 0, 1):
        for dx in (-1, 0, 1):
            ys, xs = yy + dy, xx + dx
            valid = ((ys >= 0) & (ys < h) & (xs >= 0) & (xs < w)).ravel()
            src = ((bi * h + np.clip(ys, 0, h - 1)) * w + np.clip(xs, 0, w - 1)).ravel()
            st[src[valid], k * n + dst[valid]] = 1.0
            k += 1
    return st


# ------------------------------------------------------------------
# The fused reverse-diffusion Pallas kernel (whole 8-step loop, VMEM resident)
# ------------------------------------------------------------------
def _make_sample_kernel(steps, cd, n, pmc1, pmc2):
    """pmc1/pmc2 are tuples of Python floats baked into the statically unrolled loop."""

    def kernel(hpre_ref,    # (STEPS, DIM, N)   f32  : sac*conv(cond)+somac*conv(cnoise)+b1+temb@wt
               xT_ref,      # (cd, N)           f32  : x_T
               snoise_ref,  # (STEPS-1, cd, N)  f32  : sigma[t]-pre-scaled posterior noise (t=1..)
               stcat_ref,   # (N, 9N)           bf16 : concatenated 0/1 shift matrices
               wbig_ref,    # (DIM, 9*cd)       bf16 : x_t rows of conv weight, col = k*cd + c
               w2T_ref,     # (cd, DIM)         bf16 : 1x1 output conv, transposed
               b2_ref,      # (cd, 1)           f32
               o_ref,       # (cd, N)           f32  : final sample (single lane-dense HBM write)
               patch_ref):  # (9*cd, N)         f32  : VMEM scratch for the patch relayout
        x = xT_ref[...]                                   # (cd, N) f32, stays VMEM/vreg resident
        for i in range(steps):                            # statically unrolled
            t = steps - 1 - i
            # ---- denoiser: x_t part of the 3x3 conv ------------------------------------
            # TODO(synk): real lucidrains ConvNeXt U-Net (external, not in the provided
            # source) is replaced by this 3x3-conv + time-MLP + GELU + 1x1-conv stand-in.
            xb = x.astype(jnp.bfloat16)
            # one wide MXU call: all 9 shifted copies at once (0/1 matrix -> exact values)
            xs = jnp.dot(xb, stcat_ref[...], preferred_element_type=jnp.float32)   # (cd, 9N)
            # relayout (cd, 9N) -> (9*cd, N) via 9 static sliced stores (row = k*cd + c)
            for k in range(N_TAPS):
                patch_ref[pl.ds(k * cd, cd), :] = xs[:, k * n:(k + 1) * n]
            # one MXU call for the full 9-tap weight contraction (f32 accumulate into h)
            h = hpre_ref[t] + jnp.dot(wbig_ref[...],
                                      patch_ref[...].astype(jnp.bfloat16),
                                      preferred_element_type=jnp.float32)          # (DIM, N)
            h = jax.nn.gelu(h)  # tanh approx; TODO(synk): PyTorch nn.GELU default is exact erf
            x0 = jnp.dot(w2T_ref[...], h.astype(jnp.bfloat16),
                         preferred_element_type=jnp.float32) + b2_ref[...]          # (cd, N)
            if CLIP_DENOISED:
                x0 = jnp.clip(x0, -1.0, 1.0)
            # ---- posterior mean + (pre-scaled) noise (f32 elementwise, baked constants)
            x = pmc1[t] * x0 + pmc2[t] * x
            if t > 0:                                     # no noise at t == 0 (static)
                x = x + snoise_ref[t - 1]
        o_ref[...] = x                                    # single (cd, 128) lane-dense store

    return kernel


_VMEM = pl.BlockSpec(memory_space=pltpu.MemorySpace.VMEM)


# ------------------------------------------------------------------
# JAX glue: one-time (loop-invariant) precompute
# ------------------------------------------------------------------
def sinusoidal_time_emb_table(steps, dim):
    half = dim // 2
    freqs = jnp.exp(jnp.arange(half, dtype=jnp.float32) * (-math.log(10000.0) / (half - 1)))
    arg = jnp.arange(steps, dtype=jnp.float32)[:, None] * freqs[None, :]
    return jnp.concatenate([jnp.sin(arg), jnp.cos(arg)], axis=-1)      # (steps, dim)


def im2col_3x3(x_bhwc):
    b, h, w, c = x_bhwc.shape
    xp = jnp.pad(x_bhwc, ((0, 0), (1, 1), (1, 1), (0, 0)))
    cols = [xp[:, dy:dy + h, dx:dx + w, :] for dy in range(3) for dx in range(3)]
    return jnp.concatenate(cols, axis=-1).reshape(b * h * w, 9 * c)


def init_denoiser_params(key):
    k1, k2, k3 = jax.random.split(key, 3)
    fan1 = 9 * IN_CHANNELS
    return dict(
        w1=jax.random.normal(k1, (fan1, DIM), jnp.float32) / math.sqrt(fan1),
        b1=jnp.zeros((1, DIM), jnp.float32),
        wt=jax.random.normal(k2, (DIM, DIM), jnp.float32) / math.sqrt(DIM),
        w2=jax.random.normal(k3, (DIM, DATA_CHANNELS), jnp.float32) / math.sqrt(DIM),
        b2=jnp.zeros((1, DATA_CHANNELS), jnp.float32),
    )


# ------------------------------------------------------------------
# DiffusionDenoise.sample (reverse diffusion loop, one fused pallas_call)
# ------------------------------------------------------------------
def diffusion_sample(params, bufs, d_shape_nchw, cond_nchw, key):
    b, cd, h, w = d_shape_nchw
    n = b * h * w

    # --- RNG (once, outside the kernel) ---------------------------------------
    k_xt, k_cn, k_noise = jax.random.split(key, 3)
    xT = jnp.transpose(jax.random.normal(k_xt, (b, cd, h, w), jnp.float32),
                       (1, 0, 2, 3)).reshape(cd, n)                     # (cd, N)
    cnoise_nhwc = jax.random.normal(k_cn, (b, h, w, COND_CHANNELS), jnp.float32)
    noise = jax.random.normal(k_noise, (DIFFUSION_STEPS - 1, cd, n), jnp.float32)
    # pre-scale posterior noise by sigma[t] = exp(0.5*log_var[t]) for t = 1..STEPS-1
    sigma = np.exp(0.5 * bufs["posterior_log_variance_clipped"])[1:]    # (STEPS-1,)
    snoise = noise * jnp.asarray(sigma, jnp.float32)[:, None, None]     # (STEPS-1, cd, N)

    # --- split conv weight into conditioning rows / x_t rows per 3x3 tap -------
    cond_idx = np.array([k * IN_CHANNELS + c
                         for k in range(N_TAPS) for c in range(COND_CHANNELS)])
    x_idx = np.array([k * IN_CHANNELS + COND_CHANNELS + c
                      for k in range(N_TAPS) for c in range(cd)])
    w1_cond = params["w1"][cond_idx]                                    # (9*COND, DIM)
    wbig = params["w1"][x_idx].T.astype(jnp.bfloat16)                   # (DIM, 9*cd), col=k*cd+c

    # --- loop-invariant conv of conditioning / its q_sample noise (linearity) --
    cond_nhwc = jnp.transpose(cond_nchw, (0, 2, 3, 1))                  # (b,h,w,COND)
    Hc = jnp.dot(im2col_3x3(cond_nhwc), w1_cond).T                      # (DIM, N)
    Hn = jnp.dot(im2col_3x3(cnoise_nhwc), w1_cond).T                    # (DIM, N)

    # --- per-step precomputed linear term (incl. time-embedding MLP bias) ------
    tbias = jnp.dot(sinusoidal_time_emb_table(DIFFUSION_STEPS, DIM),
                    params["wt"]) + params["b1"]                        # (STEPS, DIM)
    sac = jnp.asarray(bufs["sqrt_alphas_cumprod"])[:, None, None]
    somac = jnp.asarray(bufs["sqrt_one_minus_alphas_cumprod"])[:, None, None]
    hpre = sac * Hc[None] + somac * Hn[None] + tbias[:, :, None]        # (STEPS, DIM, N) f32
    # TODO(synk): at production N store hpre/snoise in bf16 (upcast in-kernel) to halve VMEM.

    stcat = jnp.asarray(make_shift_cat_T(b, h, w), jnp.bfloat16)        # (N, 9N)
    w2T = params["w2"].T.astype(jnp.bfloat16)                           # (cd, DIM)
    b2 = params["b2"].reshape(cd, 1)                                    # (cd, 1)

    # --- schedule scalars baked into the statically unrolled kernel ------------
    pmc1 = tuple(float(v) for v in bufs["posterior_mean_coef1"])
    pmc2 = tuple(float(v) for v in bufs["posterior_mean_coef2"])

    kernel = _make_sample_kernel(DIFFUSION_STEPS, cd, n, pmc1, pmc2)

    operands = (hpre, xT, snoise, stcat, wbig, w2T, b2)
    vmem_bytes = sum(int(np.prod(a.shape)) * a.dtype.itemsize for a in operands)
    vmem_bytes += cd * n * 4 + N_TAPS * cd * n * 4                      # output + scratch
    vmem_limit = int(min(128 * 1024 * 1024, max(8 * 1024 * 1024, 2 * vmem_bytes)))

    # TODO(synk): for production spatial sizes, add a row grid over N with
    # dimension_semantics=("parallel",) (halo handled by banded ST blocks or pltpu.roll
    # masks) so both v7x TensorCores are used and the working set stays under 64 MiB VMEM.
    x0 = pl.pallas_call(
        kernel,
        out_shape=jax.ShapeDtypeStruct((cd, n), jnp.float32),
        in_specs=[_VMEM] * len(operands),
        out_specs=_VMEM,
        scratch_shapes=[pltpu.VMEM((N_TAPS * cd, n), jnp.float32)],
        compiler_params=pltpu.CompilerParams(vmem_limit_bytes=vmem_limit),
    )(*operands)

    return jnp.transpose(x0.reshape(cd, b, h, w), (1, 0, 2, 3))         # back to NCHW


def diffusion_denoise_forward(params, bufs, data, conditioning, key):
    # eval-mode forward: reshape 5D -> 4D, then sample(d.shape, cond)
    d = data.reshape((-1,) + data.shape[2:])
    cond = conditioning.reshape((-1,) + conditioning.shape[2:])
    return diffusion_sample(params, bufs, d.shape, cond, key)


# ------------------------------------------------------------------
if __name__ == "__main__":
    key = jax.random.PRNGKey(0)
    k_data, k_cond, k_par, k_samp = jax.random.split(key, 4)

    B0, B1, H, W = 2, 1, 8, 8
    data = jax.random.normal(k_data, (B0, B1, DATA_CHANNELS, H, W), jnp.float32)
    conditioning = jax.random.normal(k_cond, (B0, B1, COND_CHANNELS, H, W), jnp.float32)

    params = init_denoiser_params(k_par)
    bufs = make_diffusion_buffers(DIFFUSION_STEPS, BETA_SCHEDULE)

    fwd = jax.jit(partial(diffusion_denoise_forward, params, bufs))
    out = fwd(data, conditioning, k_samp)
    jax.block_until_ready(out)

    assert out.shape == (B0 * B1, DATA_CHANNELS, H, W), out.shape
    assert bool(jnp.all(jnp.isfinite(out)))
    print("KERNEL_OK")
</pallas_src>

<mosaic_0001>
module attributes {stable_mosaic.version = 11 : i64} {
  func.func @kernel(%arg0: memref<8x32x128xf32, #tpu.memory_space<vmem>>, %arg1: memref<2x128xf32, #tpu.memory_space<vmem>>, %arg2: memref<7x2x128xf32, #tpu.memory_space<vmem>>, %arg3: memref<128x1152xbf16, #tpu.memory_space<vmem>>, %arg4: memref<32x18xbf16, #tpu.memory_space<vmem>>, %arg5: memref<2x32xbf16, #tpu.memory_space<vmem>>, %arg6: memref<2x1xf32, #tpu.memory_space<vmem>>, %arg7: memref<2x128xf32, #tpu.memory_space<vmem>>, %arg8: memref<18x128xf32, #tpu.memory_space<vmem>>) attributes {dimension_semantics = [], scalar_prefetch = 0 : i64, scratch_operands = 1 : i64, tpu.core_type = #tpu.core_type<tc>} {
    %c0 = arith.constant 0 : index
    %c0_0 = arith.constant 0 : index
    %0 = vector.load %arg1[%c0, %c0_0] : memref<2x128xf32, #tpu.memory_space<vmem>>, vector<2x128xf32>
    %1 = arith.truncf %0 : vector<2x128xf32> to vector<2x128xbf16>
    %c0_1 = arith.constant 0 : index
    %c0_2 = arith.constant 0 : index
    %2 = vector.load %arg3[%c0_1, %c0_2] : memref<128x1152xbf16, #tpu.memory_space<vmem>>, vector<128x1152xbf16>
    %cst = arith.constant dense<0.000000e+00> : vector<2x1152xf32>
    %3 = tpu.matmul %1, %2, %cst {dimension_numbers = #tpu.dot_dimension_numbers<[1], [0], [0], [1], [0, 0, 1, 1], [], []>} : vector<2x128xbf16>, vector<128x1152xbf16>, vector<2x1152xf32> -> vector<2x1152xf32>
    %4 = vector.extract_strided_slice %3 {offsets = [0, 0], sizes = [2, 128], strides = [1, 1]} : vector<2x1152xf32> to vector<2x128xf32>
    %c0_3 = arith.constant 0 : index
    %c0_4 = arith.constant 0 : index
    %5 = vector.load %arg8[%c0_3, %c0_4] : memref<18x128xf32, #tpu.memory_space<vmem>>, vector<2x128xf32>
    tpu.vector_store %arg8[%c0_3, %c0_4], %4 {strides = array<i32>} : memref<18x128xf32, #tpu.memory_space<vmem>>, vector<2x128xf32>,
    %6 = vector.extract_strided_slice %3 {offsets = [0, 128], sizes = [2, 128], strides = [1, 1]} : vector<2x1152xf32> to vector<2x128xf32>
    %c2 = arith.constant 2 : index
    %c0_5 = arith.constant 0 : index
    %7 = vector.load %arg8[%c2, %c0_5] : memref<18x128xf32, #tpu.memory_space<vmem>>, vector<2x128xf32>
    tpu.vector_store %arg8[%c2, %c0_5], %6 {strides = array<i32>} : memref<18x128xf32, #tpu.memory_space<vmem>>, vector<2x128xf32>,
    %8 = vector.extract_strided_slice %3 {offsets = [0, 256], sizes = [2, 128], strides = [1, 1]} : vector<2x1152xf32> to vector<2x128xf32>
    %c4 = arith.constant 4 : index
    %c0_6 = arith.constant 0 : index
    %9 = vector.load %arg8[%c4, %c0_6] : memref<18x128xf32, #tpu.memory_space<vmem>>, vector<2x128xf32>
    tpu.vector_store %arg8[%c4, %c0_6], %8 {strides = array<i32>} : memref<18x128xf32, #tpu.memory_space<vmem>>, vector<2x128xf32>,
    %10 = vector.extract_strided_slice %3 {offsets = [0, 384], sizes = [2, 128], strides = [1, 1]} : vector<2x1152xf32> to vector<2x128xf32>
    %c6 = arith.constant 6 : index
    %c0_7 = arith.constant 0 : index
    %11 = vector.load %arg8[%c6, %c0_7] : memref<18x128xf32, #tpu.memory_space<vmem>>, vector<2x128xf32>
    tpu.vector_store %arg8[%c6, %c0_7], %10 {strides = array<i32>} : memref<18x128xf32, #tpu.memory_space<vmem>>, vector<2x128xf32>,
    %12 = vector.extract_strided_slice %3 {offsets = [0, 512], sizes = [2, 128], strides = [1, 1]} : vector<2x1152xf32> to vector<2x128xf32>
    %c8 = arith.constant 8 : index
    %c0_8 = arith.constant 0 : index
    %13 = vector.load %arg8[%c8, %c0_8] : memref<18x128xf32, #tpu.memory_space<vmem>>, vector<2x128xf32>
    tpu.vector_store %arg8[%c8, %c0_8], %12 {strides = array<i32>} : memref<18x128xf32, #tpu.memory_space<vmem>>, vector<2x128xf32>,
    %14 = vector.extract_strided_slice %3 {offsets = [0, 640], sizes = [2, 128], strides = [1, 1]} : vector<2x1152xf32> to vector<2x128xf32>
    %c10 = arith.constant 10 : index
    %c0_9 = arith.constant 0 : index
    %15 = vector.load %arg8[%c10, %c0_9] : memref<18x128xf32, #tpu.memory_space<vmem>>, vector<2x128xf32>
    tpu.vector_store %arg8[%c10, %c0_9], %14 {strides = array<i32>} : memref<18x128xf32, #tpu.memory_space<vmem>>, vector<2x128xf32>,
    %16 = vector.extract_strided_slice %3 {offsets = [0, 768], sizes = [2, 128], strides = [1, 1]} : vector<2x1152xf32> to vector<2x128xf32>
    %c12 = arith.constant 12 : index
    %c0_10 = arith.constant 0 : index
    %17 = vector.load %arg8[%c12, %c0_10] : memref<18x128xf32, #tpu.memory_space<vmem>>, vector<2x128xf32>
    tpu.vector_store %arg8[%c12, %c0_10], %16 {strides = array<i32>} : memref<18x128xf32, #tpu.memory_space<vmem>>, vector<2x128xf32>,
    %18 = vector.extract_strided_slice %3 {offsets = [0, 896], sizes = [2, 128], strides = [1, 1]} : vector<2x1152xf32> to vector<2x128xf32>
    %c14 = arith.constant 14 : index
    %c0_11 = arith.constant 0 : index
    %19 = vector.load %arg8[%c14, %c0_11] : memref<18x128xf32, #tpu.memory_space<vmem>>, vector<2x128xf32>
    tpu.vector_store %arg8[%c14, %c0_11], %18 {strides = array<i32>} : memref<18x128xf32, #tpu.memory_space<vmem>>, vector<2x128xf32>,
    %20 = vector.extract_strided_slice %3 {offsets = [0, 1024], sizes = [2, 128], strides = [1, 1]} : vector<2x1152xf32> to vector<2x128xf32>
    %c16 = arith.constant 16 : index
    %c0_12 = arith.constant 0 : index
    %21 = vector.load %arg8[%c16, %c0_12] : memref<18x128xf32, #tpu.memory_space<vmem>>, vector<2x128xf32>
    tpu.vector_store %arg8[%c16, %c0_12], %20 {strides = array<i32>} : memref<18x128xf32, #tpu.memory_space<vmem>>, vector<2x128xf32>,
    %c7 = arith.constant 7 : index
    %c0_13 = arith.constant 0 : index
    %c0_14 = arith.constant 0 : index
    %22 = vector.load %arg0[%c7, %c0_13, %c0_14] : memref<8x32x128xf32, #tpu.memory_space<vmem>>, vector<1x32x128xf32>
    %23 = vector.shape_cast %22 : vector<1x32x128xf32> to vector<32x128xf32>
    %c0_15 = arith.constant 0 : index
    %c0_16 = arith.constant 0 : index
    %24 = vector.load %arg4[%c0_15, %c0_16] : memref<32x18xbf16, #tpu.memory_space<vmem>>, vector<32x18xbf16>
    %c0_17 = arith.constant 0 : index
    %c0_18 = arith.constant 0 : index
    %25 = vector.load %arg8[%c0_17, %c0_18] : memref<18x128xf32, #tpu.memory_space<vmem>>, vector<18x128xf32>
    %26 = arith.truncf %25 : vector<18x128xf32> to vector<18x128xbf16>
    %cst_19 = arith.constant dense<0.000000e+00> : vector<32x128xf32>
    %27 = tpu.matmul %24, %26, %cst_19 {dimension_numbers = #tpu.dot_dimension_numbers<[1], [0], [0], [1], [0, 0, 1, 1], [], []>} : vector<32x18xbf16>, vector<18x128xbf16>, vector<32x128xf32> -> vector<32x128xf32>
    %28 = arith.addf %23, %27 : vector<32x128xf32>
    %29 = arith.mulf %28, %28 : vector<32x128xf32>
    %30 = arith.mulf %28, %29 : vector<32x128xf32>
    %cst_20 = arith.constant 4.471500e-02 : f32
    %31 = vector.broadcast %cst_20 : f32 to vector<32x128xf32>
    %32 = arith.mulf %31, %30 : vector<32x128xf32>
    %33 = arith.addf %28, %32 : vector<32x128xf32>
    %cst_21 = arith.constant 0.797884583 : f32
    %34 = vector.broadcast %cst_21 : f32 to vector<32x128xf32>
    %35 = arith.mulf %34, %33 : vector<32x128xf32>
    %36 = math.tanh %35 : vector<32x128xf32>
    %cst_22 = arith.constant 1.000000e+00 : f32
    %37 = vector.broadcast %cst_22 : f32 to vector<32x128xf32>
    %38 = arith.addf %37, %36 : vector<32x128xf32>
    %cst_23 = arith.constant 5.000000e-01 : f32
    %39 = vector.broadcast %cst_23 : f32 to vector<32x128xf32>
    %40 = arith.mulf %39, %38 : vector<32x128xf32>
    %41 = arith.mulf %28, %40 : vector<32x128xf32>
    %c0_24 = arith.constant 0 : index
    %c0_25 = arith.constant 0 : index
    %42 = vector.load %arg5[%c0_24, %c0_25] : memref<2x32xbf16, #tpu.memory_space<vmem>>, vector<2x32xbf16>
    %43 = arith.truncf %41 : vector<32x128xf32> to vector<32x128xbf16>
    %cst_26 = arith.constant dense<0.000000e+00> : vector<2x128xf32>
    %44 = tpu.matmul %42, %43, %cst_26 {dimension_numbers = #tpu.dot_dimension_numbers<[1], [0], [0], [1], [0, 0, 1, 1], [], []>} : vector<2x32xbf16>, vector<32x128xbf16>, vector<2x128xf32> -> vector<2x128xf32>
    %c0_27 = arith.constant 0 : index
    %c0_28 = arith.constant 0 : index
    %45 = vector.load %arg6[%c0_27, %c0_28] : memref<2x1xf32, #tpu.memory_space<vmem>>, vector<2x1xf32>
    %46 = vector.broadcast %45 : vector<2x1xf32> to vector<2x128xf32>
    %47 = arith.addf %44, %46 : vector<2x128xf32>
    %cst_29 = arith.constant -1.000000e+00 : f32
    %cst_30 = arith.constant 1.000000e+00 : f32
    %48 = vector.broadcast %cst_29 : f32 to vector<2x128xf32>
    %49 = arith.maximumf %48, %47 : vector<2x128xf32>
    %50 = vector.broadcast %cst_30 : f32 to vector<2x128xf32>
    %51 = arith.minimumf %50, %49 : vector<2x128xf32>
    %cst_31 = arith.constant 0.193390414 : f32
    %52 = vector.broadcast %cst_31 : f32 to vector<2x128xf32>
    %53 = arith.mulf %52, %51 : vector<2x128xf32>
    %cst_32 = arith.constant 0.0304389503 : f32
    %54 = vector.broadcast %cst_32 : f32 to vector<2x128xf32>
    %55 = arith.mulf %54, %0 : vector<2x128xf32>
    %56 = arith.addf %53, %55 : vector<2x128xf32>
    %c6_33 = arith.constant 6 : index
    %c0_34 = arith.constant 0 : index
    %c0_35 = arith.constant 0 : index
    %57 = vector.load %arg2[%c6_33, %c0_34, %c0_35] : memref<7x2x128xf32, #tpu.memory_space<vmem>>, vector<1x2x128xf32>
    %58 = vector.shape_cast %57 : vector<1x2x128xf32> to vector<2x128xf32>
    %59 = arith.addf %56, %58 : vector<2x128xf32>
    %60 = arith.truncf %59 : vector<2x128xf32> to vector<2x128xbf16>
    %c0_36 = arith.constant 0 : index
    %c0_37 = arith.constant 0 : index
    %61 = vector.load %arg3[%c0_36, %c0_37] : memref<128x1152xbf16, #tpu.memory_space<vmem>>, vector<128x1152xbf16>
    %cst_38 = arith.constant dense<0.000000e+00> : vector<2x1152xf32>
    %62 = tpu.matmul %60, %61, %cst_38 {dimension_numbers = #tpu.dot_dimension_numbers<[1], [0], [0], [1], [0, 0, 1, 1], [], []>} : vector<2x128xbf16>, vector<128x1152xbf16>, vector<2x1152xf32> -> vector<2x1152xf32>
    %63 = vector.extract_strided_slice %62 {offsets = [0, 0], sizes = [2, 128], strides = [1, 1]} : vector<2x1152xf32> to vector<2x128xf32>
    %c0_39 = arith.constant 0 : index
    %c0_40 = arith.constant 0 : index
    %64 = vector.load %arg8[%c0_39, %c0_40] : memref<18x128xf32, #tpu.memory_space<vmem>>, vector<2x128xf32>
    tpu.vector_store %arg8[%c0_39, %c0_40], %63 {strides = array<i32>} : memref<18x128xf32, #tpu.memory_space<vmem>>, vector<2x128xf32>,
    %65 = vector.extract_strided_slice %62 {offsets = [0, 128], sizes = [2, 128], strides = [1, 1]} : vector<2x1152xf32> to vector<2x128xf32>
    %c2_41 = arith.constant 2 : index
    %c0_42 = arith.constant 0 : index
    %66 = vector.load %arg8[%c2_41, %c0_42] : memref<18x128xf32, #tpu.memory_space<vmem>>, vector<2x128xf32>
    tpu.vector_store %arg8[%c2_41, %c0_42], %65 {strides = array<i32>} : memref<18x128xf32, #tpu.memory_space<vmem>>, vector<2x128xf32>,
    %67 = vector.extract_strided_slice %62 {offsets = [0, 256], sizes = [2, 128], strides = [1, 1]} : vector<2x1152xf32> to vector<2x128xf32>
    %c4_43 = arith.constant 4 : index
    %c0_44 = arith.constant 0 : index
    %68 = vector.load %arg8[%c4_43, %c0_44] : memref<18x128xf32, #tpu.memory_space<vmem>>, vector<2x128xf32>
    tpu.vector_store %arg8[%c4_43, %c0_44], %67 {strides = array<i32>} : memref<18x128xf32, #tpu.memory_space<vmem>>, vector<2x128xf32>,
    %69 = vector.extract_strided_slice %62 {offsets = [0, 384], sizes = [2, 128], strides = [1, 1]} : vector<2x1152xf32> to vector<2x128xf32>
    %c6_45 = arith.constant 6 : index
    %c0_46 = arith.constant 0 : index
    %70 = vector.load %arg8[%c6_45, %c0_46] : memref<18x128xf32, #tpu.memory_space<vmem>>, vector<2x128xf32>
    tpu.vector_store %arg8[%c6_45, %c0_46], %69 {strides = array<i32>} : memref<18x128xf32, #tpu.memory_space<vmem>>, vector<2x128xf32>,
    %71 = vector.extract_strided_slice %62 {offsets = [0, 512], sizes = [2, 128], strides = [1, 1]} : vector<2x1152xf32> to vector<2x128xf32>
    %c8_47 = arith.constant 8 : index
    %c0_48 = arith.constant 0 : index
    %72 = vector.load %arg8[%c8_47, %c0_48] : memref<18x128xf32, #tpu.memory_space<vmem>>, vector<2x128xf32>
    tpu.vector_store %arg8[%c8_47, %c0_48], %71 {strides = array<i32>} : memref<18x128xf32, #tpu.memory_space<vmem>>, vector<2x128xf32>,
    %73 = vector.extract_strided_slice %62 {offsets = [0, 640], sizes = [2, 128], strides = [1, 1]} : vector<2x1152xf32> to vector<2x128xf32>
    %c10_49 = arith.constant 10 : index
    %c0_50 = arith.constant 0 : index
    %74 = vector.load %arg8[%c10_49, %c0_50] : memref<18x128xf32, #tpu.memory_space<vmem>>, vector<2x128xf32>
    tpu.vector_store %arg8[%c10_49, %c0_50], %73 {strides = array<i32>} : memref<18x128xf32, #tpu.memory_space<vmem>>, vector<2x128xf32>,
    %75 = vector.extract_strided_slice %62 {offsets = [0, 768], sizes = [2, 128], strides = [1, 1]} : vector<2x1152xf32> to vector<2x128xf32>
    %c12_51 = arith.constant 12 : index
    %c0_52 = arith.constant 0 : index
    %76 = vector.load %arg8[%c12_51, %c0_52] : memref<18x128xf32, #tpu.memory_space<vmem>>, vector<2x128xf32>
    tpu.vector_store %arg8[%c12_51, %c0_52], %75 {strides = array<i32>} : memref<18x128xf32, #tpu.memory_space<vmem>>, vector<2x128xf32>,
    %77 = vector.extract_strided_slice %62 {offsets = [0, 896], sizes = [2, 128], strides = [1, 1]} : vector<2x1152xf32> to vector<2x128xf32>
    %c14_53 = arith.constant 14 : index
    %c0_54 = arith.constant 0 : index
    %78 = vector.load %arg8[%c14_53, %c0_54] : memref<18x128xf32, #tpu.memory_space<vmem>>, vector<2x128xf32>
    tpu.vector_store %arg8[%c14_53, %c0_54], %77 {strides = array<i32>} : memref<18x128xf32, #tpu.memory_space<vmem>>, vector<2x128xf32>,
    %79 = vector.extract_strided_slice %62 {offsets = [0, 1024], sizes = [2, 128], strides = [1, 1]} : vector<2x1152xf32> to vector<2x128xf32>
    %c16_55 = arith.constant 16 : index
    %c0_56 = arith.constant 0 : index
    %80 = vector.load %arg8[%c16_55, %c0_56] : memref<18x128xf32, #tpu.memory_space<vmem>>, vector<2x128xf32>
    tpu.vector_store %arg8[%c16_55, %c0_56], %79 {strides = array<i32>} : memref<18x128xf32, #tpu.memory_space<vmem>>, vector<2x128xf32>,
    %c6_57 = arith.constant 6 : index
    %c0_58 = arith.constant 0 : index
    %c0_59 = arith.constant 0 : index
    %81 = vector.load %arg0[%c6_57, %c0_58, %c0_59] : memref<8x32x128xf32, #tpu.memory_space<vmem>>, vector<1x32x128xf32>
    %82 = vector.shape_cast %81 : vector<1x32x128xf32> to vector<32x128xf32>
    %c0_60 = arith.constant 0 : index
    %c0_61 = arith.constant 0 : index
    %83 = vector.load %arg4[%c0_60, %c0_61] : memref<32x18xbf16, #tpu.memory_space<vmem>>, vector<32x18xbf16>
    %c0_62 = arith.constant 0 : index
    %c0_63 = arith.constant 0 : index
    %84 = vector.load %arg8[%c0_62, %c0_63] : memref<18x128xf32, #tpu.memory_space<vmem>>, vector<18x128xf32>
    %85 = arith.truncf %84 : vector<18x128xf32> to vector<18x128xbf16>
    %cst_64 = arith.constant dense<0.000000e+00> : vector<32x128xf32>
    %86 = tpu.matmul %83, %85, %cst_64 {dimension_numbers = #tpu.dot_dimension_numbers<[1], [0], [0], [1], [0, 0, 1, 1], [], []>} : vector<32x18xbf16>, vector<18x128xbf16>, vector<32x128xf32> -> vector<32x128xf32>
    %87 = arith.addf %82, %86 : vector<32x128xf32>
    %88 = arith.mulf %87, %87 : vector<32x128xf32>
    %89 = arith.mulf %87, %88 : vector<32x128xf32>
    %cst_65 = arith.constant 4.471500e-02 : f32
    %90 = vector.broadcast %cst_65 : f32 to vector<32x128xf32>
    %91 = arith.mulf %90, %89 : vector<32x128xf32>
    %92 = arith.addf %87, %91 : vector<32x128xf32>
    %cst_66 = arith.constant 0.797884583 : f32
    %93 = vector.broadcast %cst_66 : f32 to vector<32x128xf32>
    %94 = arith.mulf %93, %92 : vector<32x128xf32>
    %95 = math.tanh %94 : vector<32x128xf32>
    %cst_67 = arith.constant 1.000000e+00 : f32
    %96 = vector.broadcast %cst_67 : f32 to vector<32x128xf32>
    %97 = arith.addf %96, %95 : vector<32x128xf32>
    %cst_68 = arith.constant 5.000000e-01 : f32
    %98 = vector.broadcast %cst_68 : f32 to vector<32x128xf32>
    %99 = arith.mulf %98, %97 : vector<32x128xf32>
    %100 = arith.mulf %87, %99 : vector<32x128xf32>
    %c0_69 = arith.constant 0 : index
    %c0_70 = arith.constant 0 : index
    %101 = vector.load %arg5[%c0_69, %c0_70] : memref<2x32xbf16, #tpu.memory_space<vmem>>, vector<2x32xbf16>
    %102 = arith.truncf %100 : vector<32x128xf32> to vector<32x128xbf16>
    %cst_71 = arith.constant dense<0.000000e+00> : vector<2x128xf32>
    %103 = tpu.matmul %101, %102, %cst_71 {dimension_numbers = #tpu.dot_dimension_numbers<[1], [0], [0], [1], [0, 0, 1, 1], [], []>} : vector<2x32xbf16>, vector<32x128xbf16>, vector<2x128xf32> -> vector<2x128xf32>
    %c0_72 = arith.constant 0 : index
    %c0_73 = arith.constant 0 : index
    %104 = vector.load %arg6[%c0_72, %c0_73] : memref<2x1xf32, #tpu.memory_space<vmem>>, vector<2x1xf32>
    %105 = vector.broadcast %104 : vector<2x1xf32> to vector<2x128xf32>
    %106 = arith.addf %103, %105 : vector<2x128xf32>
    %cst_74 = arith.constant -1.000000e+00 : f32
    %cst_75 = arith.constant 1.000000e+00 : f32
    %107 = vector.broadcast %cst_74 : f32 to vector<2x128xf32>
    %108 = arith.maximumf %107, %106 : vector<2x128xf32>
    %109 = vector.broadcast %cst_75 : f32 to vector<2x128xf32>
    %110 = arith.minimumf %109, %108 : vector<2x128xf32>
    %cst_76 = arith.constant 0.292124033 : f32
    %111 = vector.broadcast %cst_76 : f32 to vector<2x128xf32>
    %112 = arith.mulf %111, %110 : vector<2x128xf32>
    %cst_77 = arith.constant 0.453089803 : f32
    %113 = vector.broadcast %cst_77 : f32 to vector<2x128xf32>
    %114 = arith.mulf %113, %59 : vector<2x128xf32>
    %115 = arith.addf %112, %114 : vector<2x128xf32>
    %c5 = arith.constant 5 : index
    %c0_78 = arith.constant 0 : index
    %c0_79 = arith.constant 0 : index
    %116 = vector.load %arg2[%c5, %c0_78, %c0_79] : memref<7x2x128xf32, #tpu.memory_space<vmem>>, vector<1x2x128xf32>
    %117 = vector.shape_cast %116 : vector<1x2x128xf32> to vector<2x128xf32>
    %118 = arith.addf %115, %117 : vector<2x128xf32>
    %119 = arith.truncf %118 : vector<2x128xf32> to vector<2x128xbf16>
    %c0_80 = arith.constant 0 : index
    %c0_81 = arith.constant 0 : index
    %120 = vector.load %arg3[%c0_80, %c0_81] : memref<128x1152xbf16, #tpu.memory_space<vmem>>, vector<128x1152xbf16>
    %cst_82 = arith.constant dense<0.000000e+00> : vector<2x1152xf32>
    %121 = tpu.matmul %119, %120, %cst_82 {dimension_numbers = #tpu.dot_dimension_numbers<[1], [0], [0], [1], [0, 0, 1, 1], [], []>} : vector<2x128xbf16>, vector<128x1152xbf16>, vector<2x1152xf32> -> vector<2x1152xf32>
    %122 = vector.extract_strided_slice %121 {offsets = [0, 0], sizes = [2, 128], strides = [1, 1]} : vector<2x1152xf32> to vector<2x128xf32>
    %c0_83 = arith.constant 0 : index
    %c0_84 = arith.constant 0 : index
    %123 = vector.load %arg8[%c0_83, %c0_84] : memref<18x128xf32, #tpu.memory_space<vmem>>, vector<2x128xf32>
    tpu.vector_store %arg8[%c0_83, %c0_84], %122 {strides = array<i32>} : memref<18x128xf32, #tpu.memory_space<vmem>>, vector<2x128xf32>,
    %124 = vector.extract_strided_slice %121 {offsets = [0, 128], sizes = [2, 128], strides = [1, 1]} : vector<2x1152xf32> to vector<2x128xf32>
    %c2_85 = arith.constant 2 : index
    %c0_86 = arith.constant 0 : index
    %125 = vector.load %arg8[%c2_85, %c0_86] : memref<18x128xf32, #tpu.memory_space<vmem>>, vector<2x128xf32>
    tpu.vector_store %arg8[%c2_85, %c0_86], %124 {strides = array<i32>} : memref<18x128xf32, #tpu.memory_space<vmem>>, vector<2x128xf32>,
    %126 = vector.extract_strided_slice %121 {offsets = [0, 256], sizes = [2, 128], strides = [1, 1]} : vector<2x1152xf32> to vector<2x128xf32>
    %c4_87 = arith.constant 4 : index
    %c0_88 = arith.constant 0 : index
    %127 = vector.load %arg8[%c4_87, %c0_88] : memref<18x128xf32, #tpu.memory_space<vmem>>, vector<2x128xf32>
    tpu.vector_store %arg8[%c4_87, %c0_88], %126 {strides = array<i32>} : memref<18x128xf32, #tpu.memory_space<vmem>>, vector<2x128xf32>,
    %128 = vector.extract_strided_slice %121 {offsets = [0, 384], sizes = [2, 128], strides = [1, 1]} : vector<2x1152xf32> to vector<2x128xf32>
    %c6_89 = arith.constant 6 : index
    %c0_90 = arith.constant 0 : index
    %129 = vector.load %arg8[%c6_89, %c0_90] : memref<18x128xf32, #tpu.memory_space<vmem>>, vector<2x128xf32>
    tpu.vector_store %arg8[%c6_89, %c0_90], %128 {strides = array<i32>} : memref<18x128xf32, #tpu.memory_space<vmem>>, vector<2x128xf32>,
    %130 = vector.extract_strided_slice %121 {offsets = [0, 512], sizes = [2, 128], strides = [1, 1]} : vector<2x1152xf32> to vector<2x128xf32>
    %c8_91 = arith.constant 8 : index
    %c0_92 = arith.constant 0 : index
    %131 = vector.load %arg8[%c8_91, %c0_92] : memref<18x128xf32, #tpu.memory_space<vmem>>, vector<2x128xf32>
    tpu.vector_store %arg8[%c8_91, %c0_92], %130 {strides = array<i32>} : memref<18x128xf32, #tpu.memory_space<vmem>>, vector<2x128xf32>,
    %132 = vector.extract_strided_slice %121 {offsets = [0, 640], sizes = [2, 128], strides = [1, 1]} : vector<2x1152xf32> to vector<2x128xf32>
    %c10_93 = arith.constant 10 : index
    %c0_94 = arith.constant 0 : index
    %133 = vector.load %arg8[%c10_93, %c0_94] : memref<18x128xf32, #tpu.memory_space<vmem>>, vector<2x128xf32>
    tpu.vector_store %arg8[%c10_93, %c0_94], %132 {strides = array<i32>} : memref<18x128xf32, #tpu.memory_space<vmem>>, vector<2x128xf32>,
    %134 = vector.extract_strided_slice %121 {offsets = [0, 768], sizes = [2, 128], strides = [1, 1]} : vector<2x1152xf32> to vector<2x128xf32>
    %c12_95 = arith.constant 12 : index
    %c0_96 = arith.constant 0 : index
    %135 = vector.load %arg8[%c12_95, %c0_96] : memref<18x128xf32, #tpu.memory_space<vmem>>, vector<2x128xf32>
    tpu.vector_store %arg8[%c12_95, %c0_96], %134 {strides = array<i32>} : memref<18x128xf32, #tpu.memory_space<vmem>>, vector<2x128xf32>,
    %136 = vector.extract_strided_slice %121 {offsets = [0, 896], sizes = [2, 128], strides = [1, 1]} : vector<2x1152xf32> to vector<2x128xf32>
    %c14_97 = arith.constant 14 : index
    %c0_98 = arith.constant 0 : index
    %137 = vector.load %arg8[%c14_97, %c0_98] : memref<18x128xf32, #tpu.memory_space<vmem>>, vector<2x128xf32>
    tpu.vector_store %arg8[%c14_97, %c0_98], %136 {strides = array<i32>} : memref<18x128xf32, #tpu.memory_space<vmem>>, vector<2x128xf32>,
    %138 = vector.extract_strided_slice %121 {offsets = [0, 1024], sizes = [2, 128], strides = [1, 1]} : vector<2x1152xf32> to vector<2x128xf32>
    %c16_99 = arith.constant 16 : index
    %c0_100 = arith.constant 0 : index
    %139 = vector.load %arg8[%c16_99, %c0_100] : memref<18x128xf32, #tpu.memory_space<vmem>>, vector<2x128xf32>
    tpu.vector_store %arg8[%c16_99, %c0_100], %138 {strides = array<i32>} : memref<18x128xf32, #tpu.memory_space<vmem>>, vector<2x128xf32>,
    %c5_101 = arith.constant 5 : index
    %c0_102 = arith.constant 0 : index
    %c0_103 = arith.constant 0 : index
    %140 = vector.load %arg0[%c5_101, %c0_102, %c0_103] : memref<8x32x128xf32, #tpu.memory_space<vmem>>, vector<1x32x128xf32>
    %141 = vector.shape_cast %140 : vector<1x32x128xf32> to vector<32x128xf32>
    %c0_104 = arith.constant 0 : index
    %c0_105 = arith.constant 0 : index
    %142 = vector.load %arg4[%c0_104, %c0_105] : memref<32x18xbf16, #tpu.memory_space<vmem>>, vector<32x18xbf16>
    %c0_106 = arith.constant 0 : index
    %c0_107 = arith.constant 0 : index
    %143 = vector.load %arg8[%c0_106, %c0_107] : memref<18x128xf32, #tpu.memory_space<vmem>>, vector<18x128xf32>
    %144 = arith.truncf %143 : vector<18x128xf32> to vector<18x128xbf16>
    %cst_108 = arith.constant dense<0.000000e+00> : vector<32x128xf32>
    %145 = tpu.matmul %142, %144, %cst_108 {dimension_numbers = #tpu.dot_dimension_numbers<[1], [0], [0], [1], [0, 0, 1, 1], [], []>} : vector<32x18xbf16>, vector<18x128xbf16>, vector<32x128xf32> -> vector<32x128xf32>
    %146 = arith.addf %141, %145 : vector<32x128xf32>
    %147 = arith.mulf %146, %146 : vector<32x128xf32>
    %148 = arith.mulf %146, %147 : vector<32x128xf32>
    %cst_109 = arith.constant 4.471500e-02 : f32
    %149 = vector.broadcast %cst_109 : f32 to vector<32x128xf32>
    %150 = arith.mulf %149, %148 : vector<32x128xf32>
    %151 = arith.addf %146, %150 : vector<32x128xf32>
    %cst_110 = arith.constant 0.797884583 : f32
    %152 = vector.broadcast %cst_110 : f32 to vector<32x128xf32>
    %153 = arith.mulf %152, %151 : vector<32x128xf32>
    %154 = math.tanh %153 : vector<32x128xf32>
    %cst_111 = arith.constant 1.000000e+00 : f32
    %155 = vector.broadcast %cst_111 : f32 to vector<32x128xf32>
    %156 = arith.addf %155, %154 : vector<32x128xf32>
    %cst_112 = arith.constant 5.000000e-01 : f32
    %157 = vector.broadcast %cst_112 : f32 to vector<32x128xf32>
    %158 = arith.mulf %157, %156 : vector<32x128xf32>
    %159 = arith.mulf %146, %158 : vector<32x128xf32>
    %c0_113 = arith.constant 0 : index
    %c0_114 = arith.constant 0 : index
    %160 = vector.load %arg5[%c0_113, %c0_114] : memref<2x32xbf16, #tpu.memory_space<vmem>>, vector<2x32xbf16>
    %161 = arith.truncf %159 : vector<32x128xf32> to vector<32x128xbf16>
    %cst_115 = arith.constant dense<0.000000e+00> : vector<2x128xf32>
    %162 = tpu.matmul %160, %161, %cst_115 {dimension_numbers = #tpu.dot_dimension_numbers<[1], [0], [0], [1], [0, 0, 1, 1], [], []>} : vector<2x32xbf16>, vector<32x128xbf16>, vector<2x128xf32> -> vector<2x128xf32>
    %c0_116 = arith.constant 0 : index
    %c0_117 = arith.constant 0 : index
    %163 = vector.load %arg6[%c0_116, %c0_117] : memref<2x1xf32, #tpu.memory_space<vmem>>, vector<2x1xf32>
    %164 = vector.broadcast %163 : vector<2x1xf32> to vector<2x128xf32>
    %165 = arith.addf %162, %164 : vector<2x128xf32>
    %cst_118 = arith.constant -1.000000e+00 : f32
    %cst_119 = arith.constant 1.000000e+00 : f32
    %166 = vector.broadcast %cst_118 : f32 to vector<2x128xf32>
    %167 = arith.maximumf %166, %165 : vector<2x128xf32>
    %168 = vector.broadcast %cst_119 : f32 to vector<2x128xf32>
    %169 = arith.minimumf %168, %167 : vector<2x128xf32>
    %cst_120 = arith.constant 0.339155436 : f32
    %170 = vector.broadcast %cst_120 : f32 to vector<2x128xf32>
    %171 = arith.mulf %170, %169 : vector<2x128xf32>
    %cst_121 = arith.constant 0.559628189 : f32
    %172 = vector.broadcast %cst_121 : f32 to vector<2x128xf32>
    %173 = arith.mulf %172, %118 : vector<2x128xf32>
    %174 = arith.addf %171, %173 : vector<2x128xf32>
    %c4_122 = arith.constant 4 : index
    %c0_123 = arith.constant 0 : index
    %c0_124 = arith.constant 0 : index
    %175 = vector.load %arg2[%c4_122, %c0_123, %c0_124] : memref<7x2x128xf32, #tpu.memory_space<vmem>>, vector<1x2x128xf32>
    %176 = vector.shape_cast %175 : vector<1x2x128xf32> to vector<2x128xf32>
    %177 = arith.addf %174, %176 : vector<2x128xf32>
    %178 = arith.truncf %177 : vector<2x128xf32> to vector<2x128xbf16>
    %c0_125 = arith.constant 0 : index
    %c0_126 = arith.constant 0 : index
    %179 = vector.load %arg3[%c0_125, %c0_126] : memref<128x1152xbf16, #tpu.memory_space<vmem>>, vector<128x1152xbf16>
    %cst_127 = arith.constant dense<0.000000e+00> : vector<2x1152xf32>
    %180 = tpu.matmul %178, %179, %cst_127 {dimension_numbers = #tpu.dot_dimension_numbers<[1], [0], [0], [1], [0, 0, 1, 1], [], []>} : vector<2x128xbf16>, vector<128x1152xbf16>, vector<2x1152xf32> -> vector<2x1152xf32>
    %181 = vector.extract_strided_slice %180 {offsets = [0, 0], sizes = [2, 128], strides = [1, 1]} : vector<2x1152xf32> to vector<2x128xf32>
    %c0_128 = arith.constant 0 : index
    %c0_129 = arith.constant 0 : index
    %182 = vector.load %arg8[%c0_128, %c0_129] : memref<18x128xf32, #tpu.memory_space<vmem>>, vector<2x128xf32>
    tpu.vector_store %arg8[%c0_128, %c0_129], %181 {strides = array<i32>} : memref<18x128xf32, #tpu.memory_space<vmem>>, vector<2x128xf32>,
    %183 = vector.extract_strided_slice %180 {offsets = [0, 128], sizes = [2, 128], strides = [1, 1]} : vector<2x1152xf32> to vector<2x128xf32>
    %c2_130 = arith.constant 2 : index
    %c0_131 = arith.constant 0 : index
    %184 = vector.load %arg8[%c2_130, %c0_131] : memref<18x128xf32, #tpu.memory_space<vmem>>, vector<2x128xf32>
    tpu.vector_store %arg8[%c2_130, %c0_131], %183 {strides = array<i32>} : memref<18x128xf32, #tpu.memory_space<vmem>>, vector<2x128xf32>,
    %185 = vector.extract_strided_slice %180 {offsets = [0, 256], sizes = [2, 128], strides = [1, 1]} : vector<2x1152xf32> to vector<2x128xf32>
    %c4_132 = arith.constant 4 : index
    %c0_133 = arith.constant 0 : index
    %186 = vector.load %arg8[%c4_132, %c0_133] : memref<18x128xf32, #tpu.memory_space<vmem>>, vector<2x128xf32>
    tpu.vector_store %arg8[%c4_132, %c0_133], %185 {strides = array<i32>} : memref<18x128xf32, #tpu.memory_space<vmem>>, vector<2x128xf32>,
    %187 = vector.extract_strided_slice %180 {offsets = [0, 384], sizes = [2, 128], strides = [1, 1]} : vector<2x1152xf32> to vector<2x128xf32>
    %c6_134 = arith.constant 6 : index
    %c0_135 = arith.constant 0 : index
    %188 = vector.load %arg8[%c6_134, %c0_135] : memref<18x128xf32, #tpu.memory_space<vmem>>, vector<2x128xf32>
    tpu.vector_store %arg8[%c6_134, %c0_135], %187 {strides = array<i32>} : memref<18x128xf32, #tpu.memory_space<vmem>>, vector<2x128xf32>,
    %189 = vector.extract_strided_slice %180 {offsets = [0, 512], sizes = [2, 128], strides = [1, 1]} : vector<2x1152xf32> to vector<2x128xf32>
    %c8_136 = arith.constant 8 : index
    %c0_137 = arith.constant 0 : index
    %190 = vector.load %arg8[%c8_136, %c0_137] : memref<18x128xf32, #tpu.memory_space<vmem>>, vector<2x128xf32>
    tpu.vector_store %arg8[%c8_136, %c0_137], %189 {strides = array<i32>} : memref<18x128xf32, #tpu.memory_space<vmem>>, vector<2x128xf32>,
    %191 = vector.extract_strided_slice %180 {offsets = [0, 640], sizes = [2, 128], strides = [1, 1]} : vector<2x1152xf32> to vector<2x128xf32>
    %c10_138 = arith.constant 10 : index
    %c0_139 = arith.constant 0 : index
    %192 = vector.load %arg8[%c10_138, %c0_139] : memref<18x128xf32, #tpu.memory_space<vmem>>, vector<2x128xf32>
    tpu.vector_store %arg8[%c10_138, %c0_139], %191 {strides = array<i32>} : memref<18x128xf32, #tpu.memory_space<vmem>>, vector<2x128xf32>,
    %193 = vector.extract_strided_slice %180 {offsets = [0, 768], sizes = [2, 128], strides = [1, 1]} : vector<2x1152xf32> to vector<2x128xf32>
    %c12_140 = arith.constant 12 : index
    %c0_141 = arith.constant 0 : index
    %194 = vector.load %arg8[%c12_140, %c0_141] : memref<18x128xf32, #tpu.memory_space<vmem>>, vector<2x128xf32>
    tpu.vector_store %arg8[%c12_140, %c0_141], %193 {strides = array<i32>} : memref<18x128xf32, #tpu.memory_space<vmem>>, vector<2x128xf32>,
    %195 = vector.extract_strided_slice %180 {offsets = [0, 896], sizes = [2, 128], strides = [1, 1]} : vector<2x1152xf32> to vector<2x128xf32>
    %c14_142 = arith.constant 14 : index
    %c0_143 = arith.constant 0 : index
    %196 = vector.load %arg8[%c14_142, %c0_143] : memref<18x128xf32, #tpu.memory_space<vmem>>, vector<2x128xf32>
    tpu.vector_store %arg8[%c14_142, %c0_143], %195 {strides = array<i32>} : memref<18x128xf32, #tpu.memory_space<vmem>>, vector<2x128xf32>,
    %197 = vector.extract_strided_slice %180 {offsets = [0, 1024], sizes = [2, 128], strides = [1, 1]} : vector<2x1152xf32> to vector<2x128xf32>
    %c16_144 = arith.constant 16 : index
    %c0_145 = arith.constant 0 : index
    %198 = vector.load %arg8[%c16_144, %c0_145] : memref<18x128xf32, #tpu.memory_space<vmem>>, vector<2x128xf32>
    tpu.vector_store %arg8[%c16_144, %c0_145], %197 {strides = array<i32>} : memref<18x128xf32, #tpu.memory_space<vmem>>, vector<2x128xf32>,
    %c4_146 = arith.constant 4 : index
    %c0_147 = arith.constant 0 : index
    %c0_148 = arith.constant 0 : index
    %199 = vector.load %arg0[%c4_146, %c0_147, %c0_148] : memref<8x32x128xf32, #tpu.memory_space<vmem>>, vector<1x32x128xf32>
    %200 = vector.shape_cast %199 : vector<1x32x128xf32> to vector<32x128xf32>
    %c0_149 = arith.constant 0 : index
    %c0_150 = arith.constant 0 : index
    %201 = vector.load %arg4[%c0_149, %c0_150] : memref<32x18xbf16, #tpu.memory_space<vmem>>, vector<32x18xbf16>
    %c0_151 = arith.constant 0 : index
    %c0_152 = arith.constant 0 : index
    %202 = vector.load %arg8[%c0_151, %c0_152] : memref<18x128xf32, #tpu.memory_space<vmem>>, vector<18x128xf32>
    %203 = arith.truncf %202 : vector<18x128xf32> to vector<18x128xbf16>
    %cst_153 = arith.constant dense<0.000000e+00> : vector<32x128xf32>
    %204 = tpu.matmul %201, %203, %cst_153 {dimension_numbers = #tpu.dot_dimension_numbers<[1], [0], [0], [1], [0, 0, 1, 1], [], []>} : vector<32x18xbf16>, vector<18x128xbf16>, vector<32x128xf32> -> vector<32x128xf32>
    %205 = arith.addf %200, %204 : vector<32x128xf32>
    %206 = arith.mulf %205, %205 : vector<32x128xf32>
    %207 = arith.mulf %205, %206 : vector<32x128xf32>
    %cst_154 = arith.constant 4.471500e-02 : f32
    %208 = vector.broadcast %cst_154 : f32 to vector<32x128xf32>
    %209 = arith.mulf %208, %207 : vector<32x128xf32>
    %210 = arith.addf %205, %209 : vector<32x128xf32>
    %cst_155 = arith.constant 0.797884583 : f32
    %211 = vector.broadcast %cst_155 : f32 to vector<32x128xf32>
    %212 = arith.mulf %211, %210 : vector<32x128xf32>
    %213 = math.tanh %212 : vector<32x128xf32>
    %cst_156 = arith.constant 1.000000e+00 : f32
    %214 = vector.broadcast %cst_156 : f32 to vector<32x128xf32>
    %215 = arith.addf %214, %213 : vector<32x128xf32>
    %cst_157 = arith.constant 5.000000e-01 : f32
    %216 = vector.broadcast %cst_157 : f32 to vector<32x128xf32>
    %217 = arith.mulf %216, %215 : vector<32x128xf32>
    %218 = arith.mulf %205, %217 : vector<32x128xf32>
    %c0_158 = arith.constant 0 : index
    %c0_159 = arith.constant 0 : index
    %219 = vector.load %arg5[%c0_158, %c0_159] : memref<2x32xbf16, #tpu.memory_space<vmem>>, vector<2x32xbf16>
    %220 = arith.truncf %218 : vector<32x128xf32> to vector<32x128xbf16>
    %cst_160 = arith.constant dense<0.000000e+00> : vector<2x128xf32>
    %221 = tpu.matmul %219, %220, %cst_160 {dimension_numbers = #tpu.dot_dimension_numbers<[1], [0], [0], [1], [0, 0, 1, 1], [], []>} : vector<2x32xbf16>, vector<32x128xbf16>, vector<2x128xf32> -> vector<2x128xf32>
    %c0_161 = arith.constant 0 : index
    %c0_162 = arith.constant 0 : index
    %222 = vector.load %arg6[%c0_161, %c0_162] : memref<2x1xf32, #tpu.memory_space<vmem>>, vector<2x1xf32>
    %223 = vector.broadcast %222 : vector<2x1xf32> to vector<2x128xf32>
    %224 = arith.addf %221, %223 : vector<2x128xf32>
    %cst_163 = arith.constant -1.000000e+00 : f32
    %cst_164 = arith.constant 1.000000e+00 : f32
    %225 = vector.broadcast %cst_163 : f32 to vector<2x128xf32>
    %226 = arith.maximumf %225, %224 : vector<2x128xf32>
    %227 = vector.broadcast %cst_164 : f32 to vector<2x128xf32>
    %228 = arith.minimumf %227, %226 : vector<2x128xf32>
    %cst_165 = arith.constant 0.387555718 : f32
    %229 = vector.broadcast %cst_165 : f32 to vector<2x128xf32>
    %230 = arith.mulf %229, %228 : vector<2x128xf32>
    %cst_166 = arith.constant 0.571275949 : f32
    %231 = vector.broadcast %cst_166 : f32 to vector<2x128xf32>
    %232 = arith.mulf %231, %177 : vector<2x128xf32>
    %233 = arith.addf %230, %232 : vector<2x128xf32>
    %c3 = arith.constant 3 : index
    %c0_167 = arith.constant 0 : index
    %c0_168 = arith.constant 0 : index
    %234 = vector.load %arg2[%c3, %c0_167, %c0_168] : memref<7x2x128xf32, #tpu.memory_space<vmem>>, vector<1x2x128xf32>
    %235 = vector.shape_cast %234 : vector<1x2x128xf32> to vector<2x128xf32>
    %236 = arith.addf %233, %235 : vector<2x128xf32>
    %237 = arith.truncf %236 : vector<2x128xf32> to vector<2x128xbf16>
    %c0_169 = arith.constant 0 : index
    %c0_170 = arith.constant 0 : index
    %238 = vector.load %arg3[%c0_169, %c0_170] : memref<128x1152xbf16, #tpu.memory_space<vmem>>, vector<128x1152xbf16>
    %cst_171 = arith.constant dense<0.000000e+00> : vector<2x1152xf32>
    %239 = tpu.matmul %237, %238, %cst_171 {dimension_numbers = #tpu.dot_dimension_numbers<[1], [0], [0], [1], [0, 0, 1, 1], [], []>} : vector<2x128xbf16>, vector<128x1152xbf16>, vector<2x1152xf32> -> vector<2x1152xf32>
    %240 = vector.extract_strided_slice %239 {offsets = [0, 0], sizes = [2, 128], strides = [1, 1]} : vector<2x1152xf32> to vector<2x128xf32>
    %c0_172 = arith.constant 0 : index
    %c0_173 = arith.constant 0 : index
    %241 = vector.load %arg8[%c0_172, %c0_173] : memref<18x128xf32, #tpu.memory_space<vmem>>, vector<2x128xf32>
    tpu.vector_store %arg8[%c0_172, %c0_173], %240 {strides = array<i32>} : memref<18x128xf32, #tpu.memory_space<vmem>>, vector<2x128xf32>,
    %242 = vector.extract_strided_slice %239 {offsets = [0, 128], sizes = [2, 128], strides = [1, 1]} : vector<2x1152xf32> to vector<2x128xf32>
    %c2_174 = arith.constant 2 : index
    %c0_175 = arith.constant 0 : index
    %243 = vector.load %arg8[%c2_174, %c0_175] : memref<18x128xf32, #tpu.memory_space<vmem>>, vector<2x128xf32>
    tpu.vector_store %arg8[%c2_174, %c0_175], %242 {strides = array<i32>} : memref<18x128xf32, #tpu.memory_space<vmem>>, vector<2x128xf32>,
    %244 = vector.extract_strided_slice %239 {offsets = [0, 256], sizes = [2, 128], strides = [1, 1]} : vector<2x1152xf32> to vector<2x128xf32>
    %c4_176 = arith.constant 4 : index
    %c0_177 = arith.constant 0 : index
    %245 = vector.load %arg8[%c4_176, %c0_177] : memref<18x128xf32, #tpu.memory_space<vmem>>, vector<2x128xf32>
    tpu.vector_store %arg8[%c4_176, %c0_177], %244 {strides = array<i32>} : memref<18x128xf32, #tpu.memory_space<vmem>>, vector<2x128xf32>,
    %246 = vector.extract_strided_slice %239 {offsets = [0, 384], sizes = [2, 128], strides = [1, 1]} : vector<2x1152xf32> to vector<2x128xf32>
    %c6_178 = arith.constant 6 : index
    %c0_179 = arith.constant 0 : index
    %247 = vector.load %arg8[%c6_178, %c0_179] : memref<18x128xf32, #tpu.memory_space<vmem>>, vector<2x128xf32>
    tpu.vector_store %arg8[%c6_178, %c0_179], %246 {strides = array<i32>} : memref<18x128xf32, #tpu.memory_space<vmem>>, vector<2x128xf32>,
    %248 = vector.extract_strided_slice %239 {offsets = [0, 512], sizes = [2, 128], strides = [1, 1]} : vector<2x1152xf32> to vector<2x128xf32>
    %c8_180 = arith.constant 8 : index
    %c0_181 = arith.constant 0 : index
    %249 = vector.load %arg8[%c8_180, %c0_181] : memref<18x128xf32, #tpu.memory_space<vmem>>, vector<2x128xf32>
    tpu.vector_store %arg8[%c8_180, %c0_181], %248 {strides = array<i32>} : memref<18x128xf32, #tpu.memory_space<vmem>>, vector<2x128xf32>,
    %250 = vector.extract_strided_slice %239 {offsets = [0, 640], sizes = [2, 128], strides = [1, 1]} : vector<2x1152xf32> to vector<2x128xf32>
    %c10_182 = arith.constant 10 : index
    %c0_183 = arith.constant 0 : index
    %251 = vector.load %arg8[%c10_182, %c0_183] : memref<18x128xf32, #tpu.memory_space<vmem>>, vector<2x128xf32>
    tpu.vector_store %arg8[%c10_182, %c0_183], %250 {strides = array<i32>} : memref<18x128xf32, #tpu.memory_space<vmem>>, vector<2x128xf32>,
    %252 = vector.extract_strided_slice %239 {offsets = [0, 768], sizes = [2, 128], strides = [1, 1]} : vector<2x1152xf32> to vector<2x128xf32>
    %c12_184 = arith.constant 12 : index
    %c0_185 = arith.constant 0 : index
    %253 = vector.load %arg8[%c12_184, %c0_185] : memref<18x128xf32, #tpu.memory_space<vmem>>, vector<2x128xf32>
    tpu.vector_store %arg8[%c12_184, %c0_185], %252 {strides = array<i32>} : memref<18x128xf32, #tpu.memory_space<vmem>>, vector<2x128xf32>,
    %254 = vector.extract_strided_slice %239 {offsets = [0, 896], sizes = [2, 128], strides = [1, 1]} : vector<2x1152xf32> to vector<2x128xf32>
    %c14_186 = arith.constant 14 : index
    %c0_187 = arith.constant 0 : index
    %255 = vector.load %arg8[%c14_186, %c0_187] : memref<18x128xf32, #tpu.memory_space<vmem>>, vector<2x128xf32>
    tpu.vector_store %arg8[%c14_186, %c0_187], %254 {strides = array<i32>} : memref<18x128xf32, #tpu.memory_space<vmem>>, vector<2x128xf32>,
    %256 = vector.extract_strided_slice %239 {offsets = [0, 1024], sizes = [2, 128], strides = [1, 1]} : vector<2x1152xf32> to vector<2x128xf32>
    %c16_188 = arith.constant 16 : index
    %c0_189 = arith.constant 0 : index
    %257 = vector.load %arg8[%c16_188, %c0_189] : memref<18x128xf32, #tpu.memory_space<vmem>>, vector<2x128xf32>
    tpu.vector_store %arg8[%c16_188, %c0_189], %256 {strides = array<i32>} : memref<18x128xf32, #tpu.memory_space<vmem>>, vector<2x128xf32>,
    %c3_190 = arith.constant 3 : index
    %c0_191 = arith.constant 0 : index
    %c0_192 = arith.constant 0 : index
    %258 = vector.load %arg0[%c3_190, %c0_191, %c0_192] : memref<8x32x128xf32, #tpu.memory_space<vmem>>, vector<1x32x128xf32>
    %259 = vector.shape_cast %258 : vector<1x32x128xf32> to vector<32x128xf32>
    %c0_193 = arith.constant 0 : index
    %c0_194 = arith.constant 0 : index
    %260 = vector.load %arg4[%c0_193, %c0_194] : memref<32x18xbf16, #tpu.memory_space<vmem>>, vector<32x18xbf16>
    %c0_195 = arith.constant 0 : index
    %c0_196 = arith.constant 0 : index
    %261 = vector.load %arg8[%c0_195, %c0_196] : memref<18x128xf32, #tpu.memory_space<vmem>>, vector<18x128xf32>
    %262 = arith.truncf %261 : vector<18x128xf32> to vector<18x128xbf16>
    %cst_197 = arith.constant dense<0.000000e+00> : vector<32x128xf32>
    %263 = tpu.matmul %260, %262, %cst_197 {dimension_numbers = #tpu.dot_dimension_numbers<[1], [0], [0], [1], [0, 0, 1, 1], [], []>} : vector<32x18xbf16>, vector<18x128xbf16>, vector<32x128xf32> -> vector<32x128xf32>
    %264 = arith.addf %259, %263 : vector<32x128xf32>
    %265 = arith.mulf %264, %264 : vector<32x128xf32>
    %266 = arith.mulf %264, %265 : vector<32x128xf32>
    %cst_198 = arith.constant 4.471500e-02 : f32
    %267 = vector.broadcast %cst_198 : f32 to vector<32x128xf32>
    %268 = arith.mulf %267, %266 : vector<32x128xf32>
    %269 = arith.addf %264, %268 : vector<32x128xf32>
    %cst_199 = arith.constant 0.797884583 : f32
    %270 = vector.broadcast %cst_199 : f32 to vector<32x128xf32>
    %271 = arith.mulf %270, %269 : vector<32x128xf32>
    %272 = math.tanh %271 : vector<32x128xf32>
    %cst_200 = arith.constant 1.000000e+00 : f32
    %273 = vector.broadcast %cst_200 : f32 to vector<32x128xf32>
    %274 = arith.addf %273, %272 : vector<32x128xf32>
    %cst_201 = arith.constant 5.000000e-01 : f32
    %275 = vector.broadcast %cst_201 : f32 to vector<32x128xf32>
    %276 = arith.mulf %275, %274 : vector<32x128xf32>
    %277 = arith.mulf %264, %276 : vector<32x128xf32>
    %c0_202 = arith.constant 0 : index
    %c0_203 = arith.constant 0 : index
    %278 = vector.load %arg5[%c0_202, %c0_203] : memref<2x32xbf16, #tpu.memory_space<vmem>>, vector<2x32xbf16>
    %279 = arith.truncf %277 : vector<32x128xf32> to vector<32x128xbf16>
    %cst_204 = arith.constant dense<0.000000e+00> : vector<2x128xf32>
    %280 = tpu.matmul %278, %279, %cst_204 {dimension_numbers = #tpu.dot_dimension_numbers<[1], [0], [0], [1], [0, 0, 1, 1], [], []>} : vector<2x32xbf16>, vector<32x128xbf16>, vector<2x128xf32> -> vector<2x128xf32>
    %c0_205 = arith.constant 0 : index
    %c0_206 = arith.constant 0 : index
    %281 = vector.load %arg6[%c0_205, %c0_206] : memref<2x1xf32, #tpu.memory_space<vmem>>, vector<2x1xf32>
    %282 = vector.broadcast %281 : vector<2x1xf32> to vector<2x128xf32>
    %283 = arith.addf %280, %282 : vector<2x128xf32>
    %cst_207 = arith.constant -1.000000e+00 : f32
    %cst_208 = arith.constant 1.000000e+00 : f32
    %284 = vector.broadcast %cst_207 : f32 to vector<2x128xf32>
    %285 = arith.maximumf %284, %283 : vector<2x128xf32>
    %286 = vector.broadcast %cst_208 : f32 to vector<2x128xf32>
    %287 = arith.minimumf %286, %285 : vector<2x128xf32>
    %cst_209 = arith.constant 0.454719305 : f32
    %288 = vector.broadcast %cst_209 : f32 to vector<2x128xf32>
    %289 = arith.mulf %288, %287 : vector<2x128xf32>
    %cst_210 = arith.constant 0.530011892 : f32
    %290 = vector.broadcast %cst_210 : f32 to vector<2x128xf32>
    %291 = arith.mulf %290, %236 : vector<2x128xf32>
    %292 = arith.addf %289, %291 : vector<2x128xf32>
    %c2_211 = arith.constant 2 : index
    %c0_212 = arith.constant 0 : index
    %c0_213 = arith.constant 0 : index
    %293 = vector.load %arg2[%c2_211, %c0_212, %c0_213] : memref<7x2x128xf32, #tpu.memory_space<vmem>>, vector<1x2x128xf32>
    %294 = vector.shape_cast %293 : vector<1x2x128xf32> to vector<2x128xf32>
    %295 = arith.addf %292, %294 : vector<2x128xf32>
    %296 = arith.truncf %295 : vector<2x128xf32> to vector<2x128xbf16>
    %c0_214 = arith.constant 0 : index
    %c0_215 = arith.constant 0 : index
    %297 = vector.load %arg3[%c0_214, %c0_215] : memref<128x1152xbf16, #tpu.memory_space<vmem>>, vector<128x1152xbf16>
    %cst_216 = arith.constant dense<0.000000e+00> : vector<2x1152xf32>
    %298 = tpu.matmul %296, %297, %cst_216 {dimension_numbers = #tpu.dot_dimension_numbers<[1], [0], [0], [1], [0, 0, 1, 1], [], []>} : vector<2x128xbf16>, vector<128x1152xbf16>, vector<2x1152xf32> -> vector<2x1152xf32>
    %299 = vector.extract_strided_slice %298 {offsets = [0, 0], sizes = [2, 128], strides = [1, 1]} : vector<2x1152xf32> to vector<2x128xf32>
    %c0_217 = arith.constant 0 : index
    %c0_218 = arith.constant 0 : index
    %300 = vector.load %arg8[%c0_217, %c0_218] : memref<18x128xf32, #tpu.memory_space<vmem>>, vector<2x128xf32>
    tpu.vector_store %arg8[%c0_217, %c0_218], %299 {strides = array<i32>} : memref<18x128xf32, #tpu.memory_space<vmem>>, vector<2x128xf32>,
    %301 = vector.extract_strided_slice %298 {offsets = [0, 128], sizes = [2, 128], strides = [1, 1]} : vector<2x1152xf32> to vector<2x128xf32>
    %c2_219 = arith.constant 2 : index
    %c0_220 = arith.constant 0 : index
    %302 = vector.load %arg8[%c2_219, %c0_220] : memref<18x128xf32, #tpu.memory_space<vmem>>, vector<2x128xf32>
    tpu.vector_store %arg8[%c2_219, %c0_220], %301 {strides = array<i32>} : memref<18x128xf32, #tpu.memory_space<vmem>>, vector<2x128xf32>,
    %303 = vector.extract_strided_slice %298 {offsets = [0, 256], sizes = [2, 128], strides = [1, 1]} : vector<2x1152xf32> to vector<2x128xf32>
    %c4_221 = arith.constant 4 : index
    %c0_222 = arith.constant 0 : index
    %304 = vector.load %arg8[%c4_221, %c0_222] : memref<18x128xf32, #tpu.memory_space<vmem>>, vector<2x128xf32>
    tpu.vector_store %arg8[%c4_221, %c0_222], %303 {strides = array<i32>} : memref<18x128xf32, #tpu.memory_space<vmem>>, vector<2x128xf32>,
    %305 = vector.extract_strided_slice %298 {offsets = [0, 384], sizes = [2, 128], strides = [1, 1]} : vector<2x1152xf32> to vector<2x128xf32>
    %c6_223 = arith.constant 6 : index
    %c0_224 = arith.constant 0 : index
    %306 = vector.load %arg8[%c6_223, %c0_224] : memref<18x128xf32, #tpu.memory_space<vmem>>, vector<2x128xf32>
    tpu.vector_store %arg8[%c6_223, %c0_224], %305 {strides = array<i32>} : memref<18x128xf32, #tpu.memory_space<vmem>>, vector<2x128xf32>,
    %307 = vector.extract_strided_slice %298 {offsets = [0, 512], sizes = [2, 128], strides = [1, 1]} : vector<2x1152xf32> to vector<2x128xf32>
    %c8_225 = arith.constant 8 : index
    %c0_226 = arith.constant 0 : index
    %308 = vector.load %arg8[%c8_225, %c0_226] : memref<18x128xf32, #tpu.memory_space<vmem>>, vector<2x128xf32>
    tpu.vector_store %arg8[%c8_225, %c0_226], %307 {strides = array<i32>} : memref<18x128xf32, #tpu.memory_space<vmem>>, vector<2x128xf32>,
    %309 = vector.extract_strided_slice %298 {offsets = [0, 640], sizes = [2, 128], strides = [1, 1]} : vector<2x1152xf32> to vector<2x128xf32>
    %c10_227 = arith.constant 10 : index
    %c0_228 = arith.constant 0 : index
    %310 = vector.load %arg8[%c10_227, %c0_228] : memref<18x128xf32, #tpu.memory_space<vmem>>, vector<2x128xf32>
    tpu.vector_store %arg8[%c10_227, %c0_228], %309 {strides = array<i32>} : memref<18x128xf32, #tpu.memory_space<vmem>>, vector<2x128xf32>,
    %311 = vector.extract_strided_slice %298 {offsets = [0, 768], sizes = [2, 128], strides = [1, 1]} : vector<2x1152xf32> to vector<2x128xf32>
    %c12_229 = arith.constant 12 : index
    %c0_230 = arith.constant 0 : index
    %312 = vector.load %arg8[%c12_229, %c0_230] : memref<18x128xf32, #tpu.memory_space<vmem>>, vector<2x128xf32>
    tpu.vector_store %arg8[%c12_229, %c0_230], %311 {strides = array<i32>} : memref<18x128xf32, #tpu.memory_space<vmem>>, vector<2x128xf32>,
    %313 = vector.extract_strided_slice %298 {offsets = [0, 896], sizes = [2, 128], strides = [1, 1]} : vector<2x1152xf32> to vector<2x128xf32>
    %c14_231 = arith.constant 14 : index
    %c0_232 = arith.constant 0 : index
    %314 = vector.load %arg8[%c14_231, %c0_232] : memref<18x128xf32, #tpu.memory_space<vmem>>, vector<2x128xf32>
    tpu.vector_store %arg8[%c14_231, %c0_232], %313 {strides = array<i32>} : memref<18x128xf32, #tpu.memory_space<vmem>>, vector<2x128xf32>,
    %315 = vector.extract_strided_slice %298 {offsets = [0, 1024], sizes = [2, 128], strides = [1, 1]} : vector<2x1152xf32> to vector<2x128xf32>
    %c16_233 = arith.constant 16 : index
    %c0_234 = arith.constant 0 : index
    %316 = vector.load %arg8[%c16_233, %c0_234] : memref<18x128xf32, #tpu.memory_space<vmem>>, vector<2x128xf32>
    tpu.vector_store %arg8[%c16_233, %c0_234], %315 {strides = array<i32>} : memref<18x128xf32, #tpu.memory_space<vmem>>, vector<2x128xf32>,
    %c2_235 = arith.constant 2 : index
    %c0_236 = arith.constant 0 : index
    %c0_237 = arith.constant 0 : index
    %317 = vector.load %arg0[%c2_235, %c0_236, %c0_237] : memref<8x32x128xf32, #tpu.memory_space<vmem>>, vector<1x32x128xf32>
    %318 = vector.shape_cast %317 : vector<1x32x128xf32> to vector<32x128xf32>
    %c0_238 = arith.constant 0 : index
    %c0_239 = arith.constant 0 : index
    %319 = vector.load %arg4[%c0_238, %c0_239] : memref<32x18xbf16, #tpu.memory_space<vmem>>, vector<32x18xbf16>
    %c0_240 = arith.constant 0 : index
    %c0_241 = arith.constant 0 : index
    %320 = vector.load %arg8[%c0_240, %c0_241] : memref<18x128xf32, #tpu.memory_space<vmem>>, vector<18x128xf32>
    %321 = arith.truncf %320 : vector<18x128xf32> to vector<18x128xbf16>
    %cst_242 = arith.constant dense<0.000000e+00> : vector<32x128xf32>
    %322 = tpu.matmul %319, %321, %cst_242 {dimension_numbers = #tpu.dot_dimension_numbers<[1], [0], [0], [1], [0, 0, 1, 1], [], []>} : vector<32x18xbf16>, vector<18x128xbf16>, vector<32x128xf32> -> vector<32x128xf32>
    %323 = arith.addf %318, %322 : vector<32x128xf32>
    %324 = arith.mulf %323, %323 : vector<32x128xf32>
    %325 = arith.mulf %323, %324 : vector<32x128xf32>
    %cst_243 = arith.constant 4.471500e-02 : f32
    %326 = vector.broadcast %cst_243 : f32 to vector<32x128xf32>
    %327 = arith.mulf %326, %325 : vector<32x128xf32>
    %328 = arith.addf %323, %327 : vector<32x128xf32>
    %cst_244 = arith.constant 0.797884583 : f32
    %329 = vector.broadcast %cst_244 : f32 to vector<32x128xf32>
    %330 = arith.mulf %329, %328 : vector<32x128xf32>
    %331 = math.tanh %330 : vector<32x128xf32>
    %cst_245 = arith.constant 1.000000e+00 : f32
    %332 = vector.broadcast %cst_245 : f32 to vector<32x128xf32>
    %333 = arith.addf %332, %331 : vector<32x128xf32>
    %cst_246 = arith.constant 5.000000e-01 : f32
    %334 = vector.broadcast %cst_246 : f32 to vector<32x128xf32>
    %335 = arith.mulf %334, %333 : vector<32x128xf32>
    %336 = arith.mulf %323, %335 : vector<32x128xf32>
    %c0_247 = arith.constant 0 : index
    %c0_248 = arith.constant 0 : index
    %337 = vector.load %arg5[%c0_247, %c0_248] : memref<2x32xbf16, #tpu.memory_space<vmem>>, vector<2x32xbf16>
    %338 = arith.truncf %336 : vector<32x128xf32> to vector<32x128xbf16>
    %cst_249 = arith.constant dense<0.000000e+00> : vector<2x128xf32>
    %339 = tpu.matmul %337, %338, %cst_249 {dimension_numbers = #tpu.dot_dimension_numbers<[1], [0], [0], [1], [0, 0, 1, 1], [], []>} : vector<2x32xbf16>, vector<32x128xbf16>, vector<2x128xf32> -> vector<2x128xf32>
    %c0_250 = arith.constant 0 : index
    %c0_251 = arith.constant 0 : index
    %340 = vector.load %arg6[%c0_250, %c0_251] : memref<2x1xf32, #tpu.memory_space<vmem>>, vector<2x1xf32>
    %341 = vector.broadcast %340 : vector<2x1xf32> to vector<2x128xf32>
    %342 = arith.addf %339, %341 : vector<2x128xf32>
    %cst_252 = arith.constant -1.000000e+00 : f32
    %cst_253 = arith.constant 1.000000e+00 : f32
    %343 = vector.broadcast %cst_252 : f32 to vector<2x128xf32>
    %344 = arith.maximumf %343, %342 : vector<2x128xf32>
    %345 = vector.broadcast %cst_253 : f32 to vector<2x128xf32>
    %346 = arith.minimumf %345, %344 : vector<2x128xf32>
    %cst_254 = arith.constant 0.560138702 : f32
    %347 = vector.broadcast %cst_254 : f32 to vector<2x128xf32>
    %348 = arith.mulf %347, %346 : vector<2x128xf32>
    %cst_255 = arith.constant 0.43544817 : f32
    %349 = vector.broadcast %cst_255 : f32 to vector<2x128xf32>
    %350 = arith.mulf %349, %295 : vector<2x128xf32>
    %351 = arith.addf %348, %350 : vector<2x128xf32>
    %c1 = arith.constant 1 : index
    %c0_256 = arith.constant 0 : index
    %c0_257 = arith.constant 0 : index
    %352 = vector.load %arg2[%c1, %c0_256, %c0_257] : memref<7x2x128xf32, #tpu.memory_space<vmem>>, vector<1x2x128xf32>
    %353 = vector.shape_cast %352 : vector<1x2x128xf32> to vector<2x128xf32>
    %354 = arith.addf %351, %353 : vector<2x128xf32>
    %355 = arith.truncf %354 : vector<2x128xf32> to vector<2x128xbf16>
    %c0_258 = arith.constant 0 : index
    %c0_259 = arith.constant 0 : index
    %356 = vector.load %arg3[%c0_258, %c0_259] : memref<128x1152xbf16, #tpu.memory_space<vmem>>, vector<128x1152xbf16>
    %cst_260 = arith.constant dense<0.000000e+00> : vector<2x1152xf32>
    %357 = tpu.matmul %355, %356, %cst_260 {dimension_numbers = #tpu.dot_dimension_numbers<[1], [0], [0], [1], [0, 0, 1, 1], [], []>} : vector<2x128xbf16>, vector<128x1152xbf16>, vector<2x1152xf32> -> vector<2x1152xf32>
    %358 = vector.extract_strided_slice %357 {offsets = [0, 0], sizes = [2, 128], strides = [1, 1]} : vector<2x1152xf32> to vector<2x128xf32>
    %c0_261 = arith.constant 0 : index
    %c0_262 = arith.constant 0 : index
    %359 = vector.load %arg8[%c0_261, %c0_262] : memref<18x128xf32, #tpu.memory_space<vmem>>, vector<2x128xf32>
    tpu.vector_store %arg8[%c0_261, %c0_262], %358 {strides = array<i32>} : memref<18x128xf32, #tpu.memory_space<vmem>>, vector<2x128xf32>,
    %360 = vector.extract_strided_slice %357 {offsets = [0, 128], sizes = [2, 128], strides = [1, 1]} : vector<2x1152xf32> to vector<2x128xf32>
    %c2_263 = arith.constant 2 : index
    %c0_264 = arith.constant 0 : index
    %361 = vector.load %arg8[%c2_263, %c0_264] : memref<18x128xf32, #tpu.memory_space<vmem>>, vector<2x128xf32>
    tpu.vector_store %arg8[%c2_263, %c0_264], %360 {strides = array<i32>} : memref<18x128xf32, #tpu.memory_space<vmem>>, vector<2x128xf32>,
    %362 = vector.extract_strided_slice %357 {offsets = [0, 256], sizes = [2, 128], strides = [1, 1]} : vector<2x1152xf32> to vector<2x128xf32>
    %c4_265 = arith.constant 4 : index
    %c0_266 = arith.constant 0 : index
    %363 = vector.load %arg8[%c4_265, %c0_266] : memref<18x128xf32, #tpu.memory_space<vmem>>, vector<2x128xf32>
    tpu.vector_store %arg8[%c4_265, %c0_266], %362 {strides = array<i32>} : memref<18x128xf32, #tpu.memory_space<vmem>>, vector<2x128xf32>,
    %364 = vector.extract_strided_slice %357 {offsets = [0, 384], sizes = [2, 128], strides = [1, 1]} : vector<2x1152xf32> to vector<2x128xf32>
    %c6_267 = arith.constant 6 : index
    %c0_268 = arith.constant 0 : index
    %365 = vector.load %arg8[%c6_267, %c0_268] : memref<18x128xf32, #tpu.memory_space<vmem>>, vector<2x128xf32>
    tpu.vector_store %arg8[%c6_267, %c0_268], %364 {strides = array<i32>} : memref<18x128xf32, #tpu.memory_space<vmem>>, vector<2x128xf32>,
    %366 = vector.extract_strided_slice %357 {offsets = [0, 512], sizes = [2, 128], strides = [1, 1]} : vector<2x1152xf32> to vector<2x128xf32>
    %c8_269 = arith.constant 8 : index
    %c0_270 = arith.constant 0 : index
    %367 = vector.load %arg8[%c8_269, %c0_270] : memref<18x128xf32, #tpu.memory_space<vmem>>, vector<2x128xf32>
    tpu.vector_store %arg8[%c8_269, %c0_270], %366 {strides = array<i32>} : memref<18x128xf32, #tpu.memory_space<vmem>>, vector<2x128xf32>,
    %368 = vector.extract_strided_slice %357 {offsets = [0, 640], sizes = [2, 128], strides = [1, 1]} : vector<2x1152xf32> to vector<2x128xf32>
    %c10_271 = arith.constant 10 : index
    %c0_272 = arith.constant 0 : index
    %369 = vector.load %arg8[%c10_271, %c0_272] : memref<18x128xf32, #tpu.memory_space<vmem>>, vector<2x128xf32>
    tpu.vector_store %arg8[%c10_271, %c0_272], %368 {strides = array<i32>} : memref<18x128xf32, #tpu.memory_space<vmem>>, vector<2x128xf32>,
    %370 = vector.extract_strided_slice %357 {offsets = [0, 768], sizes = [2, 128], strides = [1, 1]} : vector<2x1152xf32> to vector<2x128xf32>
    %c12_273 = arith.constant 12 : index
    %c0_274 = arith.constant 0 : index
    %371 = vector.load %arg8[%c12_273, %c0_274] : memref<18x128xf32, #tpu.memory_space<vmem>>, vector<2x128xf32>
    tpu.vector_store %arg8[%c12_273, %c0_274], %370 {strides = array<i32>} : memref<18x128xf32, #tpu.memory_space<vmem>>, vector<2x128xf32>,
    %372 = vector.extract_strided_slice %357 {offsets = [0, 896], sizes = [2, 128], strides = [1, 1]} : vector<2x1152xf32> to vector<2x128xf32>
    %c14_275 = arith.constant 14 : index
    %c0_276 = arith.constant 0 : index
    %373 = vector.load %arg8[%c14_275, %c0_276] : memref<18x128xf32, #tpu.memory_space<vmem>>, vector<2x128xf32>
    tpu.vector_store %arg8[%c14_275, %c0_276], %372 {strides = array<i32>} : memref<18x128xf32, #tpu.memory_space<vmem>>, vector<2x128xf32>,
    %374 = vector.extract_strided_slice %357 {offsets = [0, 1024], sizes = [2, 128], strides = [1, 1]} : vector<2x1152xf32> to vector<2x128xf32>
    %c16_277 = arith.constant 16 : index
    %c0_278 = arith.constant 0 : index
    %375 = vector.load %arg8[%c16_277, %c0_278] : memref<18x128xf32, #tpu.memory_space<vmem>>, vector<2x128xf32>
    tpu.vector_store %arg8[%c16_277, %c0_278], %374 {strides = array<i32>} : memref<18x128xf32, #tpu.memory_space<vmem>>, vector<2x128xf32>,
    %c1_279 = arith.constant 1 : index
    %c0_280 = arith.constant 0 : index
    %c0_281 = arith.constant 0 : index
    %376 = vector.load %arg0[%c1_279, %c0_280, %c0_281] : memref<8x32x128xf32, #tpu.memory_space<vmem>>, vector<1x32x128xf32>
    %377 = vector.shape_cast %376 : vector<1x32x128xf32> to vector<32x128xf32>
    %c0_282 = arith.constant 0 : index
    %c0_283 = arith.constant 0 : index
    %378 = vector.load %arg4[%c0_282, %c0_283] : memref<32x18xbf16, #tpu.memory_space<vmem>>, vector<32x18xbf16>
    %c0_284 = arith.constant 0 : index
    %c0_285 = arith.constant 0 : index
    %379 = vector.load %arg8[%c0_284, %c0_285] : memref<18x128xf32, #tpu.memory_space<vmem>>, vector<18x128xf32>
    %380 = arith.truncf %379 : vector<18x128xf32> to vector<18x128xbf16>
    %cst_286 = arith.constant dense<0.000000e+00> : vector<32x128xf32>
    %381 = tpu.matmul %378, %380, %cst_286 {dimension_numbers = #tpu.dot_dimension_numbers<[1], [0], [0], [1], [0, 0, 1, 1], [], []>} : vector<32x18xbf16>, vector<18x128xbf16>, vector<32x128xf32> -> vector<32x128xf32>
    %382 = arith.addf %377, %381 : vector<32x128xf32>
    %383 = arith.mulf %382, %382 : vector<32x128xf32>
    %384 = arith.mulf %382, %383 : vector<32x128xf32>
    %cst_287 = arith.constant 4.471500e-02 : f32
    %385 = vector.broadcast %cst_287 : f32 to vector<32x128xf32>
    %386 = arith.mulf %385, %384 : vector<32x128xf32>
    %387 = arith.addf %382, %386 : vector<32x128xf32>
    %cst_288 = arith.constant 0.797884583 : f32
    %388 = vector.broadcast %cst_288 : f32 to vector<32x128xf32>
    %389 = arith.mulf %388, %387 : vector<32x128xf32>
    %390 = math.tanh %389 : vector<32x128xf32>
    %cst_289 = arith.constant 1.000000e+00 : f32
    %391 = vector.broadcast %cst_289 : f32 to vector<32x128xf32>
    %392 = arith.addf %391, %390 : vector<32x128xf32>
    %cst_290 = arith.constant 5.000000e-01 : f32
    %393 = vector.broadcast %cst_290 : f32 to vector<32x128xf32>
    %394 = arith.mulf %393, %392 : vector<32x128xf32>
    %395 = arith.mulf %382, %394 : vector<32x128xf32>
    %c0_291 = arith.constant 0 : index
    %c0_292 = arith.constant 0 : index
    %396 = vector.load %arg5[%c0_291, %c0_292] : memref<2x32xbf16, #tpu.memory_space<vmem>>, vector<2x32xbf16>
    %397 = arith.truncf %395 : vector<32x128xf32> to vector<32x128xbf16>
    %cst_293 = arith.constant dense<0.000000e+00> : vector<2x128xf32>
    %398 = tpu.matmul %396, %397, %cst_293 {dimension_numbers = #tpu.dot_dimension_numbers<[1], [0], [0], [1], [0, 0, 1, 1], [], []>} : vector<2x32xbf16>, vector<32x128xbf16>, vector<2x128xf32> -> vector<2x128xf32>
    %c0_294 = arith.constant 0 : index
    %c0_295 = arith.constant 0 : index
    %399 = vector.load %arg6[%c0_294, %c0_295] : memref<2x1xf32, #tpu.memory_space<vmem>>, vector<2x1xf32>
    %400 = vector.broadcast %399 : vector<2x1xf32> to vector<2x128xf32>
    %401 = arith.addf %398, %400 : vector<2x128xf32>
    %cst_296 = arith.constant -1.000000e+00 : f32
    %cst_297 = arith.constant 1.000000e+00 : f32
    %402 = vector.broadcast %cst_296 : f32 to vector<2x128xf32>
    %403 = arith.maximumf %402, %401 : vector<2x128xf32>
    %404 = vector.broadcast %cst_297 : f32 to vector<2x128xf32>
    %405 = arith.minimumf %404, %403 : vector<2x128xf32>
    %cst_298 = arith.constant 0.739971042 : f32
    %406 = vector.broadcast %cst_298 : f32 to vector<2x128xf32>
    %407 = arith.mulf %406, %405 : vector<2x128xf32>
    %cst_299 = arith.constant 0.259366959 : f32
    %408 = vector.broadcast %cst_299 : f32 to vector<2x128xf32>
    %409 = arith.mulf %408, %354 : vector<2x128xf32>
    %410 = arith.addf %407, %409 : vector<2x128xf32>
    %c0_300 = arith.constant 0 : index
    %c0_301 = arith.constant 0 : index
    %c0_302 = arith.constant 0 : index
    %411 = vector.load %arg2[%c0_300, %c0_301, %c0_302] : memref<7x2x128xf32, #tpu.memory_space<vmem>>, vector<1x2x128xf32>
    %412 = vector.shape_cast %411 : vector<1x2x128xf32> to vector<2x128xf32>
    %413 = arith.addf %410, %412 : vector<2x128xf32>
    %414 = arith.truncf %413 : vector<2x128xf32> to vector<2x128xbf16>
    %c0_303 = arith.constant 0 : index
    %c0_304 = arith.constant 0 : index
    %415 = vector.load %arg3[%c0_303, %c0_304] : memref<128x1152xbf16, #tpu.memory_space<vmem>>, vector<128x1152xbf16>
    %cst_305 = arith.constant dense<0.000000e+00> : vector<2x1152xf32>
    %416 = tpu.matmul %414, %415, %cst_305 {dimension_numbers = #tpu.dot_dimension_numbers<[1], [0], [0], [1], [0, 0, 1, 1], [], []>} : vector<2x128xbf16>, vector<128x1152xbf16>, vector<2x1152xf32> -> vector<2x1152xf32>
    %417 = vector.extract_strided_slice %416 {offsets = [0, 0], sizes = [2, 128], strides = [1, 1]} : vector<2x1152xf32> to vector<2x128xf32>
    %c0_306 = arith.constant 0 : index
    %c0_307 = arith.constant 0 : index
    %418 = vector.load %arg8[%c0_306, %c0_307] : memref<18x128xf32, #tpu.memory_space<vmem>>, vector<2x128xf32>
    tpu.vector_store %arg8[%c0_306, %c0_307], %417 {strides = array<i32>} : memref<18x128xf32, #tpu.memory_space<vmem>>, vector<2x128xf32>,
    %419 = vector.extract_strided_slice %416 {offsets = [0, 128], sizes = [2, 128], strides = [1, 1]} : vector<2x1152xf32> to vector<2x128xf32>
    %c2_308 = arith.constant 2 : index
    %c0_309 = arith.constant 0 : index
    %420 = vector.load %arg8[%c2_308, %c0_309] : memref<18x128xf32, #tpu.memory_space<vmem>>, vector<2x128xf32>
    tpu.vector_store %arg8[%c2_308, %c0_309], %419 {strides = array<i32>} : memref<18x128xf32, #tpu.memory_space<vmem>>, vector<2x128xf32>,
    %421 = vector.extract_strided_slice %416 {offsets = [0, 256], sizes = [2, 128], strides = [1, 1]} : vector<2x1152xf32> to vector<2x128xf32>
    %c4_310 = arith.constant 4 : index
    %c0_311 = arith.constant 0 : index
    %422 = vector.load %arg8[%c4_310, %c0_311] : memref<18x128xf32, #tpu.memory_space<vmem>>, vector<2x128xf32>
    tpu.vector_store %arg8[%c4_310, %c0_311], %421 {strides = array<i32>} : memref<18x128xf32, #tpu.memory_space<vmem>>, vector<2x128xf32>,
    %423 = vector.extract_strided_slice %416 {offsets = [0, 384], sizes = [2, 128], strides = [1, 1]} : vector<2x1152xf32> to vector<2x128xf32>
    %c6_312 = arith.constant 6 : index
    %c0_313 = arith.constant 0 : index
    %424 = vector.load %arg8[%c6_312, %c0_313] : memref<18x128xf32, #tpu.memory_space<vmem>>, vector<2x128xf32>
    tpu.vector_store %arg8[%c6_312, %c0_313], %423 {strides = array<i32>} : memref<18x128xf32, #tpu.memory_space<vmem>>, vector<2x128xf32>,
    %425 = vector.extract_strided_slice %416 {offsets = [0, 512], sizes = [2, 128], strides = [1, 1]} : vector<2x1152xf32> to vector<2x128xf32>
    %c8_314 = arith.constant 8 : index
    %c0_315 = arith.constant 0 : index
    %426 = vector.load %arg8[%c8_314, %c0_315] : memref<18x128xf32, #tpu.memory_space<vmem>>, vector<2x128xf32>
    tpu.vector_store %arg8[%c8_314, %c0_315], %425 {strides = array<i32>} : memref<18x128xf32, #tpu.memory_space<vmem>>, vector<2x128xf32>,
    %427 = vector.extract_strided_slice %416 {offsets = [0, 640], sizes = [2, 128], strides = [1, 1]} : vector<2x1152xf32> to vector<2x128xf32>
    %c10_316 = arith.constant 10 : index
    %c0_317 = arith.constant 0 : index
    %428 = vector.load %arg8[%c10_316, %c0_317] : memref<18x128xf32, #tpu.memory_space<vmem>>, vector<2x128xf32>
    tpu.vector_store %arg8[%c10_316, %c0_317], %427 {strides = array<i32>} : memref<18x128xf32, #tpu.memory_space<vmem>>, vector<2x128xf32>,
    %429 = vector.extract_strided_slice %416 {offsets = [0, 768], sizes = [2, 128], strides = [1, 1]} : vector<2x1152xf32> to vector<2x128xf32>
    %c12_318 = arith.constant 12 : index
    %c0_319 = arith.constant 0 : index
    %430 = vector.load %arg8[%c12_318, %c0_319] : memref<18x128xf32, #tpu.memory_space<vmem>>, vector<2x128xf32>
    tpu.vector_store %arg8[%c12_318, %c0_319], %429 {strides = array<i32>} : memref<18x128xf32, #tpu.memory_space<vmem>>, vector<2x128xf32>,
    %431 = vector.extract_strided_slice %416 {offsets = [0, 896], sizes = [2, 128], strides = [1, 1]} : vector<2x1152xf32> to vector<2x128xf32>
    %c14_320 = arith.constant 14 : index
    %c0_321 = arith.constant 0 : index
    %432 = vector.load %arg8[%c14_320, %c0_321] : memref<18x128xf32, #tpu.memory_space<vmem>>, vector<2x128xf32>
    tpu.vector_store %arg8[%c14_320, %c0_321], %431 {strides = array<i32>} : memref<18x128xf32, #tpu.memory_space<vmem>>, vector<2x128xf32>,
    %433 = vector.extract_strided_slice %416 {offsets = [0, 1024], sizes = [2, 128], strides = [1, 1]} : vector<2x1152xf32> to vector<2x128xf32>
    %c16_322 = arith.constant 16 : index
    %c0_323 = arith.constant 0 : index
    %434 = vector.load %arg8[%c16_322, %c0_323] : memref<18x128xf32, #tpu.memory_space<vmem>>, vector<2x128xf32>
    tpu.vector_store %arg8[%c16_322, %c0_323], %433 {strides = array<i32>} : memref<18x128xf32, #tpu.memory_space<vmem>>, vector<2x128xf32>,
    %c0_324 = arith.constant 0 : index
    %c0_325 = arith.constant 0 : index
    %c0_326 = arith.constant 0 : index
    %435 = vector.load %arg0[%c0_324, %c0_325, %c0_326] : memref<8x32x128xf32, #tpu.memory_space<vmem>>, vector<1x32x128xf32>
    %436 = vector.shape_cast %435 : vector<1x32x128xf32> to vector<32x128xf32>
    %c0_327 = arith.constant 0 : index
    %c0_328 = arith.constant 0 : index
    %437 = vector.load %arg4[%c0_327, %c0_328] : memref<32x18xbf16, #tpu.memory_space<vmem>>, vector<32x18xbf16>
    %c0_329 = arith.constant 0 : index
    %c0_330 = arith.constant 0 : index
    %438 = vector.load %arg8[%c0_329, %c0_330] : memref<18x128xf32, #tpu.memory_space<vmem>>, vector<18x128xf32>
    %439 = arith.truncf %438 : vector<18x128xf32> to vector<18x128xbf16>
    %cst_331 = arith.constant dense<0.000000e+00> : vector<32x128xf32>
    %440 = tpu.matmul %437, %439, %cst_331 {dimension_numbers = #tpu.dot_dimension_numbers<[1], [0], [0], [1], [0, 0, 1, 1], [], []>} : vector<32x18xbf16>, vector<18x128xbf16>, vector<32x128xf32> -> vector<32x128xf32>
    %441 = arith.addf %436, %440 : vector<32x128xf32>
    %442 = arith.mulf %441, %441 : vector<32x128xf32>
    %443 = arith.mulf %441, %442 : vector<32x128xf32>
    %cst_332 = arith.constant 4.471500e-02 : f32
    %444 = vector.broadcast %cst_332 : f32 to vector<32x128xf32>
    %445 = arith.mulf %444, %443 : vector<32x128xf32>
    %446 = arith.addf %441, %445 : vector<32x128xf32>
    %cst_333 = arith.constant 0.797884583 : f32
    %447 = vector.broadcast %cst_333 : f32 to vector<32x128xf32>
    %448 = arith.mulf %447, %446 : vector<32x128xf32>
    %449 = math.tanh %448 : vector<32x128xf32>
    %cst_334 = arith.constant 1.000000e+00 : f32
    %450 = vector.broadcast %cst_334 : f32 to vector<32x128xf32>
    %451 = arith.addf %450, %449 : vector<32x128xf32>
    %cst_335 = arith.constant 5.000000e-01 : f32
    %452 = vector.broadcast %cst_335 : f32 to vector<32x128xf32>
    %453 = arith.mulf %452, %451 : vector<32x128xf32>
    %454 = arith.mulf %441, %453 : vector<32x128xf32>
    %c0_336 = arith.constant 0 : index
    %c0_337 = arith.constant 0 : index
    %455 = vector.load %arg5[%c0_336, %c0_337] : memref<2x32xbf16, #tpu.memory_space<vmem>>, vector<2x32xbf16>
    %456 = arith.truncf %454 : vector<32x128xf32> to vector<32x128xbf16>
    %cst_338 = arith.constant dense<0.000000e+00> : vector<2x128xf32>
    %457 = tpu.matmul %455, %456, %cst_338 {dimension_numbers = #tpu.dot_dimension_numbers<[1], [0], [0], [1], [0, 0, 1, 1], [], []>} : vector<2x32xbf16>, vector<32x128xbf16>, vector<2x128xf32> -> vector<2x128xf32>
    %c0_339 = arith.constant 0 : index
    %c0_340 = arith.constant 0 : index
    %458 = vector.load %arg6[%c0_339, %c0_340] : memref<2x1xf32, #tpu.memory_space<vmem>>, vector<2x1xf32>
    %459 = vector.broadcast %458 : vector<2x1xf32> to vector<2x128xf32>
    %460 = arith.addf %457, %459 : vector<2x128xf32>
    %cst_341 = arith.constant -1.000000e+00 : f32
    %cst_342 = arith.constant 1.000000e+00 : f32
    %461 = vector.broadcast %cst_341 : f32 to vector<2x128xf32>
    %462 = arith.maximumf %461, %460 : vector<2x128xf32>
    %463 = vector.broadcast %cst_342 : f32 to vector<2x128xf32>
    %464 = arith.minimumf %463, %462 : vector<2x128xf32>
    %cst_343 = arith.constant 1.000000e+00 : f32
    %465 = vector.broadcast %cst_343 : f32 to vector<2x128xf32>
    %466 = arith.mulf %465, %464 : vector<2x128xf32>
    %cst_344 = arith.constant 0.000000e+00 : f32
    %467 = vector.broadcast %cst_344 : f32 to vector<2x128xf32>
    %468 = arith.mulf %467, %413 : vector<2x128xf32>
    %469 = arith.addf %466, %468 : vector<2x128xf32>
    %c0_345 = arith.constant 0 : index
    %c0_346 = arith.constant 0 : index
    %470 = vector.load %arg7[%c0_345, %c0_346] : memref<2x128xf32, #tpu.memory_space<vmem>>, vector<2x128xf32>
    tpu.vector_store %arg7[%c0_345, %c0_346], %469 {strides = array<i32>} : memref<2x128xf32, #tpu.memory_space<vmem>>, vector<2x128xf32>,
    return
  }
}

</mosaic_0001>

<llo_original>
// kernel: diffusion_denoise_forward.1
$region0: #{diffusion_denoise_forward.1}
  #allocation0 [shape = 'u32[]', space=smem, size = 0x4, offset = 0x4, fixed_abs, tag = 'smem constant byte address 0x4 - core index']
  #allocation1 [shape = 'u32[72,128]{1,0:T(1,128)}', space=vmem, size = 0x9000, scoped, tag = 'internal scratch']
  #allocation2 [shape = 'f32[18,128]{1,0:T(8,128)}', space=vmem, size = 0x3000, scoped, tag = 'scratch operand']
  %s0 = inlined_call_operand.vmem [shape: f32[8,32,128], index: 0, kind: input, shape index: {}]
  %s1 = inlined_call_operand.vmem [shape: f32[2,128], index: 1, kind: input, shape index: {}]
  %s2 = inlined_call_operand.vmem [shape: f32[7,2,128], index: 2, kind: input, shape index: {}]
  %s3 = inlined_call_operand.vmem [shape: bf16[128,1152], index: 3, kind: input, shape index: {}]
  %s4 = inlined_call_operand.vmem [shape: bf16[32,18], index: 4, kind: input, shape index: {}]
  %s5 = inlined_call_operand.vmem [shape: bf16[2,32], index: 5, kind: input, shape index: {}]
  %s6 = inlined_call_operand.vmem [shape: f32[2,1], index: 6, kind: input, shape index: {}]
  %s7 = inlined_call_operand.vmem [shape: f32[2,128], index: 7, kind: output, shape index: {}]
  %s8 = sld [smem:[#allocation0]]
  $region38: #{diffusion_denoise_forward.1} parent=0
    _
  %s10 = ssub.s32 1, %s8
  %s11 = scalar_select 0, %s10, %s8
  // Predicated region
  $region2: #{diffusion_denoise_forward.1} parent=0 // pred_check
    _
  $region3: #{diffusion_denoise_forward.1} parent=0 // pred_check_branch
    %13 = sbr.rel (0) target = $region5
  $region4: #{diffusion_denoise_forward.1} parent=0 // pred_region
    _
  $region5: #{diffusion_denoise_forward.1} parent=0 // pred_fallthru
    _
  // Predicated region
  $region6: #{diffusion_denoise_forward.1} parent=0 // pred_check
    _
  $region7: #{diffusion_denoise_forward.1} parent=0 // pred_check_branch
    %15 = sbr.rel (0) target = $region9
  $region8: #{diffusion_denoise_forward.1} parent=0 // pred_region
    _
  $region9: #{diffusion_denoise_forward.1} parent=0 // pred_fallthru
    _
  // Predicated region
  $region10: #{diffusion_denoise_forward.1} parent=0 // pred_check
    _
  $region11: #{diffusion_denoise_forward.1} parent=0 // pred_check_branch
    %17 = sbr.rel (0) target = $region13
  $region12: #{diffusion_denoise_forward.1} parent=0 // pred_region
    _
  $region13: #{diffusion_denoise_forward.1} parent=0 // pred_fallthru
    _
  // Predicated region
  $region14: #{diffusion_denoise_forward.1} parent=0 // pred_check
    _
  $region15: #{diffusion_denoise_forward.1} parent=0 // pred_check_branch
    %19 = sbr.rel (0) target = $region17
  $region16: #{diffusion_denoise_forward.1} parent=0 // pred_region
    _
  $region17: #{diffusion_denoise_forward.1} parent=0 // pred_fallthru
    _
  // Predicated region
  $region18: #{diffusion_denoise_forward.1} parent=0 // pred_check
    _
  $region19: #{diffusion_denoise_forward.1} parent=0 // pred_check_branch
    %21 = sbr.rel (0) target = $region21
  $region20: #{diffusion_denoise_forward.1} parent=0 // pred_region
    _
  $region21: #{diffusion_denoise_forward.1} parent=0 // pred_fallthru
    _
  // Predicated region
  $region22: #{diffusion_denoise_forward.1} parent=0 // pred_check
    _
  $region23: #{diffusion_denoise_forward.1} parent=0 // pred_check_branch
    %23 = sbr.rel (0) target = $region25
  $region24: #{diffusion_denoise_forward.1} parent=0 // pred_region
    _
  $region25: #{diffusion_denoise_forward.1} parent=0 // pred_fallthru
    _
  // Predicated region
  $region26: #{diffusion_denoise_forward.1} parent=0 // pred_check
    _
  $region27: #{diffusion_denoise_forward.1} parent=0 // pred_check_branch
    %25 = sbr.rel (0) target = $region29
  $region28: #{diffusion_denoise_forward.1} parent=0 // pred_region
    _
  $region29: #{diffusion_denoise_forward.1} parent=0 // pred_fallthru
    _
  %v27 = vld [vmem:[%s1] sm:$0x3]
  %v28 = vpack.c.bf16 %v27, %v27
  %v29 = vld [vmem:[%s3] sm:$0xff]
  %v30 = vld [vmem:[%s3 + $0x8] sm:$0xff]
  %v31 = vld [vmem:[%s3 + $0x10] sm:$0xff]
  %v32 = vld [vmem:[%s3 + $0x18] sm:$0xff]
  %v33 = vld [vmem:[%s3 + $0x20] sm:$0xf]
  %v34 = vld [vmem:[%s3 + $0x24] sm:$0xff]
  %v35 = vld [vmem:[%s3 + $0x2c] sm:$0xff]
  %v36 = vld [vmem:[%s3 + $0x34] sm:$0xff]
  %v37 = vld [vmem:[%s3 + $0x3c] sm:$0xff]
  %v38 = vld [vmem:[%s3 + $0x44] sm:$0xf]
  %v39 = vld [vmem:[%s3 + $0x48] sm:$0xff]
  %v40 = vld [vmem:[%s3 + $0x50] sm:$0xff]
  %v41 = vld [vmem:[%s3 + $0x58] sm:$0xff]
  %v42 = vld [vmem:[%s3 + $0x60] sm:$0xff]
  %v43 = vld [vmem:[%s3 + $0x68] sm:$0xf]
  %v44 = vld [vmem:[%s3 + $0x6c] sm:$0xff]
  %v45 = vld [vmem:[%s3 + $0x74] sm:$0xff]
  %v46 = vld [vmem:[%s3 + $0x7c] sm:$0xff]
  %v47 = vld [vmem:[%s3 + $0x84] sm:$0xff]
  %v48 = vld [vmem:[%s3 + $0x8c] sm:$0xf]
  %v49 = vld [vmem:[%s3 + $0x90] sm:$0xff]
  %v50 = vld [vmem:[%s3 + $0x98] sm:$0xff]
  %v51 = vld [vmem:[%s3 + $0xa0] sm:$0xff]
  %v52 = vld [vmem:[%s3 + $0xa8] sm:$0xff]
  %v53 = vld [vmem:[%s3 + $0xb0] sm:$0xf]
  %v54 = vld [vmem:[%s3 + $0xb4] sm:$0xff]
  %v55 = vld [vmem:[%s3 + $0xbc] sm:$0xff]
  %v56 = vld [vmem:[%s3 + $0xc4] sm:$0xff]
  %v57 = vld [vmem:[%s3 + $0xcc] sm:$0xff]
  %v58 = vld [vmem:[%s3 + $0xd4] sm:$0xf]
  %v59 = vld [vmem:[%s3 + $0xd8] sm:$0xff]
  %v60 = vld [vmem:[%s3 + $0xe0] sm:$0xff]
  %v61 = vld [vmem:[%s3 + $0xe8] sm:$0xff]
  %v62 = vld [vmem:[%s3 + $0xf0] sm:$0xff]
  %v63 = vld [vmem:[%s3 + $0xf8] sm:$0xf]
  %v64 = vld [vmem:[%s3 + $0xfc] sm:$0xff]
  %v65 = vld [vmem:[%s3 + $0x104] sm:$0xff]
  %v66 = vld [vmem:[%s3 + $0x10c] sm:$0xff]
  %v67 = vld [vmem:[%s3 + $0x114] sm:$0xff]
  %v68 = vld [vmem:[%s3 + $0x11c] sm:$0xf]
  %v69 = vld [vmem:[%s3 + $0x120] sm:$0xff]
  %v70 = vld [vmem:[%s3 + $0x128] sm:$0xff]
  %v71 = vld [vmem:[%s3 + $0x130] sm:$0xff]
  %v72 = vld [vmem:[%s3 + $0x138] sm:$0xff]
  %v73 = vld [vmem:[%s3 + $0x140] sm:$0xf]
  %v74 = vld [vmem:[%s3 + $0x144] sm:$0xff]
  %v75 = vld [vmem:[%s3 + $0x14c] sm:$0xff]
  %v76 = vld [vmem:[%s3 + $0x154] sm:$0xff]
  %v77 = vld [vmem:[%s3 + $0x15c] sm:$0xff]
  %v78 = vld [vmem:[%s3 + $0x164] sm:$0xf]
  %v79 = vld [vmem:[%s3 + $0x168] sm:$0xff]
  %v80 = vld [vmem:[%s3 + $0x170] sm:$0xff]
  %v81 = vld [vmem:[%s3 + $0x178] sm:$0xff]
  %v82 = vld [vmem:[%s3 + $0x180] sm:$0xff]
  %v83 = vld [vmem:[%s3 + $0x188] sm:$0xf]
  %v84 = vld [vmem:[%s3 + $0x18c] sm:$0xff]
  %v85 = vld [vmem:[%s3 + $0x194] sm:$0xff]
  %v86 = vld [vmem:[%s3 + $0x19c] sm:$0xff]
  %v87 = vld [vmem:[%s3 + $0x1a4] sm:$0xff]
  %v88 = vld [vmem:[%s3 + $0x1ac] sm:$0xf]
  %v89 = vld [vmem:[%s3 + $0x1b0] sm:$0xff]
  %v90 = vld [vmem:[%s3 + $0x1b8] sm:$0xff]
  %v91 = vld [vmem:[%s3 + $0x1c0] sm:$0xff]
  %v92 = vld [vmem:[%s3 + $0x1c8] sm:$0xff]
  %v93 = vld [vmem:[%s3 + $0x1d0] sm:$0xf]
  %v94 = vld [vmem:[%s3 + $0x1d4] sm:$0xff]
  %v95 = vld [vmem:[%s3 + $0x1dc] sm:$0xff]
  %v96 = vld [vmem:[%s3 + $0x1e4] sm:$0xff]
  %v97 = vld [vmem:[%s3 + $0x1ec] sm:$0xff]
  %v98 = vld [vmem:[%s3 + $0x1f4] sm:$0xf]
  %v99 = vld [vmem:[%s3 + $0x1f8] sm:$0xff]
  %v100 = vld [vmem:[%s3 + $0x200] sm:$0xff]
  %v101 = vld [vmem:[%s3 + $0x208] sm:$0xff]
  %v102 = vld [vmem:[%s3 + $0x210] sm:$0xff]
  %v103 = vld [vmem:[%s3 + $0x218] sm:$0xf]
  %v104 = vld [vmem:[%s3 + $0x21c] sm:$0xff]
  %v105 = vld [vmem:[%s3 + $0x224] sm:$0xff]
  %v106 = vld [vmem:[%s3 + $0x22c] sm:$0xff]
  %v107 = vld [vmem:[%s3 + $0x234] sm:$0xff]
  %v108 = vld [vmem:[%s3 + $0x23c] sm:$0xf]
  %v189 = vunpack.c.l.b16 %v29
  %v190 = vunpack.c.h.b16 %v29
  %v191 = vunpack.c.l.b16 %v30
  %v192 = vunpack.c.h.b16 %v30
  %v193 = vunpack.c.l.b16 %v31
  %v194 = vunpack.c.h.b16 %v31
  %v195 = vunpack.c.l.b16 %v32
  %v196 = vunpack.c.h.b16 %v32
  %v197 = vunpack.c.l.b16 %v33
  %v198 = vunpack.c.l.b16 %v34
  %v199 = vunpack.c.h.b16 %v34
  %v200 = vunpack.c.l.b16 %v35
  %v201 = vunpack.c.h.b16 %v35
  %v202 = vunpack.c.l.b16 %v36
  %v203 = vunpack.c.h.b16 %v36
  %v204 = vunpack.c.l.b16 %v37
  %v205 = vunpack.c.h.b16 %v37
  %v206 = vunpack.c.l.b16 %v38
  %v207 = vunpack.c.l.b16 %v39
  %v208 = vunpack.c.h.b16 %v39
  %v209 = vunpack.c.l.b16 %v40
  %v210 = vunpack.c.h.b16 %v40
  %v211 = vunpack.c.l.b16 %v41
  %v212 = vunpack.c.h.b16 %v41
  %v213 = vunpack.c.l.b16 %v42
  %v214 = vunpack.c.h.b16 %v42
  %v215 = vunpack.c.l.b16 %v43
  %v216 = vunpack.c.l.b16 %v44
  %v217 = vunpack.c.h.b16 %v44
  %v218 = vunpack.c.l.b16 %v45
  %v219 = vunpack.c.h.b16 %v45
  %v220 = vunpack.c.l.b16 %v46
  %v221 = vunpack.c.h.b16 %v46
  %v222 = vunpack.c.l.b16 %v47
  %v223 = vunpack.c.h.b16 %v47
  %v224 = vunpack.c.l.b16 %v48
  %v225 = vunpack.c.l.b16 %v49
  %v226 = vunpack.c.h.b16 %v49
  %v227 = vunpack.c.l.b16 %v50
  %v228 = vunpack.c.h.b16 %v50
  %v229 = vunpack.c.l.b16 %v51
  %v230 = vunpack.c.h.b16 %v51
  %v231 = vunpack.c.l.b16 %v52
  %v232 = vunpack.c.h.b16 %v52
  %v233 = vunpack.c.l.b16 %v53
  %v234 = vunpack.c.l.b16 %v54
  %v235 = vunpack.c.h.b16 %v54
  %v236 = vunpack.c.l.b16 %v55
  %v237 = vunpack.c.h.b16 %v55
  %v238 = vunpack.c.l.b16 %v56
  %v239 = vunpack.c.h.b16 %v56
  %v240 = vunpack.c.l.b16 %v57
  %v241 = vunpack.c.h.b16 %v57
  %v242 = vunpack.c.l.b16 %v58
  %v243 = vunpack.c.l.b16 %v59
  %v244 = vunpack.c.h.b16 %v59
  %v245 = vunpack.c.l.b16 %v60
  %v246 = vunpack.c.h.b16 %v60
  %v247 = vunpack.c.l.b16 %v61
  %v248 = vunpack.c.h.b16 %v61
  %v249 = vunpack.c.l.b16 %v62
  %v250 = vunpack.c.h.b16 %v62
  %v251 = vunpack.c.l.b16 %v63
  %v252 = vunpack.c.l.b16 %v64
  %v253 = vunpack.c.h.b16 %v64
  %v254 = vunpack.c.l.b16 %v65
  %v255 = vunpack.c.h.b16 %v65
  %v256 = vunpack.c.l.b16 %v66
  %v257 = vunpack.c.h.b16 %v66
  %v258 = vunpack.c.l.b16 %v67
  %v259 = vunpack.c.h.b16 %v67
  %v260 = vunpack.c.l.b16 %v68
  %v261 = vunpack.c.l.b16 %v69
  %v262 = vunpack.c.h.b16 %v69
  %v263 = vunpack.c.l.b16 %v70
  %v264 = vunpack.c.h.b16 %v70
  %v265 = vunpack.c.l.b16 %v71
  %v266 = vunpack.c.h.b16 %v71
  %v267 = vunpack.c.l.b16 %v72
  %v268 = vunpack.c.h.b16 %v72
  %v269 = vunpack.c.l.b16 %v73
  %v270 = vunpack.c.l.b16 %v74
  %v271 = vunpack.c.h.b16 %v74
  %v272 = vunpack.c.l.b16 %v75
  %v273 = vunpack.c.h.b16 %v75
  %v274 = vunpack.c.l.b16 %v76
  %v275 = vunpack.c.h.b16 %v76
  %v276 = vunpack.c.l.b16 %v77
  %v277 = vunpack.c.h.b16 %v77
  %v278 = vunpack.c.l.b16 %v78
  %v279 = vunpack.c.l.b16 %v79
  %v280 = vunpack.c.h.b16 %v79
  %v281 = vunpack.c.l.b16 %v80
  %v282 = vunpack.c.h.b16 %v80
  %v283 = vunpack.c.l.b16 %v81
  %v284 = vunpack.c.h.b16 %v81
  %v285 = vunpack.c.l.b16 %v82
  %v286 = vunpack.c.h.b16 %v82
  %v287 = vunpack.c.l.b16 %v83
  %v288 = vunpack.c.l.b16 %v84
  %v289 = vunpack.c.h.b16 %v84
  %v290 = vunpack.c.l.b16 %v85
  %v291 = vunpack.c.h.b16 %v85
  %v292 = vunpack.c.l.b16 %v86
  %v293 = vunpack.c.h.b16 %v86
  %v294 = vunpack.c.l.b16 %v87
  %v295 = vunpack.c.h.b16 %v87
  %v296 = vunpack.c.l.b16 %v88
  %v297 = vunpack.c.l.b16 %v89
  %v298 = vunpack.c.h.b16 %v89
  %v299 = vunpack.c.l.b16 %v90
  %v300 = vunpack.c.h.b16 %v90
  %v301 = vunpack.c.l.b16 %v91
  %v302 = vunpack.c.h.b16 %v91
  %v303 = vunpack.c.l.b16 %v92
  %v304 = vunpack.c.h.b16 %v92
  %v305 = vunpack.c.l.b16 %v93
  %v306 = vunpack.c.l.b16 %v94
  %v307 = vunpack.c.h.b16 %v94
  %v308 = vunpack.c.l.b16 %v95
  %v309 = vunpack.c.h.b16 %v95
  %v310 = vunpack.c.l.b16 %v96
  %v311 = vunpack.c.h.b16 %v96
  %v312 = vunpack.c.l.b16 %v97
  %v313 = vunpack.c.h.b16 %v97
  %v314 = vunpack.c.l.b16 %v98
  %v315 = vunpack.c.l.b16 %v99
  %v316 = vunpack.c.h.b16 %v99
  %v317 = vunpack.c.l.b16 %v100
  %v318 = vunpack.c.h.b16 %v100
  %v319 = vunpack.c.l.b16 %v101
  %v320 = vunpack.c.h.b16 %v101
  %v321 = vunpack.c.l.b16 %v102
  %v322 = vunpack.c.h.b16 %v102
  %v323 = vunpack.c.l.b16 %v103
  %v324 = vunpack.c.l.b16 %v104
  %v325 = vunpack.c.h.b16 %v104
  %v326 = vunpack.c.l.b16 %v105
  %v327 = vunpack.c.h.b16 %v105
  %v328 = vunpack.c.l.b16 %v106
  %v329 = vunpack.c.h.b16 %v106
  %v330 = vunpack.c.l.b16 %v107
  %v331 = vunpack.c.h.b16 %v107
  %v332 = vunpack.c.l.b16 %v108
  %v333 = vpack.c.b16 %v198, %v189
  %v334 = vpack.c.b16 %v199, %v190
  %v335 = vpack.c.b16 %v200, %v191
  %v336 = vpack.c.b16 %v201, %v192
  %v337 = vpack.c.b16 %v202, %v193
  %v338 = vpack.c.b16 %v203, %v194
  %v339 = vpack.c.b16 %v204, %v195
  %v340 = vpack.c.b16 %v205, %v196
  %v341 = vpack.c.b16 %v206, %v197
  %v342 = vpack.c.b16 %v216, %v207
  %v343 = vpack.c.b16 %v217, %v208
  %v344 = vpack.c.b16 %v218, %v209
  %v345 = vpack.c.b16 %v219, %v210
  %v346 = vpack.c.b16 %v220, %v211
  %v347 = vpack.c.b16 %v221, %v212
  %v348 = vpack.c.b16 %v222, %v213
  %v349 = vpack.c.b16 %v223, %v214
  %v350 = vpack.c.b16 %v224, %v215
  %v351 = vpack.c.b16 %v234, %v225
  %v352 = vpack.c.b16 %v235, %v226
  %v353 = vpack.c.b16 %v236, %v227
  %v354 = vpack.c.b16 %v237, %v228
  %v355 = vpack.c.b16 %v238, %v229
  %v356 = vpack.c.b16 %v239, %v230
  %v357 = vpack.c.b16 %v240, %v231
  %v358 = vpack.c.b16 %v241, %v232
  %v359 = vpack.c.b16 %v242, %v233
  %v360 = vpack.c.b16 %v252, %v243
  %v361 = vpack.c.b16 %v253, %v244
  %v362 = vpack.c.b16 %v254, %v245
  %v363 = vpack.c.b16 %v255, %v246
  %v364 = vpack.c.b16 %v256, %v247
  %v365 = vpack.c.b16 %v257, %v248
  %v366 = vpack.c.b16 %v258, %v249
  %v367 = vpack.c.b16 %v259, %v250
  %v368 = vpack.c.b16 %v260, %v251
  %v369 = vpack.c.b16 %v270, %v261
  %v370 = vpack.c.b16 %v271, %v262
  %v371 = vpack.c.b16 %v272, %v263
  %v372 = vpack.c.b16 %v273, %v264
  %v373 = vpack.c.b16 %v274, %v265
  %v374 = vpack.c.b16 %v275, %v266
  %v375 = vpack.c.b16 %v276, %v267
  %v376 = vpack.c.b16 %v277, %v268
  %v377 = vpack.c.b16 %v278, %v269
  %v378 = vpack.c.b16 %v288, %v279
  %v379 = vpack.c.b16 %v289, %v280
  %v380 = vpack.c.b16 %v290, %v281
  %v381 = vpack.c.b16 %v291, %v282
  %v382 = vpack.c.b16 %v292, %v283
  %v383 = vpack.c.b16 %v293, %v284
  %v384 = vpack.c.b16 %v294, %v285
  %v385 = vpack.c.b16 %v295, %v286
  %v386 = vpack.c.b16 %v296, %v287
  %v387 = vpack.c.b16 %v306, %v297
  %v388 = vpack.c.b16 %v307, %v298
  %v389 = vpack.c.b16 %v308, %v299
  %v390 = vpack.c.b16 %v309, %v300
  %v391 = vpack.c.b16 %v310, %v301
  %v392 = vpack.c.b16 %v311, %v302
  %v393 = vpack.c.b16 %v312, %v303
  %v394 = vpack.c.b16 %v313, %v304
  %v395 = vpack.c.b16 %v314, %v305
  %v396 = vpack.c.b16 %v324, %v315
  %v397 = vpack.c.b16 %v325, %v316
  %v398 = vpack.c.b16 %v326, %v317
  %v399 = vpack.c.b16 %v327, %v318
  %v400 = vpack.c.b16 %v328, %v319
  %v401 = vpack.c.b16 %v329, %v320
  %v402 = vpack.c.b16 %v330, %v321
  %v403 = vpack.c.b16 %v331, %v322
  %v404 = vpack.c.b16 %v332, %v323
  %477 = vmatpush.bf16.msra.mxu0 %v396
  %478 = vmatpush.bf16.msra.mxu0 %v387
  %479 = vmatpush.bf16.msra.mxu0 %v378
  %480 = vmatpush.bf16.msra.mxu0 %v369
  %481 = vmatpush.bf16.msra.mxu0 %v360
  %482 = vmatpush.bf16.msra.mxu0 %v351
  %483 = vmatpush.bf16.msra.mxu0 %v342
  %484 = vmatpush.bf16.msra.mxu0 %v333
  %485 = vmatmul.bf16.gmra.mxu0 %v28
  %v486 = vpop.f32.mrf.mxu0
  %v487 = vadd.f32 0.0, %v486
  %v488 = vpop.f32.mrf.mxu0
  %489 = vdwg.mxu0
  %490 = vmatpush.bf16.msra.mxu0 %v397
  %491 = vmatpush.bf16.msra.mxu0 %v388
  %492 = vmatpush.bf16.msra.mxu0 %v379
  %493 = vmatpush.bf16.msra.mxu0 %v370
  %494 = vmatpush.bf16.msra.mxu0 %v361
  %495 = vmatpush.bf16.msra.mxu0 %v352
  %496 = vmatpush.bf16.msra.mxu0 %v343
  %497 = vmatpush.bf16.msra.mxu0 %v334
  %498 = vmatmul.bf16.gmra.mxu0 %v28
  %v499 = vpop.f32.mrf.mxu0
  %v500 = vadd.f32 0.0, %v499
  %v501 = vpop.f32.mrf.mxu0
  %502 = vdwg.mxu0
  %503 = vmatpush.bf16.msra.mxu0 %v398
  %504 = vmatpush.bf16.msra.mxu0 %v389
  %505 = vmatpush.bf16.msra.mxu0 %v380
  %506 = vmatpush.bf16.msra.mxu0 %v371
  %507 = vmatpush.bf16.msra.mxu0 %v362
  %508 = vmatpush.bf16.msra.mxu0 %v353
  %509 = vmatpush.bf16.msra.mxu0 %v344
  %510 = vmatpush.bf16.msra.mxu0 %v335
  %511 = vmatmul.bf16.gmra.mxu0 %v28
  %v512 = vpop.f32.mrf.mxu0
  %v513 = vadd.f32 0.0, %v512
  %v514 = vpop.f32.mrf.mxu0
  %515 = vdwg.mxu0
  %516 = vmatpush.bf16.msra.mxu0 %v399
  %517 = vmatpush.bf16.msra.mxu0 %v390
  %518 = vmatpush.bf16.msra.mxu0 %v381
  %519 = vmatpush.bf16.msra.mxu0 %v372
  %520 = vmatpush.bf16.msra.mxu0 %v363
  %521 = vmatpush.bf16.msra.mxu0 %v354
  %522 = vmatpush.bf16.msra.mxu0 %v345
  %523 = vmatpush.bf16.msra.mxu0 %v336
  %524 = vmatmul.bf16.gmra.mxu0 %v28
  %v525 = vpop.f32.mrf.mxu0
  %v526 = vadd.f32 0.0, %v525
  %v527 = vpop.f32.mrf.mxu0
  %528 = vdwg.mxu0
  %529 = vmatpush.bf16.msra.mxu0 %v400
  %530 = vmatpush.bf16.msra.mxu0 %v391
  %531 = vmatpush.bf16.msra.mxu0 %v382
  %532 = vmatpush.bf16.msra.mxu0 %v373
  %533 = vmatpush.bf16.msra.mxu0 %v364
  %534 = vmatpush.bf16.msra.mxu0 %v355
  %535 = vmatpush.bf16.msra.mxu0 %v346
  %536 = vmatpush.bf16.msra.mxu0 %v337
  %537 = vmatmul.bf16.gmra.mxu0 %v28
  %v538 = vpop.f32.mrf.mxu0
  %v539 = vadd.f32 0.0, %v538
  %v540 = vpop.f32.mrf.mxu0
  %541 = vdwg.mxu0
  %542 = vmatpush.bf16.msra.mxu0 %v401
  %543 = vmatpush.bf16.msra.mxu0 %v392
  %544 = vmatpush.bf16.msra.mxu0 %v383
  %545 = vmatpush.bf16.msra.mxu0 %v374
  %546 = vmatpush.bf16.msra.mxu0 %v365
  %547 = vmatpush.bf16.msra.mxu0 %v356
  %548 = vmatpush.bf16.msra.mxu0 %v347
  %549 = vmatpush.bf16.msra.mxu0 %v338
  %550 = vmatmul.bf16.gmra.mxu0 %v28
  %v551 = vpop.f32.mrf.mxu0
  %v552 = vadd.f32 0.0, %v551
  %v553 = vpop.f32.mrf.mxu0
  %554 = vdwg.mxu0
  %555 = vmatpush.bf16.msra.mxu0 %v402
  %556 = vmatpush.bf16.msra.mxu0 %v393
  %557 = vmatpush.bf16.msra.mxu0 %v384
  %558 = vmatpush.bf16.msra.mxu0 %v375
  %559 = vmatpush.bf16.msra.mxu0 %v366
  %560 = vmatpush.bf16.msra.mxu0 %v357
  %561 = vmatpush.bf16.msra.mxu0 %v348
  %562 = vmatpush.bf16.msra.mxu0 %v339
  %563 = vmatmul.bf16.gmra.mxu0 %v28
  %v564 = vpop.f32.mrf.mxu0
  %v565 = vadd.f32 0.0, %v564
  %v566 = vpop.f32.mrf.mxu0
  %567 = vdwg.mxu0
  %568 = vmatpush.bf16.msra.mxu0 %v403
  %569 = vmatpush.bf16.msra.mxu0 %v394
  %570 = vmatpush.bf16.msra.mxu0 %v385
  %571 = vmatpush.bf16.msra.mxu0 %v376
  %572 = vmatpush.bf16.msra.mxu0 %v367
  %573 = vmatpush.bf16.msra.mxu0 %v358
  %574 = vmatpush.bf16.msra.mxu0 %v349
  %575 = vmatpush.bf16.msra.mxu0 %v340
  %576 = vmatmul.bf16.gmra.mxu0 %v28
  %v577 = vpop.f32.mrf.mxu0
  %v578 = vadd.f32 0.0, %v577
  %v579 = vpop.f32.mrf.mxu0
  %580 = vdwg.mxu0
  %581 = vmatpush.bf16.msra.mxu0 %v404
  %582 = vmatpush.bf16.msra.mxu0 %v395
  %583 = vmatpush.bf16.msra.mxu0 %v386
  %584 = vmatpush.bf16.msra.mxu0 %v377
  %585 = vmatpush.bf16.msra.mxu0 %v368
  %586 = vmatpush.bf16.msra.mxu0 %v359
  %587 = vmatpush.bf16.msra.mxu0 %v350
  %588 = vmatpush.bf16.msra.mxu0 %v341
  %589 = vmatmul.bf16.gmra.mxu0 %v28
  %v590 = vpop.f32.mrf.mxu0
  %v591 = vadd.f32 0.0, %v590
  %v592 = vpop.f32.mrf.mxu0
  %593 = vdwg.mxu0
  %594 = vst [vmem:[#allocation2] sm:$0x3] %v487
  %595 = vst [vmem:[#allocation2 + $0x2] sm:$0x3] %v500
  %596 = vst [vmem:[#allocation2 + $0x4] sm:$0x3] %v513
  %597 = vst [vmem:[#allocation2 + $0x6] sm:$0x3] %v526
  %598 = vst [vmem:[#allocation2 + $0x8] sm:$0x3] %v539
  %599 = vst [vmem:[#allocation2 + $0xa] sm:$0x3] %v552
  %600 = vst [vmem:[#allocation2 + $0xc] sm:$0x3] %v565
  %601 = vst [vmem:[#allocation2 + $0xe] sm:$0x3] %v578
  %602 = vst [vmem:[#allocation2 + $0x10] sm:$0x3] %v591
  %s603 = scalar_lea.vmem %s0, 224
  %v604 = vld [vmem:[%s603] sm:$0xff]
  %v605 = vld [vmem:[%s603 + $0x8] sm:$0xff]
  %v606 = vld [vmem:[%s603 + $0x10] sm:$0xff]
  %v607 = vld [vmem:[%s603 + $0x18] sm:$0xff]
  %v608 = vld [vmem:[%s4] sm:$0xf]
  %v609 = vld [vmem:[%s4 + $0x4] sm:$0xf]
  %v610 = vld [vmem:[%s4 + $0x8] sm:$0xf]
  %v611 = vld [vmem:[%s4 + $0xc] sm:$0xf]
  %v612 = vld [vmem:[#allocation2] sm:$0xff]
  %v613 = vld [vmem:[#allocation2 + $0x8] sm:$0xff]
  %v614 = vld [vmem:[#allocation2 + $0x10] sm:$0x3]
  %v615 = vpack.c.bf16 %v613, %v612
  %v616 = vpack.c.bf16 %v614, %v614
  %v621 = vunpack.c.l.b16 %v608
  %v622 = vunpack.c.l.b16 %v609
  %v623 = vunpack.c.l.b16 %v610
  %v624 = vunpack.c.l.b16 %v611
  %v625 = vpack.c.b16 %v622, %v621
  %v626 = vpack.c.b16 %v624, %v623
  %vm627 = vcmask 146432
  %v629 = vsel %vm627, %v625, 0
  %v632 = vsel %vm627, %v626, 0
  %vm634 = vcmask 1040384
  %v636 = vsel %vm634, %v616, 0
  %638 = vmatpush.bf16.msra.mxu0 0
  %639 = vmatpush.bf16.msra.mxu0 0
  %640 = vmatpush.bf16.msra.mxu0 0
  %641 = vmatpush.bf16.msra.mxu0 0
  %642 = vmatpush.bf16.msra.mxu0 0
  %643 = vmatpush.bf16.msra.mxu0 0
  %644 = vmatpush.bf16.msra.mxu0 %v636
  %645 = vmatpush.bf16.msra.mxu0 %v615
  %646 = vmatmul.bf16.gmra.mxu0 %v629
  %v647 = vpop.f32.mrf.mxu0
  %v648 = vadd.f32 0.0, %v647
  %v649 = vpop.f32.mrf.mxu0
  %v650 = vadd.f32 0.0, %v649
  %651 = vmatmul.bf16.gmra.mxu0 %v632
  %v652 = vpop.f32.mrf.mxu0
  %v653 = vadd.f32 0.0, %v652
  %v654 = vpop.f32.mrf.mxu0
  %v655 = vadd.f32 0.0, %v654
  %656 = vdwg.mxu0
  %v657 = vadd.f32 %v604, %v648
  %v658 = vadd.f32 %v605, %v650
  %v659 = vadd.f32 %v606, %v653
  %v660 = vadd.f32 %v607, %v655
  %v661 = vmul.f32 %v657, %v657
  %v662 = vmul.f32 %v658, %v658
  %v663 = vmul.f32 %v659, %v659
  %v664 = vmul.f32 %v660, %v660
  %v665 = vmul.f32 %v657, %v661
  %v666 = vmul.f32 %v658, %v662
  %v667 = vmul.f32 %v659, %v663
  %v668 = vmul.f32 %v660, %v664
  %v669 = vmul.f32 %v665, 0.044715
  %v670 = vmul.f32 %v666, 0.044715
  %v671 = vmul.f32 %v667, 0.044715
  %v672 = vmul.f32 %v668, 0.044715
  %v673 = vadd.f32 %v657, %v669
  %v674 = vadd.f32 %v658, %v670
  %v675 = vadd.f32 %v659, %v671
  %v676 = vadd.f32 %v660, %v672
  %v677 = vmul.f32 %v673, 0.7978846
  %v678 = vmul.f32 %v674, 0.7978846
  %v679 = vmul.f32 %v675, 0.7978846
  %v680 = vmul.f32 %v676, 0.7978846
  %v681 = vtanh.pop %v677
  %v682 = vtanh.pop %v678
  %v683 = vtanh.pop %v679
  %v684 = vtanh.pop %v680
  %v685 = vadd.f32 %v681, 1.0
  %v686 = vadd.f32 %v682, 1.0
  %v687 = vadd.f32 %v683, 1.0
  %v688 = vadd.f32 %v684, 1.0
  %v689 = vmul.f32 %v685, 0.5
  %v690 = vmul.f32 %v686, 0.5
  %v691 = vmul.f32 %v687, 0.5
  %v692 = vmul.f32 %v688, 0.5
  %v693 = vmul.f32 %v657, %v689
  %v694 = vmul.f32 %v658, %v690
  %v695 = vmul.f32 %v659, %v691
  %v696 = vmul.f32 %v660, %v692
  %v697 = vld [vmem:[%s5] sm:$0x1]
  %v698 = vpack.c.bf16 %v694, %v693
  %v699 = vpack.c.bf16 %v696, %v695
  %v700 = vld [vmem:[%s6] sm:$0x3]
  %702 = vset.pattern.permute.xlu0 0
  %703 = vperm.xlu0 %702, %v700
  %v704 = vpop.permute.xlu0 %703
  %vm706 = vcmask 261120
  %v708 = vsel %vm706, %v697, 0
  %710 = vmatpush.bf16.msra.mxu0 0
  %711 = vmatpush.bf16.msra.mxu0 0
  %712 = vmatpush.bf16.msra.mxu0 0
  %713 = vmatpush.bf16.msra.mxu0 0
  %714 = vmatpush.bf16.msra.mxu0 0
  %715 = vmatpush.bf16.msra.mxu0 0
  %716 = vmatpush.bf16.msra.mxu0 %v699
  %717 = vmatpush.bf16.msra.mxu0 %v698
  %718 = vmatmul.bf16.gmra.mxu0 %v708
  %v719 = vpop.f32.mrf.mxu0
  %v720 = vadd.f32 %v704, %v719
  %v721 = vpop.f32.mrf.mxu0
  %722 = vdwg.mxu0
  %v723 = vmax.f32 %v720, -1.0
  %v724 = vmin.f32 %v723, 1.0
  %v725 = vmul.f32 %v724, 0.19339041
  %v726 = vmul.f32 %v27, 0.03043895
  %v727 = vadd.f32 %v725, %v726
  %s728 = scalar_lea.vmem %s2, 12
  %v729 = vld [vmem:[%s728] sm:$0x3]
  %v730 = vadd.f32 %v727, %v729
  %v731 = vpack.c.bf16 %v730, %v730
  %v732 = vld [vmem:[%s3] sm:$0xff]
  %v733 = vld [vmem:[%s3 + $0x8] sm:$0xff]
  %v734 = vld [vmem:[%s3 + $0x10] sm:$0xff]
  %v735 = vld [vmem:[%s3 + $0x18] sm:$0xff]
  %v736 = vld [vmem:[%s3 + $0x20] sm:$0xf]
  %v737 = vld [vmem:[%s3 + $0x24] sm:$0xff]
  %v738 = vld [vmem:[%s3 + $0x2c] sm:$0xff]
  %v739 = vld [vmem:[%s3 + $0x34] sm:$0xff]
  %v740 = vld [vmem:[%s3 + $0x3c] sm:$0xff]
  %v741 = vld [vmem:[%s3 + $0x44] sm:$0xf]
  %v742 = vld [vmem:[%s3 + $0x48] sm:$0xff]
  %v743 = vld [vmem:[%s3 + $0x50] sm:$0xff]
  %v744 = vld [vmem:[%s3 + $0x58] sm:$0xff]
  %v745 = vld [vmem:[%s3 + $0x60] sm:$0xff]
  %v746 = vld [vmem:[%s3 + $0x68] sm:$0xf]
  %v747 = vld [vmem:[%s3 + $0x6c] sm:$0xff]
  %v748 = vld [vmem:[%s3 + $0x74] sm:$0xff]
  %v749 = vld [vmem:[%s3 + $0x7c] sm:$0xff]
  %v750 = vld [vmem:[%s3 + $0x84] sm:$0xff]
  %v751 = vld [vmem:[%s3 + $0x8c] sm:$0xf]
  %v752 = vld [vmem:[%s3 + $0x90] sm:$0xff]
  %v753 = vld [vmem:[%s3 + $0x98] sm:$0xff]
  %v754 = vld [vmem:[%s3 + $0xa0] sm:$0xff]
  %v755 = vld [vmem:[%s3 + $0xa8] sm:$0xff]
  %v756 = vld [vmem:[%s3 + $0xb0] sm:$0xf]
  %v757 = vld [vmem:[%s3 + $0xb4] sm:$0xff]
  %v758 = vld [vmem:[%s3 + $0xbc] sm:$0xff]
  %v759 = vld [vmem:[%s3 + $0xc4] sm:$0xff]
  %v760 = vld [vmem:[%s3 + $0xcc] sm:$0xff]
  %v761 = vld [vmem:[%s3 + $0xd4] sm:$0xf]
  %v762 = vld [vmem:[%s3 + $0xd8] sm:$0xff]
  %v763 = vld [vmem:[%s3 + $0xe0] sm:$0xff]
  %v764 = vld [vmem:[%s3 + $0xe8] sm:$0xff]
  %v765 = vld [vmem:[%s3 + $0xf0] sm:$0xff]
  %v766 = vld [vmem:[%s3 + $0xf8] sm:$0xf]
  %v767 = vld [vmem:[%s3 + $0xfc] sm:$0xff]
  %v768 = vld [vmem:[%s3 + $0x104] sm:$0xff]
  %v769 = vld [vmem:[%s3 + $0x10c] sm:$0xff]
  %v770 = vld [vmem:[%s3 + $0x114] sm:$0xff]
  %v771 = vld [vmem:[%s3 + $0x11c] sm:$0xf]
  %v772 = vld [vmem:[%s3 + $0x120] sm:$0xff]
  %v773 = vld [vmem:[%s3 + $0x128] sm:$0xff]
  %v774 = vld [vmem:[%s3 + $0x130] sm:$0xff]
  %v775 = vld [vmem:[%s3 + $0x138] sm:$0xff]
  %v776 = vld [vmem:[%s3 + $0x140] sm:$0xf]
  %v777 = vld [vmem:[%s3 + $0x144] sm:$0xff]
  %v778 = vld [vmem:[%s3 + $0x14c] sm:$0xff]
  %v779 = vld [vmem:[%s3 + $0x154] sm:$0xff]
  %v780 = vld [vmem:[%s3 + $0x15c] sm:$0xff]
  %v781 = vld [vmem:[%s3 + $0x164] sm:$0xf]
  %v782 = vld [vmem:[%s3 + $0x168] sm:$0xff]
  %v783 = vld [vmem:[%s3 + $0x170] sm:$0xff]
  %v784 = vld [vmem:[%s3 + $0x178] sm:$0xff]
  %v785 = vld [vmem:[%s3 + $0x180] sm:$0xff]
  %v786 = vld [vmem:[%s3 + $0x188] sm:$0xf]
  %v787 = vld [vmem:[%s3 + $0x18c] sm:$0xff]
  %v788 = vld [vmem:[%s3 + $0x194] sm:$0xff]
  %v789 = vld [vmem:[%s3 + $0x19c] sm:$0xff]
  %v790 = vld [vmem:[%s3 + $0x1a4] sm:$0xff]
  %v791 = vld [vmem:[%s3 + $0x1ac] sm:$0xf]
  %v792 = vld [vmem:[%s3 + $0x1b0] sm:$0xff]
  %v793 = vld [vmem:[%s3 + $0x1b8] sm:$0xff]
  %v794 = vld [vmem:[%s3 + $0x1c0] sm:$0xff]
  %v795 = vld [vmem:[%s3 + $0x1c8] sm:$0xff]
  %v796 = vld [vmem:[%s3 + $0x1d0] sm:$0xf]
  %v797 = vld [vmem:[%s3 + $0x1d4] sm:$0xff]
  %v798 = vld [vmem:[%s3 + $0x1dc] sm:$0xff]
  %v799 = vld [vmem:[%s3 + $0x1e4] sm:$0xff]
  %v800 = vld [vmem:[%s3 + $0x1ec] sm:$0xff]
  %v801 = vld [vmem:[%s3 + $0x1f4] sm:$0xf]
  %v802 = vld [vmem:[%s3 + $0x1f8] sm:$0xff]
  %v803 = vld [vmem:[%s3 + $0x200] sm:$0xff]
  %v804 = vld [vmem:[%s3 + $0x208] sm:$0xff]
  %v805 = vld [vmem:[%s3 + $0x210] sm:$0xff]
  %v806 = vld [vmem:[%s3 + $0x218] sm:$0xf]
  %v807 = vld [vmem:[%s3 + $0x21c] sm:$0xff]
  %v808 = vld [vmem:[%s3 + $0x224] sm:$0xff]
  %v809 = vld [vmem:[%s3 + $0x22c] sm:$0xff]
  %v810 = vld [vmem:[%s3 + $0x234] sm:$0xff]
  %v811 = vld [vmem:[%s3 + $0x23c] sm:$0xf]
  %v892 = vunpack.c.l.b16 %v732
  %v893 = vunpack.c.h.b16 %v732
  %v894 = vunpack.c.l.b16 %v733
  %v895 = vunpack.c.h.b16 %v733
  %v896 = vunpack.c.l.b16 %v734
  %v897 = vunpack.c.h.b16 %v734
  %v898 = vunpack.c.l.b16 %v735
  %v899 = vunpack.c.h.b16 %v735
  %v900 = vunpack.c.l.b16 %v736
  %v901 = vunpack.c.l.b16 %v737
  %v902 = vunpack.c.h.b16 %v737
  %v903 = vunpack.c.l.b16 %v738
  %v904 = vunpack.c.h.b16 %v738
  %v905 = vunpack.c.l.b16 %v739
  %v906 = vunpack.c.h.b16 %v739
  %v907 = vunpack.c.l.b16 %v740
  %v908 = vunpack.c.h.b16 %v740
  %v909 = vunpack.c.l.b16 %v741
  %v910 = vunpack.c.l.b16 %v742
  %v911 = vunpack.c.h.b16 %v742
  %v912 = vunpack.c.l.b16 %v743
  %v913 = vunpack.c.h.b16 %v743
  %v914 = vunpack.c.l.b16 %v744
  %v915 = vunpack.c.h.b16 %v744
  %v916 = vunpack.c.l.b16 %v745
  %v917 = vunpack.c.h.b16 %v745
  %v918 = vunpack.c.l.b16 %v746
  %v919 = vunpack.c.l.b16 %v747
  %v920 = vunpack.c.h.b16 %v747
  %v921 = vunpack.c.l.b16 %v748
  %v922 = vunpack.c.h.b16 %v748
  %v923 = vunpack.c.l.b16 %v749
  %v924 = vunpack.c.h.b16 %v749
  %v925 = vunpack.c.l.b16 %v750
  %v926 = vunpack.c.h.b16 %v750
  %v927 = vunpack.c.l.b16 %v751
  %v928 = vunpack.c.l.b16 %v752
  %v929 = vunpack.c.h.b16 %v752
  %v930 = vunpack.c.l.b16 %v753
  %v931 = vunpack.c.h.b16 %v753
  %v932 = vunpack.c.l.b16 %v754
  %v933 = vunpack.c.h.b16 %v754
  %v934 = vunpack.c.l.b16 %v755
  %v935 = vunpack.c.h.b16 %v755
  %v936 = vunpack.c.l.b16 %v756
  %v937 = vunpack.c.l.b16 %v757
  %v938 = vunpack.c.h.b16 %v757
  %v939 = vunpack.c.l.b16 %v758
  %v940 = vunpack.c.h.b16 %v758
  %v941 = vunpack.c.l.b16 %v759
  %v942 = vunpack.c.h.b16 %v759
  %v943 = vunpack.c.l.b16 %v760
  %v944 = vunpack.c.h.b16 %v760
  %v945 = vunpack.c.l.b16 %v761
  %v946 = vunpack.c.l.b16 %v762
  %v947 = vunpack.c.h.b16 %v762
  %v948 = vunpack.c.l.b16 %v763
  %v949 = vunpack.c.h.b16 %v763
  %v950 = vunpack.c.l.b16 %v764
  %v951 = vunpack.c.h.b16 %v764
  %v952 = vunpack.c.l.b16 %v765
  %v953 = vunpack.c.h.b16 %v765
  %v954 = vunpack.c.l.b16 %v766
  %v955 = vunpack.c.l.b16 %v767
  %v956 = vunpack.c.h.b16 %v767
  %v957 = vunpack.c.l.b16 %v768
  %v958 = vunpack.c.h.b16 %v768
  %v959 = vunpack.c.l.b16 %v769
  %v960 = vunpack.c.h.b16 %v769
  %v961 = vunpack.c.l.b16 %v770
  %v962 = vunpack.c.h.b16 %v770
  %v963 = vunpack.c.l.b16 %v771
  %v964 = vunpack.c.l.b16 %v772
  %v965 = vunpack.c.h.b16 %v772
  %v966 = vunpack.c.l.b16 %v773
  %v967 = vunpack.c.h.b16 %v773
  %v968 = vunpack.c.l.b16 %v774
  %v969 = vunpack.c.h.b16 %v774
  %v970 = vunpack.c.l.b16 %v775
  %v971 = vunpack.c.h.b16 %v775
  %v972 = vunpack.c.l.b16 %v776
  %v973 = vunpack.c.l.b16 %v777
  %v974 = vunpack.c.h.b16 %v777
  %v975 = vunpack.c.l.b16 %v778
  %v976 = vunpack.c.h.b16 %v778
  %v977 = vunpack.c.l.b16 %v779
  %v978 = vunpack.c.h.b16 %v779
  %v979 = vunpack.c.l.b16 %v780
  %v980 = vunpack.c.h.b16 %v780
  %v981 = vunpack.c.l.b16 %v781
  %v982 = vunpack.c.l.b16 %v782
  %v983 = vunpack.c.h.b16 %v782
  %v984 = vunpack.c.l.b16 %v783
  %v985 = vunpack.c.h.b16 %v783
  %v986 = vunpack.c.l.b16 %v784
  %v987 = vunpack.c.h.b16 %v784
  %v988 = vunpack.c.l.b16 %v785
  %v989 = vunpack.c.h.b16 %v785
  %v990 = vunpack.c.l.b16 %v786
  %v991 = vunpack.c.l.b16 %v787
  %v992 = vunpack.c.h.b16 %v787
  %v993 = vunpack.c.l.b16 %v788
  %v994 = vunpack.c.h.b16 %v788
  %v995 = vunpack.c.l.b16 %v789
  %v996 = vunpack.c.h.b16 %v789
  %v997 = vunpack.c.l.b16 %v790
  %v998 = vunpack.c.h.b16 %v790
  %v999 = vunpack.c.l.b16 %v791
  %v1000 = vunpack.c.l.b16 %v792
  %v1001 = vunpack.c.h.b16 %v792
  %v1002 = vunpack.c.l.b16 %v793
  %v1003 = vunpack.c.h.b16 %v793
  %v1004 = vunpack.c.l.b16 %v794
  %v1005 = vunpack.c.h.b16 %v794
  %v1006 = vunpack.c.l.b16 %v795
  %v1007 = vunpack.c.h.b16 %v795
  %v1008 = vunpack.c.l.b16 %v796
  %v1009 = vunpack.c.l.b16 %v797
  %v1010 = vunpack.c.h.b16 %v797
  %v1011 = vunpack.c.l.b16 %v798
  %v1012 = vunpack.c.h.b16 %v798
  %v1013 = vunpack.c.l.b16 %v799
  %v1014 = vunpack.c.h.b16 %v799
  %v1015 = vunpack.c.l.b16 %v800
  %v1016 = vunpack.c.h.b16 %v800
  %v1017 = vunpack.c.l.b16 %v801
  %v1018 = vunpack.c.l.b16 %v802
  %v1019 = vunpack.c.h.b16 %v802
  %v1020 = vunpack.c.l.b16 %v803
  %v1021 = vunpack.c.h.b16 %v803
  %v1022 = vunpack.c.l.b16 %v804
  %v1023 = vunpack.c.h.b16 %v804
  %v1024 = vunpack.c.l.b16 %v805
  %v1025 = vunpack.c.h.b16 %v805
  %v1026 = vunpack.c.l.b16 %v806
  %v1027 = vunpack.c.l.b16 %v807
  %v1028 = vunpack.c.h.b16 %v807
  %v1029 = vunpack.c.l.b16 %v808
  %v1030 = vunpack.c.h.b16 %v808
  %v1031 = vunpack.c.l.b16 %v809
  %v1032 = vunpack.c.h.b16 %v809
  %v1033 = vunpack.c.l.b16 %v810
  %v1034 = vunpack.c.h.b16 %v810
  %v1035 = vunpack.c.l.b16 %v811
  %v1036 = vpack.c.b16 %v901, %v892
  %v1037 = vpack.c.b16 %v902, %v893
  %v1038 = vpack.c.b16 %v903, %v894
  %v1039 = vpack.c.b16 %v904, %v895
  %v1040 = vpack.c.b16 %v905, %v896
  %v1041 = vpack.c.b16 %v906, %v897
  %v1042 = vpack.c.b16 %v907, %v898
  %v1043 = vpack.c.b16 %v908, %v899
  %v1044 = vpack.c.b16 %v909, %v900
  %v1045 = vpack.c.b16 %v919, %v910
  %v1046 = vpack.c.b16 %v920, %v911
  %v1047 = vpack.c.b16 %v921, %v912
  %v1048 = vpack.c.b16 %v922, %v913
  %v1049 = vpack.c.b16 %v923, %v914
  %v1050 = vpack.c.b16 %v924, %v915
  %v1051 = vpack.c.b16 %v925, %v916
  %v1052 = vpack.c.b16 %v926, %v917
  %v1053 = vpack.c.b16 %v927, %v918
  %v1054 = vpack.c.b16 %v937, %v928
  %v1055 = vpack.c.b16 %v938, %v929
  %v1056 = vpack.c.b16 %v939, %v930
  %v1057 = vpack.c.b16 %v940, %v931
  %v1058 = vpack.c.b16 %v941, %v932
  %v1059 = vpack.c.b16 %v942, %v933
  %v1060 = vpack.c.b16 %v943, %v934
  %v1061 = vpack.c.b16 %v944, %v935
  %v1062 = vpack.c.b16 %v945, %v936
  %v1063 = vpack.c.b16 %v955, %v946
  %v1064 = vpack.c.b16 %v956, %v947
  %v1065 = vpack.c.b16 %v957, %v948
  %v1066 = vpack.c.b16 %v958, %v949
  %v1067 = vpack.c.b16 %v959, %v950
  %v1068 = vpack.c.b16 %v960, %v951
  %v1069 = vpack.c.b16 %v961, %v952
  %v1070 = vpack.c.b16 %v962, %v953
  %v1071 = vpack.c.b16 %v963, %v954
  %v1072 = vpack.c.b16 %v973, %v964
  %v1073 = vpack.c.b16 %v974, %v965
  %v1074 = vpack.c.b16 %v975, %v966
  %v1075 = vpack.c.b16 %v976, %v967
  %v1076 = vpack.c.b16 %v977, %v968
  %v1077 = vpack.c.b16 %v978, %v969
  %v1078 = vpack.c.b16 %v979, %v970
  %v1079 = vpack.c.b16 %v980, %v971
  %v1080 = vpack.c.b16 %v981, %v972
  %v1081 = vpack.c.b16 %v991, %v982
  %v1082 = vpack.c.b16 %v992, %v983
  %v1083 = vpack.c.b16 %v993, %v984
  %v1084 = vpack.c.b16 %v994, %v985
  %v1085 = vpack.c.b16 %v995, %v986
  %v1086 = vpack.c.b16 %v996, %v987
  %v1087 = vpack.c.b16 %v997, %v988
  %v1088 = vpack.c.b16 %v998, %v989
  %v1089 = vpack.c.b16 %v999, %v990
  %v1090 = vpack.c.b16 %v1009, %v1000
  %v1091 = vpack.c.b16 %v1010, %v1001
  %v1092 = vpack.c.b16 %v1011, %v1002
  %v1093 = vpack.c.b16 %v1012, %v1003
  %v1094 = vpack.c.b16 %v1013, %v1004
  %v1095 = vpack.c.b16 %v1014, %v1005
  %v1096 = vpack.c.b16 %v1015, %v1006
  %v1097 = vpack.c.b16 %v1016, %v1007
  %v1098 = vpack.c.b16 %v1017, %v1008
  %v1099 = vpack.c.b16 %v1027, %v1018
  %v1100 = vpack.c.b16 %v1028, %v1019
  %v1101 = vpack.c.b16 %v1029, %v1020
  %v1102 = vpack.c.b16 %v1030, %v1021
  %v1103 = vpack.c.b16 %v1031, %v1022
  %v1104 = vpack.c.b16 %v1032, %v1023
  %v1105 = vpack.c.b16 %v1033, %v1024
  %v1106 = vpack.c.b16 %v1034, %v1025
  %v1107 = vpack.c.b16 %v1035, %v1026
  %1180 = vmatpush.bf16.msra.mxu0 %v1099
  %1181 = vmatpush.bf16.msra.mxu0 %v1090
  %1182 = vmatpush.bf16.msra.mxu0 %v1081
  %1183 = vmatpush.bf16.msra.mxu0 %v1072
  %1184 = vmatpush.bf16.msra.mxu0 %v1063
  %1185 = vmatpush.bf16.msra.mxu0 %v1054
  %1186 = vmatpush.bf16.msra.mxu0 %v1045
  %1187 = vmatpush.bf16.msra.mxu0 %v1036
  %1188 = vmatmul.bf16.gmra.mxu0 %v731
  %v1189 = vpop.f32.mrf.mxu0
  %v1190 = vadd.f32 0.0, %v1189
  %v1191 = vpop.f32.mrf.mxu0
  %1192 = vdwg.mxu0
  %1193 = vmatpush.bf16.msra.mxu0 %v1100
  %1194 = vmatpush.bf16.msra.mxu0 %v1091
  %1195 = vmatpush.bf16.msra.mxu0 %v1082
  %1196 = vmatpush.bf16.msra.mxu0 %v1073
  %1197 = vmatpush.bf16.msra.mxu0 %v1064
  %1198 = vmatpush.bf16.msra.mxu0 %v1055
  %1199 = vmatpush.bf16.msra.mxu0 %v1046
  %1200 = vmatpush.bf16.msra.mxu0 %v1037
  %1201 = vmatmul.bf16.gmra.mxu0 %v731
  %v1202 = vpop.f32.mrf.mxu0
  %v1203 = vadd.f32 0.0, %v1202
  %v1204 = vpop.f32.mrf.mxu0
  %1205 = vdwg.mxu0
  %1206 = vmatpush.bf16.msra.mxu0 %v1101
  %1207 = vmatpush.bf16.msra.mxu0 %v1092
  %1208 = vmatpush.bf16.msra.mxu0 %v1083
  %1209 = vmatpush.bf16.msra.mxu0 %v1074
  %1210 = vmatpush.bf16.msra.mxu0 %v1065
  %1211 = vmatpush.bf16.msra.mxu0 %v1056
  %1212 = vmatpush.bf16.msra.mxu0 %v1047
  %1213 = vmatpush.bf16.msra.mxu0 %v1038
  %1214 = vmatmul.bf16.gmra.mxu0 %v731
  %v1215 = vpop.f32.mrf.mxu0
  %v1216 = vadd.f32 0.0, %v1215
  %v1217 = vpop.f32.mrf.mxu0
  %1218 = vdwg.mxu0
  %1219 = vmatpush.bf16.msra.mxu0 %v1102
  %1220 = vmatpush.bf16.msra.mxu0 %v1093
  %1221 = vmatpush.bf16.msra.mxu0 %v1084
  %1222 = vmatpush.bf16.msra.mxu0 %v1075
  %1223 = vmatpush.bf16.msra.mxu0 %v1066
  %1224 = vmatpush.bf16.msra.mxu0 %v1057
  %1225 = vmatpush.bf16.msra.mxu0 %v1048
  %1226 = vmatpush.bf16.msra.mxu0 %v1039
  %1227 = vmatmul.bf16.gmra.mxu0 %v731
  %v1228 = vpop.f32.mrf.mxu0
  %v1229 = vadd.f32 0.0, %v1228
  %v1230 = vpop.f32.mrf.mxu0
  %1231 = vdwg.mxu0
  %1232 = vmatpush.bf16.msra.mxu0 %v1103
  %1233 = vmatpush.bf16.msra.mxu0 %v1094
  %1234 = vmatpush.bf16.msra.mxu0 %v1085
  %1235 = vmatpush.bf16.msra.mxu0 %v1076
  %1236 = vmatpush.bf16.msra.mxu0 %v1067
  %1237 = vmatpush.bf16.msra.mxu0 %v1058
  %1238 = vmatpush.bf16.msra.mxu0 %v1049
  %1239 = vmatpush.bf16.msra.mxu0 %v1040
  %1240 = vmatmul.bf16.gmra.mxu0 %v731
  %v1241 = vpop.f32.mrf.mxu0
  %v1242 = vadd.f32 0.0, %v1241
  %v1243 = vpop.f32.mrf.mxu0
  %1244 = vdwg.mxu0
  %1245 = vmatpush.bf16.msra.mxu0 %v1104
  %1246 = vmatpush.bf16.msra.mxu0 %v1095
  %1247 = vmatpush.bf16.msra.mxu0 %v1086
  %1248 = vmatpush.bf16.msra.mxu0 %v1077
  %1249 = vmatpush.bf16.msra.mxu0 %v1068
  %1250 = vmatpush.bf16.msra.mxu0 %v1059
  %1251 = vmatpush.bf16.msra.mxu0 %v1050
  %1252 = vmatpush.bf16.msra.mxu0 %v1041
  %1253 = vmatmul.bf16.gmra.mxu0 %v731
  %v1254 = vpop.f32.mrf.mxu0
  %v1255 = vadd.f32 0.0, %v1254
  %v1256 = vpop.f32.mrf.mxu0
  %1257 = vdwg.mxu0
  %1258 = vmatpush.bf16.msra.mxu0 %v1105
  %1259 = vmatpush.bf16.msra.mxu0 %v1096
  %1260 = vmatpush.bf16.msra.mxu0 %v1087
  %1261 = vmatpush.bf16.msra.mxu0 %v1078
  %1262 = vmatpush.bf16.msra.mxu0 %v1069
  %1263 = vmatpush.bf16.msra.mxu0 %v1060
  %1264 = vmatpush.bf16.msra.mxu0 %v1051
  %1265 = vmatpush.bf16.msra.mxu0 %v1042
  %1266 = vmatmul.bf16.gmra.mxu0 %v731
  %v1267 = vpop.f32.mrf.mxu0
  %v1268 = vadd.f32 0.0, %v1267
  %v1269 = vpop.f32.mrf.mxu0
  %1270 = vdwg.mxu0
  %1271 = vmatpush.bf16.msra.mxu0 %v1106
  %1272 = vmatpush.bf16.msra.mxu0 %v1097
  %1273 = vmatpush.bf16.msra.mxu0 %v1088
  %1274 = vmatpush.bf16.msra.mxu0 %v1079
  %1275 = vmatpush.bf16.msra.mxu0 %v1070
  %1276 = vmatpush.bf16.msra.mxu0 %v1061
  %1277 = vmatpush.bf16.msra.mxu0 %v1052
  %1278 = vmatpush.bf16.msra.mxu0 %v1043
  %1279 = vmatmul.bf16.gmra.mxu0 %v731
  %v1280 = vpop.f32.mrf.mxu0
  %v1281 = vadd.f32 0.0, %v1280
  %v1282 = vpop.f32.mrf.mxu0
  %1283 = vdwg.mxu0
  %1284 = vmatpush.bf16.msra.mxu0 %v1107
  %1285 = vmatpush.bf16.msra.mxu0 %v1098
  %1286 = vmatpush.bf16.msra.mxu0 %v1089
  %1287 = vmatpush.bf16.msra.mxu0 %v1080
  %1288 = vmatpush.bf16.msra.mxu0 %v1071
  %1289 = vmatpush.bf16.msra.mxu0 %v1062
  %1290 = vmatpush.bf16.msra.mxu0 %v1053
  %1291 = vmatpush.bf16.msra.mxu0 %v1044
  %1292 = vmatmul.bf16.gmra.mxu0 %v731
  %v1293 = vpop.f32.mrf.mxu0
  %v1294 = vadd.f32 0.0, %v1293
  %v1295 = vpop.f32.mrf.mxu0
  %1296 = vdwg.mxu0
  %1297 = vst [vmem:[#allocation2] sm:$0x3] %v1190
  %1298 = vst [vmem:[#allocation2 + $0x2] sm:$0x3] %v1203
  %1299 = vst [vmem:[#allocation2 + $0x4] sm:$0x3] %v1216
  %1300 = vst [vmem:[#allocation2 + $0x6] sm:$0x3] %v1229
  %1301 = vst [vmem:[#allocation2 + $0x8] sm:$0x3] %v1242
  %1302 = vst [vmem:[#allocation2 + $0xa] sm:$0x3] %v1255
  %1303 = vst [vmem:[#allocation2 + $0xc] sm:$0x3] %v1268
  %1304 = vst [vmem:[#allocation2 + $0xe] sm:$0x3] %v1281
  %1305 = vst [vmem:[#allocation2 + $0x10] sm:$0x3] %v1294
  %s1306 = scalar_lea.vmem %s0, 192
  %v1307 = vld [vmem:[%s1306] sm:$0xff]
  %v1308 = vld [vmem:[%s1306 + $0x8] sm:$0xff]
  %v1309 = vld [vmem:[%s1306 + $0x10] sm:$0xff]
  %v1310 = vld [vmem:[%s1306 + $0x18] sm:$0xff]
  %v1311 = vld [vmem:[%s4] sm:$0xf]
  %v1312 = vld [vmem:[%s4 + $0x4] sm:$0xf]
  %v1313 = vld [vmem:[%s4 + $0x8] sm:$0xf]
  %v1314 = vld [vmem:[%s4 + $0xc] sm:$0xf]
  %v1315 = vld [vmem:[#allocation2] sm:$0xff]
  %v1316 = vld [vmem:[#allocation2 + $0x8] sm:$0xff]
  %v1317 = vld [vmem:[#allocation2 + $0x10] sm:$0x3]
  %v1318 = vpack.c.bf16 %v1316, %v1315
  %v1319 = vpack.c.bf16 %v1317, %v1317
  %v1324 = vunpack.c.l.b16 %v1311
  %v1325 = vunpack.c.l.b16 %v1312
  %v1326 = vunpack.c.l.b16 %v1313
  %v1327 = vunpack.c.l.b16 %v1314
  %v1328 = vpack.c.b16 %v1325, %v1324
  %v1329 = vpack.c.b16 %v1327, %v1326
  %v1331 = vsel %vm627, %v1328, 0
  %v1334 = vsel %vm627, %v1329, 0
  %v1337 = vsel %vm634, %v1319, 0
  %1339 = vmatpush.bf16.msra.mxu0 0
  %1340 = vmatpush.bf16.msra.mxu0 0
  %1341 = vmatpush.bf16.msra.mxu0 0
  %1342 = vmatpush.bf16.msra.mxu0 0
  %1343 = vmatpush.bf16.msra.mxu0 0
  %1344 = vmatpush.bf16.msra.mxu0 0
  %1345 = vmatpush.bf16.msra.mxu0 %v1337
  %1346 = vmatpush.bf16.msra.mxu0 %v1318
  %1347 = vmatmul.bf16.gmra.mxu0 %v1331
  %v1348 = vpop.f32.mrf.mxu0
  %v1349 = vadd.f32 0.0, %v1348
  %v1350 = vpop.f32.mrf.mxu0
  %v1351 = vadd.f32 0.0, %v1350
  %1352 = vmatmul.bf16.gmra.mxu0 %v1334
  %v1353 = vpop.f32.mrf.mxu0
  %v1354 = vadd.f32 0.0, %v1353
  %v1355 = vpop.f32.mrf.mxu0
  %v1356 = vadd.f32 0.0, %v1355
  %1357 = vdwg.mxu0
  %v1358 = vadd.f32 %v1307, %v1349
  %v1359 = vadd.f32 %v1308, %v1351
  %v1360 = vadd.f32 %v1309, %v1354
  %v1361 = vadd.f32 %v1310, %v1356
  %v1362 = vmul.f32 %v1358, %v1358
  %v1363 = vmul.f32 %v1359, %v1359
  %v1364 = vmul.f32 %v1360, %v1360
  %v1365 = vmul.f32 %v1361, %v1361
  %v1366 = vmul.f32 %v1358, %v1362
  %v1367 = vmul.f32 %v1359, %v1363
  %v1368 = vmul.f32 %v1360, %v1364
  %v1369 = vmul.f32 %v1361, %v1365
  %v1370 = vmul.f32 %v1366, 0.044715
  %v1371 = vmul.f32 %v1367, 0.044715
  %v1372 = vmul.f32 %v1368, 0.044715
  %v1373 = vmul.f32 %v1369, 0.044715
  %v1374 = vadd.f32 %v1358, %v1370
  %v1375 = vadd.f32 %v1359, %v1371
  %v1376 = vadd.f32 %v1360, %v1372
  %v1377 = vadd.f32 %v1361, %v1373
  %v1378 = vmul.f32 %v1374, 0.7978846
  %v1379 = vmul.f32 %v1375, 0.7978846
  %v1380 = vmul.f32 %v1376, 0.7978846
  %v1381 = vmul.f32 %v1377, 0.7978846
  %v1382 = vtanh.pop %v1378
  %v1383 = vtanh.pop %v1379
  %v1384 = vtanh.pop %v1380
  %v1385 = vtanh.pop %v1381
  %v1386 = vadd.f32 %v1382, 1.0
  %v1387 = vadd.f32 %v1383, 1.0
  %v1388 = vadd.f32 %v1384, 1.0
  %v1389 = vadd.f32 %v1385, 1.0
  %v1390 = vmul.f32 %v1386, 0.5
  %v1391 = vmul.f32 %v1387, 0.5
  %v1392 = vmul.f32 %v1388, 0.5
  %v1393 = vmul.f32 %v1389, 0.5
  %v1394 = vmul.f32 %v1358, %v1390
  %v1395 = vmul.f32 %v1359, %v1391
  %v1396 = vmul.f32 %v1360, %v1392
  %v1397 = vmul.f32 %v1361, %v1393
  %v1398 = vld [vmem:[%s5] sm:$0x1]
  %v1399 = vpack.c.bf16 %v1395, %v1394
  %v1400 = vpack.c.bf16 %v1397, %v1396
  %v1401 = vld [vmem:[%s6] sm:$0x3]
  %1403 = vset.pattern.permute.xlu0 0
  %1404 = vperm.xlu0 %1403, %v1401
  %v1405 = vpop.permute.xlu0 %1404
  %v1408 = vsel %vm706, %v1398, 0
  %1410 = vmatpush.bf16.msra.mxu0 0
  %1411 = vmatpush.bf16.msra.mxu0 0
  %1412 = vmatpush.bf16.msra.mxu0 0
  %1413 = vmatpush.bf16.msra.mxu0 0
  %1414 = vmatpush.bf16.msra.mxu0 0
  %1415 = vmatpush.bf16.msra.mxu0 0
  %1416 = vmatpush.bf16.msra.mxu0 %v1400
  %1417 = vmatpush.bf16.msra.mxu0 %v1399
  %1418 = vmatmul.bf16.gmra.mxu0 %v1408
  %v1419 = vpop.f32.mrf.mxu0
  %v1420 = vadd.f32 %v1405, %v1419
  %v1421 = vpop.f32.mrf.mxu0
  %1422 = vdwg.mxu0
  %v1423 = vmax.f32 %v1420, -1.0
  %v1424 = vmin.f32 %v1423, 1.0
  %v1425 = vmul.f32 %v1424, 0.29212403
  %v1426 = vmul.f32 %v730, 0.4530898
  %v1427 = vadd.f32 %v1425, %v1426
  %s1428 = scalar_lea.vmem %s2, 10
  %v1429 = vld [vmem:[%s1428] sm:$0x3]
  %v1430 = vadd.f32 %v1427, %v1429
  %v1431 = vpack.c.bf16 %v1430, %v1430
  %v1432 = vld [vmem:[%s3] sm:$0xff]
  %v1433 = vld [vmem:[%s3 + $0x8] sm:$0xff]
  %v1434 = vld [vmem:[%s3 + $0x10] sm:$0xff]
  %v1435 = vld [vmem:[%s3 + $0x18] sm:$0xff]
  %v1436 = vld [vmem:[%s3 + $0x20] sm:$0xf]
  %v1437 = vld [vmem:[%s3 + $0x24] sm:$0xff]
  %v1438 = vld [vmem:[%s3 + $0x2c] sm:$0xff]
  %v1439 = vld [vmem:[%s3 + $0x34] sm:$0xff]
  %v1440 = vld [vmem:[%s3 + $0x3c] sm:$0xff]
  %v1441 = vld [vmem:[%s3 + $0x44] sm:$0xf]
  %v1442 = vld [vmem:[%s3 + $0x48] sm:$0xff]
  %v1443 = vld [vmem:[%s3 + $0x50] sm:$0xff]
  %v1444 = vld [vmem:[%s3 + $0x58] sm:$0xff]
  %v1445 = vld [vmem:[%s3 + $0x60] sm:$0xff]
  %v1446 = vld [vmem:[%s3 + $0x68] sm:$0xf]
  %v1447 = vld [vmem:[%s3 + $0x6c] sm:$0xff]
  %v1448 = vld [vmem:[%s3 + $0x74] sm:$0xff]
  %v1449 = vld [vmem:[%s3 + $0x7c] sm:$0xff]
  %v1450 = vld [vmem:[%s3 + $0x84] sm:$0xff]
  %v1451 = vld [vmem:[%s3 + $0x8c] sm:$0xf]
  %v1452 = vld [vmem:[%s3 + $0x90] sm:$0xff]
  %v1453 = vld [vmem:[%s3 + $0x98] sm:$0xff]
  %v1454 = vld [vmem:[%s3 + $0xa0] sm:$0xff]
  %v1455 = vld [vmem:[%s3 + $0xa8] sm:$0xff]
  %v1456 = vld [vmem:[%s3 + $0xb0] sm:$0xf]
  %v1457 = vld [vmem:[%s3 + $0xb4] sm:$0xff]
  %v1458 = vld [vmem:[%s3 + $0xbc] sm:$0xff]
  %v1459 = vld [vmem:[%s3 + $0xc4] sm:$0xff]
  %v1460 = vld [vmem:[%s3 + $0xcc] sm:$0xff]
  %v1461 = vld [vmem:[%s3 + $0xd4] sm:$0xf]
  %v1462 = vld [vmem:[%s3 + $0xd8] sm:$0xff]
  %v1463 = vld [vmem:[%s3 + $0xe0] sm:$0xff]
  %v1464 = vld [vmem:[%s3 + $0xe8] sm:$0xff]
  %v1465 = vld [vmem:[%s3 + $0xf0] sm:$0xff]
  %v1466 = vld [vmem:[%s3 + $0xf8] sm:$0xf]
  %v1467 = vld [vmem:[%s3 + $0xfc] sm:$0xff]
  %v1468 = vld [vmem:[%s3 + $0x104] sm:$0xff]
  %v1469 = vld [vmem:[%s3 + $0x10c] sm:$0xff]
  %v1470 = vld [vmem:[%s3 + $0x114] sm:$0xff]
  %v1471 = vld [vmem:[%s3 + $0x11c] sm:$0xf]
  %v1472 = vld [vmem:[%s3 + $0x120] sm:$0xff]
  %v1473 = vld [vmem:[%s3 + $0x128] sm:$0xff]
  %v1474 = vld [vmem:[%s3 + $0x130] sm:$0xff]
  %v1475 = vld [vmem:[%s3 + $0x138] sm:$0xff]
  %v1476 = vld [vmem:[%s3 + $0x140] sm:$0xf]
  %v1477 = vld [vmem:[%s3 + $0x144] sm:$0xff]
  %v1478 = vld [vmem:[%s3 + $0x14c] sm:$0xff]
  %v1479 = vld [vmem:[%s3 + $0x154] sm:$0xff]
  %v1480 = vld [vmem:[%s3 + $0x15c] sm:$0xff]
  %v1481 = vld [vmem:[%s3 + $0x164] sm:$0xf]
  %v1482 = vld [vmem:[%s3 + $0x168] sm:$0xff]
  %v1483 = vld [vmem:[%s3 + $0x170] sm:$0xff]
  %v1484 = vld [vmem:[%s3 + $0x178] sm:$0xff]
  %v1485 = vld [vmem:[%s3 + $0x180] sm:$0xff]
  %v1486 = vld [vmem:[%s3 + $0x188] sm:$0xf]
  %v1487 = vld [vmem:[%s3 + $0x18c] sm:$0xff]
  %v1488 = vld [vmem:[%s3 + $0x194] sm:$0xff]
  %v1489 = vld [vmem:[%s3 + $0x19c] sm:$0xff]
  %v1490 = vld [vmem:[%s3 + $0x1a4] sm:$0xff]
  %v1491 = vld [vmem:[%s3 + $0x1ac] sm:$0xf]
  %v1492 = vld [vmem:[%s3 + $0x1b0] sm:$0xff]
  %v1493 = vld [vmem:[%s3 + $0x1b8] sm:$0xff]
  %v1494 = vld [vmem:[%s3 + $0x1c0] sm:$0xff]
  %v1495 = vld [vmem:[%s3 + $0x1c8] sm:$0xff]
  %v1496 = vld [vmem:[%s3 + $0x1d0] sm:$0xf]
  %v1497 = vld [vmem:[%s3 + $0x1d4] sm:$0xff]
  %v1498 = vld [vmem:[%s3 + $0x1dc] sm:$0xff]
  %v1499 = vld [vmem:[%s3 + $0x1e4] sm:$0xff]
  %v1500 = vld [vmem:[%s3 + $0x1ec] sm:$0xff]
  %v1501 = vld [vmem:[%s3 + $0x1f4] sm:$0xf]
  %v1502 = vld [vmem:[%s3 + $0x1f8] sm:$0xff]
  %v1503 = vld [vmem:[%s3 + $0x200] sm:$0xff]
  %v1504 = vld [vmem:[%s3 + $0x208] sm:$0xff]
  %v1505 = vld [vmem:[%s3 + $0x210] sm:$0xff]
  %v1506 = vld [vmem:[%s3 + $0x218] sm:$0xf]
  %v1507 = vld [vmem:[%s3 + $0x21c] sm:$0xff]
  %v1508 = vld [vmem:[%s3 + $0x224] sm:$0xff]
  %v1509 = vld [vmem:[%s3 + $0x22c] sm:$0xff]
  %v1510 = vld [vmem:[%s3 + $0x234] sm:$0xff]
  %v1511 = vld [vmem:[%s3 + $0x23c] sm:$0xf]
  %v1592 = vunpack.c.l.b16 %v1432
  %v1593 = vunpack.c.h.b16 %v1432
  %v1594 = vunpack.c.l.b16 %v1433
  %v1595 = vunpack.c.h.b16 %v1433
  %v1596 = vunpack.c.l.b16 %v1434
  %v1597 = vunpack.c.h.b16 %v1434
  %v1598 = vunpack.c.l.b16 %v1435
  %v1599 = vunpack.c.h.b16 %v1435
  %v1600 = vunpack.c.l.b16 %v1436
  %v1601 = vunpack.c.l.b16 %v1437
  %v1602 = vunpack.c.h.b16 %v1437
  %v1603 = vunpack.c.l.b16 %v1438
  %v1604 = vunpack.c.h.b16 %v1438
  %v1605 = vunpack.c.l.b16 %v1439
  %v1606 = vunpack.c.h.b16 %v1439
  %v1607 = vunpack.c.l.b16 %v1440
  %v1608 = vunpack.c.h.b16 %v1440
  %v1609 = vunpack.c.l.b16 %v1441
  %v1610 = vunpack.c.l.b16 %v1442
  %v1611 = vunpack.c.h.b16 %v1442
  %v1612 = vunpack.c.l.b16 %v1443
  %v1613 = vunpack.c.h.b16 %v1443
  %v1614 = vunpack.c.l.b16 %v1444
  %v1615 = vunpack.c.h.b16 %v1444
  %v1616 = vunpack.c.l.b16 %v1445
  %v1617 = vunpack.c.h.b16 %v1445
  %v1618 = vunpack.c.l.b16 %v1446
  %v1619 = vunpack.c.l.b16 %v1447
  %v1620 = vunpack.c.h.b16 %v1447
  %v1621 = vunpack.c.l.b16 %v1448
  %v1622 = vunpack.c.h.b16 %v1448
  %v1623 = vunpack.c.l.b16 %v1449
  %v1624 = vunpack.c.h.b16 %v1449
  %v1625 = vunpack.c.l.b16 %v1450
  %v1626 = vunpack.c.h.b16 %v1450
  %v1627 = vunpack.c.l.b16 %v1451
  %v1628 = vunpack.c.l.b16 %v1452
  %v1629 = vunpack.c.h.b16 %v1452
  %v1630 = vunpack.c.l.b16 %v1453
  %v1631 = vunpack.c.h.b16 %v1453
  %v1632 = vunpack.c.l.b16 %v1454
  %v1633 = vunpack.c.h.b16 %v1454
  %v1634 = vunpack.c.l.b16 %v1455
  %v1635 = vunpack.c.h.b16 %v1455
  %v1636 = vunpack.c.l.b16 %v1456
  %v1637 = vunpack.c.l.b16 %v1457
  %v1638 = vunpack.c.h.b16 %v1457
  %v1639 = vunpack.c.l.b16 %v1458
  %v1640 = vunpack.c.h.b16 %v1458
  %v1641 = vunpack.c.l.b16 %v1459
  %v1642 = vunpack.c.h.b16 %v1459
  %v1643 = vunpack.c.l.b16 %v1460
  %v1644 = vunpack.c.h.b16 %v1460
  %v1645 = vunpack.c.l.b16 %v1461
  %v1646 = vunpack.c.l.b16 %v1462
  %v1647 = vunpack.c.h.b16 %v1462
  %v1648 = vunpack.c.l.b16 %v1463
  %v1649 = vunpack.c.h.b16 %v1463
  %v1650 = vunpack.c.l.b16 %v1464
  %v1651 = vunpack.c.h.b16 %v1464
  %v1652 = vunpack.c.l.b16 %v1465
  %v1653 = vunpack.c.h.b16 %v1465
  %v1654 = vunpack.c.l.b16 %v1466
  %v1655 = vunpack.c.l.b16 %v1467
  %v1656 = vunpack.c.h.b16 %v1467
  %v1657 = vunpack.c.l.b16 %v1468
  %v1658 = vunpack.c.h.b16 %v1468
  %v1659 = vunpack.c.l.b16 %v1469
  %v1660 = vunpack.c.h.b16 %v1469
  %v1661 = vunpack.c.l.b16 %v1470
  %v1662 = vunpack.c.h.b16 %v1470
  %v1663 = vunpack.c.l.b16 %v1471
  %v1664 = vunpack.c.l.b16 %v1472
  %v1665 = vunpack.c.h.b16 %v1472
  %v1666 = vunpack.c.l.b16 %v1473
  %v1667 = vunpack.c.h.b16 %v1473
  %v1668 = vunpack.c.l.b16 %v1474
  %v1669 = vunpack.c.h.b16 %v1474
  %v1670 = vunpack.c.l.b16 %v1475
  %v1671 = vunpack.c.h.b16 %v1475
  %v1672 = vunpack.c.l.b16 %v1476
  %v1673 = vunpack.c.l.b16 %v1477
  %v1674 = vunpack.c.h.b16 %v1477
  %v1675 = vunpack.c.l.b16 %v1478
  %v1676 = vunpack.c.h.b16 %v1478
  %v1677 = vunpack.c.l.b16 %v1479
  %v1678 = vunpack.c.h.b16 %v1479
  %v1679 = vunpack.c.l.b16 %v1480
  %v1680 = vunpack.c.h.b16 %v1480
  %v1681 = vunpack.c.l.b16 %v1481
  %v1682 = vunpack.c.l.b16 %v1482
  %v1683 = vunpack.c.h.b16 %v1482
  %v1684 = vunpack.c.l.b16 %v1483
  %v1685 = vunpack.c.h.b16 %v1483
  %v1686 = vunpack.c.l.b16 %v1484
  %v1687 = vunpack.c.h.b16 %v1484
  %v1688 = vunpack.c.l.b16 %v1485
  %v1689 = vunpack.c.h.b16 %v1485
  %v1690 = vunpack.c.l.b16 %v1486
  %v1691 = vunpack.c.l.b16 %v1487
  %v1692 = vunpack.c.h.b16 %v1487
  %v1693 = vunpack.c.l.b16 %v1488
  %v1694 = vunpack.c.h.b16 %v1488
  %v1695 = vunpack.c.l.b16 %v1489
  %v1696 = vunpack.c.h.b16 %v1489
  %v1697 = vunpack.c.l.b16 %v1490
  %v1698 = vunpack.c.h.b16 %v1490
  %v1699 = vunpack.c.l.b16 %v1491
  %v1700 = vunpack.c.l.b16 %v1492
  %v1701 = vunpack.c.h.b16 %v1492
  %v1702 = vunpack.c.l.b16 %v1493
  %v1703 = vunpack.c.h.b16 %v1493
  %v1704 = vunpack.c.l.b16 %v1494
  %v1705 = vunpack.c.h.b16 %v1494
  %v1706 = vunpack.c.l.b16 %v1495
  %v1707 = vunpack.c.h.b16 %v1495
  %v1708 = vunpack.c.l.b16 %v1496
  %v1709 = vunpack.c.l.b16 %v1497
  %v1710 = vunpack.c.h.b16 %v1497
  %v1711 = vunpack.c.l.b16 %v1498
  %v1712 = vunpack.c.h.b16 %v1498
  %v1713 = vunpack.c.l.b16 %v1499
  %v1714 = vunpack.c.h.b16 %v1499
  %v1715 = vunpack.c.l.b16 %v1500
  %v1716 = vunpack.c.h.b16 %v1500
  %v1717 = vunpack.c.l.b16 %v1501
  %v1718 = vunpack.c.l.b16 %v1502
  %v1719 = vunpack.c.h.b16 %v1502
  %v1720 = vunpack.c.l.b16 %v1503
  %v1721 = vunpack.c.h.b16 %v1503
  %v1722 = vunpack.c.l.b16 %v1504
  %v1723 = vunpack.c.h.b16 %v1504
  %v1724 = vunpack.c.l.b16 %v1505
  %v1725 = vunpack.c.h.b16 %v1505
  %v1726 = vunpack.c.l.b16 %v1506
  %v1727 = vunpack.c.l.b16 %v1507
  %v1728 = vunpack.c.h.b16 %v1507
  %v1729 = vunpack.c.l.b16 %v1508
  %v1730 = vunpack.c.h.b16 %v1508
  %v1731 = vunpack.c.l.b16 %v1509
  %v1732 = vunpack.c.h.b16 %v1509
  %v1733 = vunpack.c.l.b16 %v1510
  %v1734 = vunpack.c.h.b16 %v1510
  %v1735 = vunpack.c.l.b16 %v1511
  %v1736 = vpack.c.b16 %v1601, %v1592
  %v1737 = vpack.c.b16 %v1602, %v1593
  %v1738 = vpack.c.b16 %v1603, %v1594
  %v1739 = vpack.c.b16 %v1604, %v1595
  %v1740 = vpack.c.b16 %v1605, %v1596
  %v1741 = vpack.c.b16 %v1606, %v1597
  %v1742 = vpack.c.b16 %v1607, %v1598
  %v1743 = vpack.c.b16 %v1608, %v1599
  %v1744 = vpack.c.b16 %v1609, %v1600
  %v1745 = vpack.c.b16 %v1619, %v1610
  %v1746 = vpack.c.b16 %v1620, %v1611
  %v1747 = vpack.c.b16 %v1621, %v1612
  %v1748 = vpack.c.b16 %v1622, %v1613
  %v1749 = vpack.c.b16 %v1623, %v1614
  %v1750 = vpack.c.b16 %v1624, %v1615
  %v1751 = vpack.c.b16 %v1625, %v1616
  %v1752 = vpack.c.b16 %v1626, %v1617
  %v1753 = vpack.c.b16 %v1627, %v1618
  %v1754 = vpack.c.b16 %v1637, %v1628
  %v1755 = vpack.c.b16 %v1638, %v1629
  %v1756 = vpack.c.b16 %v1639, %v1630
  %v1757 = vpack.c.b16 %v1640, %v1631
  %v1758 = vpack.c.b16 %v1641, %v1632
  %v1759 = vpack.c.b16 %v1642, %v1633
  %v1760 = vpack.c.b16 %v1643, %v1634
  %v1761 = vpack.c.b16 %v1644, %v1635
  %v1762 = vpack.c.b16 %v1645, %v1636
  %v1763 = vpack.c.b16 %v1655, %v1646
  %v1764 = vpack.c.b16 %v1656, %v1647
  %v1765 = vpack.c.b16 %v1657, %v1648
  %v1766 = vpack.c.b16 %v1658, %v1649
  %v1767 = vpack.c.b16 %v1659, %v1650
  %v1768 = vpack.c.b16 %v1660, %v1651
  %v1769 = vpack.c.b16 %v1661, %v1652
  %v1770 = vpack.c.b16 %v1662, %v1653
  %v1771 = vpack.c.b16 %v1663, %v1654
  %v1772 = vpack.c.b16 %v1673, %v1664
  %v1773 = vpack.c.b16 %v1674, %v1665
  %v1774 = vpack.c.b16 %v1675, %v1666
  %v1775 = vpack.c.b16 %v1676, %v1667
  %v1776 = vpack.c.b16 %v1677, %v1668
  %v1777 = vpack.c.b16 %v1678, %v1669
  %v1778 = vpack.c.b16 %v1679, %v1670
  %v1779 = vpack.c.b16 %v1680, %v1671
  %v1780 = vpack.c.b16 %v1681, %v1672
  %v1781 = vpack.c.b16 %v1691, %v1682
  %v1782 = vpack.c.b16 %v1692, %v1683
  %v1783 = vpack.c.b16 %v1693, %v1684
  %v1784 = vpack.c.b16 %v1694, %v1685
  %v1785 = vpack.c.b16 %v1695, %v1686
  %v1786 = vpack.c.b16 %v1696, %v1687
  %v1787 = vpack.c.b16 %v1697, %v1688
  %v1788 = vpack.c.b16 %v1698, %v1689
  %v1789 = vpack.c.b16 %v1699, %v1690
  %v1790 = vpack.c.b16 %v1709, %v1700
  %v1791 = vpack.c.b16 %v1710, %v1701
  %v1792 = vpack.c.b16 %v1711, %v1702
  %v1793 = vpack.c.b16 %v1712, %v1703
  %v1794 = vpack.c.b16 %v1713, %v1704
  %v1795 = vpack.c.b16 %v1714, %v1705
  %v1796 = vpack.c.b16 %v1715, %v1706
  %v1797 = vpack.c.b16 %v1716, %v1707
  %v1798 = vpack.c.b16 %v1717, %v1708
  %v1799 = vpack.c.b16 %v1727, %v1718
  %v1800 = vpack.c.b16 %v1728, %v1719
  %v1801 = vpack.c.b16 %v1729, %v1720
  %v1802 = vpack.c.b16 %v1730, %v1721
  %v1803 = vpack.c.b16 %v1731, %v1722
  %v1804 = vpack.c.b16 %v1732, %v1723
  %v1805 = vpack.c.b16 %v1733, %v1724
  %v1806 = vpack.c.b16 %v1734, %v1725
  %v1807 = vpack.c.b16 %v1735, %v1726
  %1880 = vmatpush.bf16.msra.mxu0 %v1799
  %1881 = vmatpush.bf16.msra.mxu0 %v1790
  %1882 = vmatpush.bf16.msra.mxu0 %v1781
  %1883 = vmatpush.bf16.msra.mxu0 %v1772
  %1884 = vmatpush.bf16.msra.mxu0 %v1763
  %1885 = vmatpush.bf16.msra.mxu0 %v1754
  %1886 = vmatpush.bf16.msra.mxu0 %v1745
  %1887 = vmatpush.bf16.msra.mxu0 %v1736
  %1888 = vmatmul.bf16.gmra.mxu0 %v1431
  %v1889 = vpop.f32.mrf.mxu0
  %v1890 = vadd.f32 0.0, %v1889
  %v1891 = vpop.f32.mrf.mxu0
  %1892 = vdwg.mxu0
  %1893 = vmatpush.bf16.msra.mxu0 %v1800
  %1894 = vmatpush.bf16.msra.mxu0 %v1791
  %1895 = vmatpush.bf16.msra.mxu0 %v1782
  %1896 = vmatpush.bf16.msra.mxu0 %v1773
  %1897 = vmatpush.bf16.msra.mxu0 %v1764
  %1898 = vmatpush.bf16.msra.mxu0 %v1755
  %1899 = vmatpush.bf16.msra.mxu0 %v1746
  %1900 = vmatpush.bf16.msra.mxu0 %v1737
  %1901 = vmatmul.bf16.gmra.mxu0 %v1431
  %v1902 = vpop.f32.mrf.mxu0
  %v1903 = vadd.f32 0.0, %v1902
  %v1904 = vpop.f32.mrf.mxu0
  %1905 = vdwg.mxu0
  %1906 = vmatpush.bf16.msra.mxu0 %v1801
  %1907 = vmatpush.bf16.msra.mxu0 %v1792
  %1908 = vmatpush.bf16.msra.mxu0 %v1783
  %1909 = vmatpush.bf16.msra.mxu0 %v1774
  %1910 = vmatpush.bf16.msra.mxu0 %v1765
  %1911 = vmatpush.bf16.msra.mxu0 %v1756
  %1912 = vmatpush.bf16.msra.mxu0 %v1747
  %1913 = vmatpush.bf16.msra.mxu0 %v1738
  %1914 = vmatmul.bf16.gmra.mxu0 %v1431
  %v1915 = vpop.f32.mrf.mxu0
  %v1916 = vadd.f32 0.0, %v1915
  %v1917 = vpop.f32.mrf.mxu0
  %1918 = vdwg.mxu0
  %1919 = vmatpush.bf16.msra.mxu0 %v1802
  %1920 = vmatpush.bf16.msra.mxu0 %v1793
  %1921 = vmatpush.bf16.msra.mxu0 %v1784
  %1922 = vmatpush.bf16.msra.mxu0 %v1775
  %1923 = vmatpush.bf16.msra.mxu0 %v1766
  %1924 = vmatpush.bf16.msra.mxu0 %v1757
  %1925 = vmatpush.bf16.msra.mxu0 %v1748
  %1926 = vmatpush.bf16.msra.mxu0 %v1739
  %1927 = vmatmul.bf16.gmra.mxu0 %v1431
  %v1928 = vpop.f32.mrf.mxu0
  %v1929 = vadd.f32 0.0, %v1928
  %v1930 = vpop.f32.mrf.mxu0
  %1931 = vdwg.mxu0
  %1932 = vmatpush.bf16.msra.mxu0 %v1803
  %1933 = vmatpush.bf16.msra.mxu0 %v1794
  %1934 = vmatpush.bf16.msra.mxu0 %v1785
  %1935 = vmatpush.bf16.msra.mxu0 %v1776
  %1936 = vmatpush.bf16.msra.mxu0 %v1767
  %1937 = vmatpush.bf16.msra.mxu0 %v1758
  %1938 = vmatpush.bf16.msra.mxu0 %v1749
  %1939 = vmatpush.bf16.msra.mxu0 %v1740
  %1940 = vmatmul.bf16.gmra.mxu0 %v1431
  %v1941 = vpop.f32.mrf.mxu0
  %v1942 = vadd.f32 0.0, %v1941
  %v1943 = vpop.f32.mrf.mxu0
  %1944 = vdwg.mxu0
  %1945 = vmatpush.bf16.msra.mxu0 %v1804
  %1946 = vmatpush.bf16.msra.mxu0 %v1795
  %1947 = vmatpush.bf16.msra.mxu0 %v1786
  %1948 = vmatpush.bf16.msra.mxu0 %v1777
  %1949 = vmatpush.bf16.msra.mxu0 %v1768
  %1950 = vmatpush.bf16.msra.mxu0 %v1759
  %1951 = vmatpush.bf16.msra.mxu0 %v1750
  %1952 = vmatpush.bf16.msra.mxu0 %v1741
  %1953 = vmatmul.bf16.gmra.mxu0 %v1431
  %v1954 = vpop.f32.mrf.mxu0
  %v1955 = vadd.f32 0.0, %v1954
  %v1956 = vpop.f32.mrf.mxu0
  %1957 = vdwg.mxu0
  %1958 = vmatpush.bf16.msra.mxu0 %v1805
  %1959 = vmatpush.bf16.msra.mxu0 %v1796
  %1960 = vmatpush.bf16.msra.mxu0 %v1787
  %1961 = vmatpush.bf16.msra.mxu0 %v1778
  %1962 = vmatpush.bf16.msra.mxu0 %v1769
  %1963 = vmatpush.bf16.msra.mxu0 %v1760
  %1964 = vmatpush.bf16.msra.mxu0 %v1751
  %1965 = vmatpush.bf16.msra.mxu0 %v1742
  %1966 = vmatmul.bf16.gmra.mxu0 %v1431
  %v1967 = vpop.f32.mrf.mxu0
  %v1968 = vadd.f32 0.0, %v1967
  %v1969 = vpop.f32.mrf.mxu0
  %1970 = vdwg.mxu0
  %1971 = vmatpush.bf16.msra.mxu0 %v1806
  %1972 = vmatpush.bf16.msra.mxu0 %v1797
  %1973 = vmatpush.bf16.msra.mxu0 %v1788
  %1974 = vmatpush.bf16.msra.mxu0 %v1779
  %1975 = vmatpush.bf16.msra.mxu0 %v1770
  %1976 = vmatpush.bf16.msra.mxu0 %v1761
  %1977 = vmatpush.bf16.msra.mxu0 %v1752
  %1978 = vmatpush.bf16.msra.mxu0 %v1743
  %1979 = vmatmul.bf16.gmra.mxu0 %v1431
  %v1980 = vpop.f32.mrf.mxu0
  %v1981 = vadd.f32 0.0, %v1980
  %v1982 = vpop.f32.mrf.mxu0
  %1983 = vdwg.mxu0
  %1984 = vmatpush.bf16.msra.mxu0 %v1807
  %1985 = vmatpush.bf16.msra.mxu0 %v1798
  %1986 = vmatpush.bf16.msra.mxu0 %v1789
  %1987 = vmatpush.bf16.msra.mxu0 %v1780
  %1988 = vmatpush.bf16.msra.mxu0 %v1771
  %1989 = vmatpush.bf16.msra.mxu0 %v1762
  %1990 = vmatpush.bf16.msra.mxu0 %v1753
  %1991 = vmatpush.bf16.msra.mxu0 %v1744
  %1992 = vmatmul.bf16.gmra.mxu0 %v1431
  %v1993 = vpop.f32.mrf.mxu0
  %v1994 = vadd.f32 0.0, %v1993
  %v1995 = vpop.f32.mrf.mxu0
  %1996 = vdwg.mxu0
  %1997 = vst [vmem:[#allocation2] sm:$0x3] %v1890
  %1998 = vst [vmem:[#allocation2 + $0x2] sm:$0x3] %v1903
  %1999 = vst [vmem:[#allocation2 + $0x4] sm:$0x3] %v1916
  %2000 = vst [vmem:[#allocation2 + $0x6] sm:$0x3] %v1929
  %2001 = vst [vmem:[#allocation2 + $0x8] sm:$0x3] %v1942
  %2002 = vst [vmem:[#allocation2 + $0xa] sm:$0x3] %v1955
  %2003 = vst [vmem:[#allocation2 + $0xc] sm:$0x3] %v1968
  %2004 = vst [vmem:[#allocation2 + $0xe] sm:$0x3] %v1981
  %2005 = vst [vmem:[#allocation2 + $0x10] sm:$0x3] %v1994
  %s2006 = scalar_lea.vmem %s0, 160
  %v2007 = vld [vmem:[%s2006] sm:$0xff]
  %v2008 = vld [vmem:[%s2006 + $0x8] sm:$0xff]
  %v2009 = vld [vmem:[%s2006 + $0x10] sm:$0xff]
  %v2010 = vld [vmem:[%s2006 + $0x18] sm:$0xff]
  %v2011 = vld [vmem:[%s4] sm:$0xf]
  %v2012 = vld [vmem:[%s4 + $0x4] sm:$0xf]
  %v2013 = vld [vmem:[%s4 + $0x8] sm:$0xf]
  %v2014 = vld [vmem:[%s4 + $0xc] sm:$0xf]
  %v2015 = vld [vmem:[#allocation2] sm:$0xff]
  %v2016 = vld [vmem:[#allocation2 + $0x8] sm:$0xff]
  %v2017 = vld [vmem:[#allocation2 + $0x10] sm:$0x3]
  %v2018 = vpack.c.bf16 %v2016, %v2015
  %v2019 = vpack.c.bf16 %v2017, %v2017
  %v2024 = vunpack.c.l.b16 %v2011
  %v2025 = vunpack.c.l.b16 %v2012
  %v2026 = vunpack.c.l.b16 %v2013
  %v2027 = vunpack.c.l.b16 %v2014
  %v2028 = vpack.c.b16 %v2025, %v2024
  %v2029 = vpack.c.b16 %v2027, %v2026
  %v2031 = vsel %vm627, %v2028, 0
  %v2034 = vsel %vm627, %v2029, 0
  %v2037 = vsel %vm634, %v2019, 0
  %2039 = vmatpush.bf16.msra.mxu0 0
  %2040 = vmatpush.bf16.msra.mxu0 0
  %2041 = vmatpush.bf16.msra.mxu0 0
  %2042 = vmatpush.bf16.msra.mxu0 0
  %2043 = vmatpush.bf16.msra.mxu0 0
  %2044 = vmatpush.bf16.msra.mxu0 0
  %2045 = vmatpush.bf16.msra.mxu0 %v2037
  %2046 = vmatpush.bf16.msra.mxu0 %v2018
  %2047 = vmatmul.bf16.gmra.mxu0 %v2031
  %v2048 = vpop.f32.mrf.mxu0
  %v2049 = vadd.f32 0.0, %v2048
  %v2050 = vpop.f32.mrf.mxu0
  %v2051 = vadd.f32 0.0, %v2050
  %2052 = vmatmul.bf16.gmra.mxu0 %v2034
  %v2053 = vpop.f32.mrf.mxu0
  %v2054 = vadd.f32 0.0, %v2053
  %v2055 = vpop.f32.mrf.mxu0
  %v2056 = vadd.f32 0.0, %v2055
  %2057 = vdwg.mxu0
  %v2058 = vadd.f32 %v2007, %v2049
  %v2059 = vadd.f32 %v2008, %v2051
  %v2060 = vadd.f32 %v2009, %v2054
  %v2061 = vadd.f32 %v2010, %v2056
  %v2062 = vmul.f32 %v2058, %v2058
  %v2063 = vmul.f32 %v2059, %v2059
  %v2064 = vmul.f32 %v2060, %v2060
  %v2065 = vmul.f32 %v2061, %v2061
  %v2066 = vmul.f32 %v2058, %v2062
  %v2067 = vmul.f32 %v2059, %v2063
  %v2068 = vmul.f32 %v2060, %v2064
  %v2069 = vmul.f32 %v2061, %v2065
  %v2070 = vmul.f32 %v2066, 0.044715
  %v2071 = vmul.f32 %v2067, 0.044715
  %v2072 = vmul.f32 %v2068, 0.044715
  %v2073 = vmul.f32 %v2069, 0.044715
  %v2074 = vadd.f32 %v2058, %v2070
  %v2075 = vadd.f32 %v2059, %v2071
  %v2076 = vadd.f32 %v2060, %v2072
  %v2077 = vadd.f32 %v2061, %v2073
  %v2078 = vmul.f32 %v2074, 0.7978846
  %v2079 = vmul.f32 %v2075, 0.7978846
  %v2080 = vmul.f32 %v2076, 0.7978846
  %v2081 = vmul.f32 %v2077, 0.7978846
  %v2082 = vtanh.pop %v2078
  %v2083 = vtanh.pop %v2079
  %v2084 = vtanh.pop %v2080
  %v2085 = vtanh.pop %v2081
  %v2086 = vadd.f32 %v2082, 1.0
  %v2087 = vadd.f32 %v2083, 1.0
  %v2088 = vadd.f32 %v2084, 1.0
  %v2089 = vadd.f32 %v2085, 1.0
  %v2090 = vmul.f32 %v2086, 0.5
  %v2091 = vmul.f32 %v2087, 0.5
  %v2092 = vmul.f32 %v2088, 0.5
  %v2093 = vmul.f32 %v2089, 0.5
  %v2094 = vmul.f32 %v2058, %v2090
  %v2095 = vmul.f32 %v2059, %v2091
  %v2096 = vmul.f32 %v2060, %v2092
  %v2097 = vmul.f32 %v2061, %v2093
  %v2098 = vld [vmem:[%s5] sm:$0x1]
  %v2099 = vpack.c.bf16 %v2095, %v2094
  %v2100 = vpack.c.bf16 %v2097, %v2096
  %v2101 = vld [vmem:[%s6] sm:$0x3]
  %2103 = vset.pattern.permute.xlu0 0
  %2104 = vperm.xlu0 %2103, %v2101
  %v2105 = vpop.permute.xlu0 %2104
  %v2108 = vsel %vm706, %v2098, 0
  %2110 = vmatpush.bf16.msra.mxu0 0
  %2111 = vmatpush.bf16.msra.mxu0 0
  %2112 = vmatpush.bf16.msra.mxu0 0
  %2113 = vmatpush.bf16.msra.mxu0 0
  %2114 = vmatpush.bf16.msra.mxu0 0
  %2115 = vmatpush.bf16.msra.mxu0 0
  %2116 = vmatpush.bf16.msra.mxu0 %v2100
  %2117 = vmatpush.bf16.msra.mxu0 %v2099
  %2118 = vmatmul.bf16.gmra.mxu0 %v2108
  %v2119 = vpop.f32.mrf.mxu0
  %v2120 = vadd.f32 %v2105, %v2119
  %v2121 = vpop.f32.mrf.mxu0
  %2122 = vdwg.mxu0
  %v2123 = vmax.f32 %v2120, -1.0
  %v2124 = vmin.f32 %v2123, 1.0
  %v2125 = vmul.f32 %v2124, 0.33915544
  %v2126 = vmul.f32 %v1430, 0.5596282
  %v2127 = vadd.f32 %v2125, %v2126
  %s2128 = scalar_lea.vmem %s2, 8
  %v2129 = vld [vmem:[%s2128] sm:$0x3]
  %v2130 = vadd.f32 %v2127, %v2129
  %v2131 = vpack.c.bf16 %v2130, %v2130
  %v2132 = vld [vmem:[%s3] sm:$0xff]
  %v2133 = vld [vmem:[%s3 + $0x8] sm:$0xff]
  %v2134 = vld [vmem:[%s3 + $0x10] sm:$0xff]
  %v2135 = vld [vmem:[%s3 + $0x18] sm:$0xff]
  %v2136 = vld [vmem:[%s3 + $0x20] sm:$0xf]
  %v2137 = vld [vmem:[%s3 + $0x24] sm:$0xff]
  %v2138 = vld [vmem:[%s3 + $0x2c] sm:$0xff]
  %v2139 = vld [vmem:[%s3 + $0x34] sm:$0xff]
  %v2140 = vld [vmem:[%s3 + $0x3c] sm:$0xff]
  %v2141 = vld [vmem:[%s3 + $0x44] sm:$0xf]
  %v2142 = vld [vmem:[%s3 + $0x48] sm:$0xff]
  %v2143 = vld [vmem:[%s3 + $0x50] sm:$0xff]
  %v2144 = vld [vmem:[%s3 + $0x58] sm:$0xff]
  %v2145 = vld [vmem:[%s3 + $0x60] sm:$0xff]
  %v2146 = vld [vmem:[%s3 + $0x68] sm:$0xf]
  %v2147 = vld [vmem:[%s3 + $0x6c] sm:$0xff]
  %v2148 = vld [vmem:[%s3 + $0x74] sm:$0xff]
  %v2149 = vld [vmem:[%s3 + $0x7c] sm:$0xff]
  %v2150 = vld [vmem:[%s3 + $0x84] sm:$0xff]
  %v2151 = vld [vmem:[%s3 + $0x8c] sm:$0xf]
  %v2152 = vld [vmem:[%s3 + $0x90] sm:$0xff]
  %v2153 = vld [vmem:[%s3 + $0x98] sm:$0xff]
  %v2154 = vld [vmem:[%s3 + $0xa0] sm:$0xff]
  %v2155 = vld [vmem:[%s3 + $0xa8] sm:$0xff]
  %v2156 = vld [vmem:[%s3 + $0xb0] sm:$0xf]
  %v2157 = vld [vmem:[%s3 + $0xb4] sm:$0xff]
  %v2158 = vld [vmem:[%s3 + $0xbc] sm:$0xff]
  %v2159 = vld [vmem:[%s3 + $0xc4] sm:$0xff]
  %v2160 = vld [vmem:[%s3 + $0xcc] sm:$0xff]
  %v2161 = vld [vmem:[%s3 + $0xd4] sm:$0xf]
  %v2162 = vld [vmem:[%s3 + $0xd8] sm:$0xff]
  %v2163 = vld [vmem:[%s3 + $0xe0] sm:$0xff]
  %v2164 = vld [vmem:[%s3 + $0xe8] sm:$0xff]
  %v2165 = vld [vmem:[%s3 + $0xf0] sm:$0xff]
  %v2166 = vld [vmem:[%s3 + $0xf8] sm:$0xf]
  %v2167 = vld [vmem:[%s3 + $0xfc] sm:$0xff]
  %v2168 = vld [vmem:[%s3 + $0x104] sm:$0xff]
  %v2169 = vld [vmem:[%s3 + $0x10c] sm:$0xff]
  %v2170 = vld [vmem:[%s3 + $0x114] sm:$0xff]
  %v2171 = vld [vmem:[%s3 + $0x11c] sm:$0xf]
  %v2172 = vld [vmem:[%s3 + $0x120] sm:$0xff]
  %v2173 = vld [vmem:[%s3 + $0x128] sm:$0xff]
  %v2174 = vld [vmem:[%s3 + $0x130] sm:$0xff]
  %v2175 = vld [vmem:[%s3 + $0x138] sm:$0xff]
  %v2176 = vld [vmem:[%s3 + $0x140] sm:$0xf]
  %v2177 = vld [vmem:[%s3 + $0x144] sm:$0xff]
  %v2178 = vld [vmem:[%s3 + $0x14c] sm:$0xff]
  %v2179 = vld [vmem:[%s3 + $0x154] sm:$0xff]
  %v2180 = vld [vmem:[%s3 + $0x15c] sm:$0xff]
  %v2181 = vld [vmem:[%s3 + $0x164] sm:$0xf]
  %v2182 = vld [vmem:[%s3 + $0x168] sm:$0xff]
  %v2183 = vld [vmem:[%s3 + $0x170] sm:$0xff]
  %v2184 = vld [vmem:[%s3 + $0x178] sm:$0xff]
  %v2185 = vld [vmem:[%s3 + $0x180] sm:$0xff]
  %v2186 = vld [vmem:[%s3 + $0x188] sm:$0xf]
  %v2187 = vld [vmem:[%s3 + $0x18c] sm:$0xff]
  %v2188 = vld [vmem:[%s3 + $0x194] sm:$0xff]
  %v2189 = vld [vmem:[%s3 + $0x19c] sm:$0xff]
  %v2190 = vld [vmem:[%s3 + $0x1a4] sm:$0xff]
  %v2191 = vld [vmem:[%s3 + $0x1ac] sm:$0xf]
  %v2192 = vld [vmem:[%s3 + $0x1b0] sm:$0xff]
  %v2193 = vld [vmem:[%s3 + $0x1b8] sm:$0xff]
  %v2194 = vld [vmem:[%s3 + $0x1c0] sm:$0xff]
  %v2195 = vld [vmem:[%s3 + $0x1c8] sm:$0xff]
  %v2196 = vld [vmem:[%s3 + $0x1d0] sm:$0xf]
  %v2197 = vld [vmem:[%s3 + $0x1d4] sm:$0xff]
  %v2198 = vld [vmem:[%s3 + $0x1dc] sm:$0xff]
  %v2199 = vld [vmem:[%s3 + $0x1e4] sm:$0xff]
  %v2200 = vld [vmem:[%s3 + $0x1ec] sm:$0xff]
  %v2201 = vld [vmem:[%s3 + $0x1f4] sm:$0xf]
  %v2202 = vld [vmem:[%s3 + $0x1f8] sm:$0xff]
  %v2203 = vld [vmem:[%s3 + $0x200] sm:$0xff]
  %v2204 = vld [vmem:[%s3 + $0x208] sm:$0xff]
  %v2205 = vld [vmem:[%s3 + $0x210] sm:$0xff]
  %v2206 = vld [vmem:[%s3 + $0x218] sm:$0xf]
  %v2207 = vld [vmem:[%s3 + $0x21c] sm:$0xff]
  %v2208 = vld [vmem:[%s3 + $0x224] sm:$0xff]
  %v2209 = vld [vmem:[%s3 + $0x22c] sm:$0xff]
  %v2210 = vld [vmem:[%s3 + $0x234] sm:$0xff]
  %v2211 = vld [vmem:[%s3 + $0x23c] sm:$0xf]
  %v2292 = vunpack.c.l.b16 %v2132
  %v2293 = vunpack.c.h.b16 %v2132
  %v2294 = vunpack.c.l.b16 %v2133
  %v2295 = vunpack.c.h.b16 %v2133
  %v2296 = vunpack.c.l.b16 %v2134
  %v2297 = vunpack.c.h.b16 %v2134
  %v2298 = vunpack.c.l.b16 %v2135
  %v2299 = vunpack.c.h.b16 %v2135
  %v2300 = vunpack.c.l.b16 %v2136
  %v2301 = vunpack.c.l.b16 %v2137
  %v2302 = vunpack.c.h.b16 %v2137
  %v2303 = vunpack.c.l.b16 %v2138
  %v2304 = vunpack.c.h.b16 %v2138
  %v2305 = vunpack.c.l.b16 %v2139
  %v2306 = vunpack.c.h.b16 %v2139
  %v2307 = vunpack.c.l.b16 %v2140
  %v2308 = vunpack.c.h.b16 %v2140
  %v2309 = vunpack.c.l.b16 %v2141
  %v2310 = vunpack.c.l.b16 %v2142
  %v2311 = vunpack.c.h.b16 %v2142
  %v2312 = vunpack.c.l.b16 %v2143
  %v2313 = vunpack.c.h.b16 %v2143
  %v2314 = vunpack.c.l.b16 %v2144
  %v2315 = vunpack.c.h.b16 %v2144
  %v2316 = vunpack.c.l.b16 %v2145
  %v2317 = vunpack.c.h.b16 %v2145
  %v2318 = vunpack.c.l.b16 %v2146
  %v2319 = vunpack.c.l.b16 %v2147
  %v2320 = vunpack.c.h.b16 %v2147
  %v2321 = vunpack.c.l.b16 %v2148
  %v2322 = vunpack.c.h.b16 %v2148
  %v2323 = vunpack.c.l.b16 %v2149
  %v2324 = vunpack.c.h.b16 %v2149
  %v2325 = vunpack.c.l.b16 %v2150
  %v2326 = vunpack.c.h.b16 %v2150
  %v2327 = vunpack.c.l.b16 %v2151
  %v2328 = vunpack.c.l.b16 %v2152
  %v2329 = vunpack.c.h.b16 %v2152
  %v2330 = vunpack.c.l.b16 %v2153
  %v2331 = vunpack.c.h.b16 %v2153
  %v2332 = vunpack.c.l.b16 %v2154
  %v2333 = vunpack.c.h.b16 %v2154
  %v2334 = vunpack.c.l.b16 %v2155
  %v2335 = vunpack.c.h.b16 %v2155
  %v2336 = vunpack.c.l.b16 %v2156
  %v2337 = vunpack.c.l.b16 %v2157
  %v2338 = vunpack.c.h.b16 %v2157
  %v2339 = vunpack.c.l.b16 %v2158
  %v2340 = vunpack.c.h.b16 %v2158
  %v2341 = vunpack.c.l.b16 %v2159
  %v2342 = vunpack.c.h.b16 %v2159
  %v2343 = vunpack.c.l.b16 %v2160
  %v2344 = vunpack.c.h.b16 %v2160
  %v2345 = vunpack.c.l.b16 %v2161
  %v2346 = vunpack.c.l.b16 %v2162
  %v2347 = vunpack.c.h.b16 %v2162
  %v2348 = vunpack.c.l.b16 %v2163
  %v2349 = vunpack.c.h.b16 %v2163
  %v2350 = vunpack.c.l.b16 %v2164
  %v2351 = vunpack.c.h.b16 %v2164
  %v2352 = vunpack.c.l.b16 %v2165
  %v2353 = vunpack.c.h.b16 %v2165
  %v2354 = vunpack.c.l.b16 %v2166
  %v2355 = vunpack.c.l.b16 %v2167
  %v2356 = vunpack.c.h.b16 %v2167
  %v2357 = vunpack.c.l.b16 %v2168
  %v2358 = vunpack.c.h.b16 %v2168
  %v2359 = vunpack.c.l.b16 %v2169
  %v2360 = vunpack.c.h.b16 %v2169
  %v2361 = vunpack.c.l.b16 %v2170
  %v2362 = vunpack.c.h.b16 %v2170
  %v2363 = vunpack.c.l.b16 %v2171
  %v2364 = vunpack.c.l.b16 %v2172
  %v2365 = vunpack.c.h.b16 %v2172
  %v2366 = vunpack.c.l.b16 %v2173
  %v2367 = vunpack.c.h.b16 %v2173
  %v2368 = vunpack.c.l.b16 %v2174
  %v2369 = vunpack.c.h.b16 %v2174
  %v2370 = vunpack.c.l.b16 %v2175
  %v2371 = vunpack.c.h.b16 %v2175
  %v2372 = vunpack.c.l.b16 %v2176
  %v2373 = vunpack.c.l.b16 %v2177
  %v2374 = vunpack.c.h.b16 %v2177
  %v2375 = vunpack.c.l.b16 %v2178
  %v2376 = vunpack.c.h.b16 %v2178
  %v2377 = vunpack.c.l.b16 %v2179
  %v2378 = vunpack.c.h.b16 %v2179
  %v2379 = vunpack.c.l.b16 %v2180
  %v2380 = vunpack.c.h.b16 %v2180
  %v2381 = vunpack.c.l.b16 %v2181
  %v2382 = vunpack.c.l.b16 %v2182
  %v2383 = vunpack.c.h.b16 %v2182
  %v2384 = vunpack.c.l.b16 %v2183
  %v2385 = vunpack.c.h.b16 %v2183
  %v2386 = vunpack.c.l.b16 %v2184
  %v2387 = vunpack.c.h.b16 %v2184
  %v2388 = vunpack.c.l.b16 %v2185
  %v2389 = vunpack.c.h.b16 %v2185
  %v2390 = vunpack.c.l.b16 %v2186
  %v2391 = vunpack.c.l.b16 %v2187
  %v2392 = vunpack.c.h.b16 %v2187
  %v2393 = vunpack.c.l.b16 %v2188
  %v2394 = vunpack.c.h.b16 %v2188
  %v2395 = vunpack.c.l.b16 %v2189
  %v2396 = vunpack.c.h.b16 %v2189
  %v2397 = vunpack.c.l.b16 %v2190
  %v2398 = vunpack.c.h.b16 %v2190
  %v2399 = vunpack.c.l.b16 %v2191
  %v2400 = vunpack.c.l.b16 %v2192
  %v2401 = vunpack.c.h.b16 %v2192
  %v2402 = vunpack.c.l.b16 %v2193
  %v2403 = vunpack.c.h.b16 %v2193
  %v2404 = vunpack.c.l.b16 %v2194
  %v2405 = vunpack.c.h.b16 %v2194
  %v2406 = vunpack.c.l.b16 %v2195
  %v2407 = vunpack.c.h.b16 %v2195
  %v2408 = vunpack.c.l.b16 %v2196
  %v2409 = vunpack.c.l.b16 %v2197
  %v2410 = vunpack.c.h.b16 %v2197
  %v2411 = vunpack.c.l.b16 %v2198
  %v2412 = vunpack.c.h.b16 %v2198
  %v2413 = vunpack.c.l.b16 %v2199
  %v2414 = vunpack.c.h.b16 %v2199
  %v2415 = vunpack.c.l.b16 %v2200
  %v2416 = vunpack.c.h.b16 %v2200
  %v2417 = vunpack.c.l.b16 %v2201
  %v2418 = vunpack.c.l.b16 %v2202
  %v2419 = vunpack.c.h.b16 %v2202
  %v2420 = vunpack.c.l.b16 %v2203
  %v2421 = vunpack.c.h.b16 %v2203
  %v2422 = vunpack.c.l.b16 %v2204
  %v2423 = vunpack.c.h.b16 %v2204
  %v2424 = vunpack.c.l.b16 %v2205
  %v2425 = vunpack.c.h.b16 %v2205
  %v2426 = vunpack.c.l.b16 %v2206
  %v2427 = vunpack.c.l.b16 %v2207
  %v2428 = vunpack.c.h.b16 %v2207
  %v2429 = vunpack.c.l.b16 %v2208
  %v2430 = vunpack.c.h.b16 %v2208
  %v2431 = vunpack.c.l.b16 %v2209
  %v2432 = vunpack.c.h.b16 %v2209
  %v2433 = vunpack.c.l.b16 %v2210
  %v2434 = vunpack.c.h.b16 %v2210
  %v2435 = vunpack.c.l.b16 %v2211
  %v2436 = vpack.c.b16 %v2301, %v2292
  %v2437 = vpack.c.b16 %v2302, %v2293
  %v2438 = vpack.c.b16 %v2303, %v2294
  %v2439 = vpack.c.b16 %v2304, %v2295
  %v2440 = vpack.c.b16 %v2305, %v2296
  %v2441 = vpack.c.b16 %v2306, %v2297
  %v2442 = vpack.c.b16 %v2307, %v2298
  %v2443 = vpack.c.b16 %v2308, %v2299
  %v2444 = vpack.c.b16 %v2309, %v2300
  %v2445 = vpack.c.b16 %v2319, %v2310
  %v2446 = vpack.c.b16 %v2320, %v2311
  %v2447 = vpack.c.b16 %v2321, %v2312
  %v2448 = vpack.c.b16 %v2322, %v2313
  %v2449 = vpack.c.b16 %v2323, %v2314
  %v2450 = vpack.c.b16 %v2324, %v2315
  %v2451 = vpack.c.b16 %v2325, %v2316
  %v2452 = vpack.c.b16 %v2326, %v2317
  %v2453 = vpack.c.b16 %v2327, %v2318
  %v2454 = vpack.c.b16 %v2337, %v2328
  %v2455 = vpack.c.b16 %v2338, %v2329
  %v2456 = vpack.c.b16 %v2339, %v2330
  %v2457 = vpack.c.b16 %v2340, %v2331
  %v2458 = vpack.c.b16 %v2341, %v2332
  %v2459 = vpack.c.b16 %v2342, %v2333
  %v2460 = vpack.c.b16 %v2343, %v2334
  %v2461 = vpack.c.b16 %v2344, %v2335
  %v2462 = vpack.c.b16 %v2345, %v2336
  %v2463 = vpack.c.b16 %v2355, %v2346
  %v2464 = vpack.c.b16 %v2356, %v2347
  %v2465 = vpack.c.b16 %v2357, %v2348
  %v2466 = vpack.c.b16 %v2358, %v2349
  %v2467 = vpack.c.b16 %v2359, %v2350
  %v2468 = vpack.c.b16 %v2360, %v2351
  %v2469 = vpack.c.b16 %v2361, %v2352
  %v2470 = vpack.c.b16 %v2362, %v2353
  %v2471 = vpack.c.b16 %v2363, %v2354
  %v2472 = vpack.c.b16 %v2373, %v2364
  %v2473 = vpack.c.b16 %v2374, %v2365
  %v2474 = vpack.c.b16 %v2375, %v2366
  %v2475 = vpack.c.b16 %v2376, %v2367
  %v2476 = vpack.c.b16 %v2377, %v2368
  %v2477 = vpack.c.b16 %v2378, %v2369
  %v2478 = vpack.c.b16 %v2379, %v2370
  %v2479 = vpack.c.b16 %v2380, %v2371
  %v2480 = vpack.c.b16 %v2381, %v2372
  %v2481 = vpack.c.b16 %v2391, %v2382
  %v2482 = vpack.c.b16 %v2392, %v2383
  %v2483 = vpack.c.b16 %v2393, %v2384
  %v2484 = vpack.c.b16 %v2394, %v2385
  %v2485 = vpack.c.b16 %v2395, %v2386
  %v2486 = vpack.c.b16 %v2396, %v2387
  %v2487 = vpack.c.b16 %v2397, %v2388
  %v2488 = vpack.c.b16 %v2398, %v2389
  %v2489 = vpack.c.b16 %v2399, %v2390
  %v2490 = vpack.c.b16 %v2409, %v2400
  %v2491 = vpack.c.b16 %v2410, %v2401
  %v2492 = vpack.c.b16 %v2411, %v2402
  %v2493 = vpack.c.b16 %v2412, %v2403
  %v2494 = vpack.c.b16 %v2413, %v2404
  %v2495 = vpack.c.b16 %v2414, %v2405
  %v2496 = vpack.c.b16 %v2415, %v2406
  %v2497 = vpack.c.b16 %v2416, %v2407
  %v2498 = vpack.c.b16 %v2417, %v2408
  %v2499 = vpack.c.b16 %v2427, %v2418
  %v2500 = vpack.c.b16 %v2428, %v2419
  %v2501 = vpack.c.b16 %v2429, %v2420
  %v2502 = vpack.c.b16 %v2430, %v2421
  %v2503 = vpack.c.b16 %v2431, %v2422
  %v2504 = vpack.c.b16 %v2432, %v2423
  %v2505 = vpack.c.b16 %v2433, %v2424
  %v2506 = vpack.c.b16 %v2434, %v2425
  %v2507 = vpack.c.b16 %v2435, %v2426
  %2580 = vmatpush.bf16.msra.mxu0 %v2499
  %2581 = vmatpush.bf16.msra.mxu0 %v2490
  %2582 = vmatpush.bf16.msra.mxu0 %v2481
  %2583 = vmatpush.bf16.msra.mxu0 %v2472
  %2584 = vmatpush.bf16.msra.mxu0 %v2463
  %2585 = vmatpush.bf16.msra.mxu0 %v2454
  %2586 = vmatpush.bf16.msra.mxu0 %v2445
  %2587 = vmatpush.bf16.msra.mxu0 %v2436
  %2588 = vmatmul.bf16.gmra.mxu0 %v2131
  %v2589 = vpop.f32.mrf.mxu0
  %v2590 = vadd.f32 0.0, %v2589
  %v2591 = vpop.f32.mrf.mxu0
  %2592 = vdwg.mxu0
  %2593 = vmatpush.bf16.msra.mxu0 %v2500
  %2594 = vmatpush.bf16.msra.mxu0 %v2491
  %2595 = vmatpush.bf16.msra.mxu0 %v2482
  %2596 = vmatpush.bf16.msra.mxu0 %v2473
  %2597 = vmatpush.bf16.msra.mxu0 %v2464
  %2598 = vmatpush.bf16.msra.mxu0 %v2455
  %2599 = vmatpush.bf16.msra.mxu0 %v2446
  %2600 = vmatpush.bf16.msra.mxu0 %v2437
  %2601 = vmatmul.bf16.gmra.mxu0 %v2131
  %v2602 = vpop.f32.mrf.mxu0
  %v2603 = vadd.f32 0.0, %v2602
  %v2604 = vpop.f32.mrf.mxu0
  %2605 = vdwg.mxu0
  %2606 = vmatpush.bf16.msra.mxu0 %v2501
  %2607 = vmatpush.bf16.msra.mxu0 %v2492
  %2608 = vmatpush.bf16.msra.mxu0 %v2483
  %2609 = vmatpush.bf16.msra.mxu0 %v2474
  %2610 = vmatpush.bf16.msra.mxu0 %v2465
  %2611 = vmatpush.bf16.msra.mxu0 %v2456
  %2612 = vmatpush.bf16.msra.mxu0 %v2447
  %2613 = vmatpush.bf16.msra.mxu0 %v2438
  %2614 = vmatmul.bf16.gmra.mxu0 %v2131
  %v2615 = vpop.f32.mrf.mxu0
  %v2616 = vadd.f32 0.0, %v2615
  %v2617 = vpop.f32.mrf.mxu0
  %2618 = vdwg.mxu0
  %2619 = vmatpush.bf16.msra.mxu0 %v2502
  %2620 = vmatpush.bf16.msra.mxu0 %v2493
  %2621 = vmatpush.bf16.msra.mxu0 %v2484
  %2622 = vmatpush.bf16.msra.mxu0 %v2475
  %2623 = vmatpush.bf16.msra.mxu0 %v2466
  %2624 = vmatpush.bf16.msra.mxu0 %v2457
  %2625 = vmatpush.bf16.msra.mxu0 %v2448
  %2626 = vmatpush.bf16.msra.mxu0 %v2439
  %2627 = vmatmul.bf16.gmra.mxu0 %v2131
  %v2628 = vpop.f32.mrf.mxu0
  %v2629 = vadd.f32 0.0, %v2628
  %v2630 = vpop.f32.mrf.mxu0
  %2631 = vdwg.mxu0
  %2632 = vmatpush.bf16.msra.mxu0 %v2503
  %2633 = vmatpush.bf16.msra.mxu0 %v2494
  %2634 = vmatpush.bf16.msra.mxu0 %v2485
  %2635 = vmatpush.bf16.msra.mxu0 %v2476
  %2636 = vmatpush.bf16.msra.mxu0 %v2467
  %2637 = vmatpush.bf16.msra.mxu0 %v2458
  %2638 = vmatpush.bf16.msra.mxu0 %v2449
  %2639 = vmatpush.bf16.msra.mxu0 %v2440
  %2640 = vmatmul.bf16.gmra.mxu0 %v2131
  %v2641 = vpop.f32.mrf.mxu0
  %v2642 = vadd.f32 0.0, %v2641
  %v2643 = vpop.f32.mrf.mxu0
  %2644 = vdwg.mxu0
  %2645 = vmatpush.bf16.msra.mxu0 %v2504
  %2646 = vmatpush.bf16.msra.mxu0 %v2495
  %2647 = vmatpush.bf16.msra.mxu0 %v2486
  %2648 = vmatpush.bf16.msra.mxu0 %v2477
  %2649 = vmatpush.bf16.msra.mxu0 %v2468
  %2650 = vmatpush.bf16.msra.mxu0 %v2459
  %2651 = vmatpush.bf16.msra.mxu0 %v2450
  %2652 = vmatpush.bf16.msra.mxu0 %v2441
  %2653 = vmatmul.bf16.gmra.mxu0 %v2131
  %v2654 = vpop.f32.mrf.mxu0
  %v2655 = vadd.f32 0.0, %v2654
  %v2656 = vpop.f32.mrf.mxu0
  %2657 = vdwg.mxu0
  %2658 = vmatpush.bf16.msra.mxu0 %v2505
  %2659 = vmatpush.bf16.msra.mxu0 %v2496
  %2660 = vmatpush.bf16.msra.mxu0 %v2487
  %2661 = vmatpush.bf16.msra.mxu0 %v2478
  %2662 = vmatpush.bf16.msra.mxu0 %v2469
  %2663 = vmatpush.bf16.msra.mxu0 %v2460
  %2664 = vmatpush.bf16.msra.mxu0 %v2451
  %2665 = vmatpush.bf16.msra.mxu0 %v2442
  %2666 = vmatmul.bf16.gmra.mxu0 %v2131
  %v2667 = vpop.f32.mrf.mxu0
  %v2668 = vadd.f32 0.0, %v2667
  %v2669 = vpop.f32.mrf.mxu0
  %2670 = vdwg.mxu0
  %2671 = vmatpush.bf16.msra.mxu0 %v2506
  %2672 = vmatpush.bf16.msra.mxu0 %v2497
  %2673 = vmatpush.bf16.msra.mxu0 %v2488
  %2674 = vmatpush.bf16.msra.mxu0 %v2479
  %2675 = vmatpush.bf16.msra.mxu0 %v2470
  %2676 = vmatpush.bf16.msra.mxu0 %v2461
  %2677 = vmatpush.bf16.msra.mxu0 %v2452
  %2678 = vmatpush.bf16.msra.mxu0 %v2443
  %2679 = vmatmul.bf16.gmra.mxu0 %v2131
  %v2680 = vpop.f32.mrf.mxu0
  %v2681 = vadd.f32 0.0, %v2680
  %v2682 = vpop.f32.mrf.mxu0
  %2683 = vdwg.mxu0
  %2684 = vmatpush.bf16.msra.mxu0 %v2507
  %2685 = vmatpush.bf16.msra.mxu0 %v2498
  %2686 = vmatpush.bf16.msra.mxu0 %v2489
  %2687 = vmatpush.bf16.msra.mxu0 %v2480
  %2688 = vmatpush.bf16.msra.mxu0 %v2471
  %2689 = vmatpush.bf16.msra.mxu0 %v2462
  %2690 = vmatpush.bf16.msra.mxu0 %v2453
  %2691 = vmatpush.bf16.msra.mxu0 %v2444
  %2692 = vmatmul.bf16.gmra.mxu0 %v2131
  %v2693 = vpop.f32.mrf.mxu0
  %v2694 = vadd.f32 0.0, %v2693
  %v2695 = vpop.f32.mrf.mxu0
  %2696 = vdwg.mxu0
  %2697 = vst [vmem:[#allocation2] sm:$0x3] %v2590
  %2698 = vst [vmem:[#allocation2 + $0x2] sm:$0x3] %v2603
  %2699 = vst [vmem:[#allocation2 + $0x4] sm:$0x3] %v2616
  %2700 = vst [vmem:[#allocation2 + $0x6] sm:$0x3] %v2629
  %2701 = vst [vmem:[#allocation2 + $0x8] sm:$0x3] %v2642
  %2702 = vst [vmem:[#allocation2 + $0xa] sm:$0x3] %v2655
  %2703 = vst [vmem:[#allocation2 + $0xc] sm:$0x3] %v2668
  %2704 = vst [vmem:[#allocation2 + $0xe] sm:$0x3] %v2681
  %2705 = vst [vmem:[#allocation2 + $0x10] sm:$0x3] %v2694
  %s2706 = scalar_lea.vmem %s0, 128
  %v2707 = vld [vmem:[%s2706] sm:$0xff]
  %v2708 = vld [vmem:[%s2706 + $0x8] sm:$0xff]
  %v2709 = vld [vmem:[%s2706 + $0x10] sm:$0xff]
  %v2710 = vld [vmem:[%s2706 + $0x18] sm:$0xff]
  %v2711 = vld [vmem:[%s4] sm:$0xf]
  %v2712 = vld [vmem:[%s4 + $0x4] sm:$0xf]
  %v2713 = vld [vmem:[%s4 + $0x8] sm:$0xf]
  %v2714 = vld [vmem:[%s4 + $0xc] sm:$0xf]
  %v2715 = vld [vmem:[#allocation2] sm:$0xff]
  %v2716 = vld [vmem:[#allocation2 + $0x8] sm:$0xff]
  %v2717 = vld [vmem:[#allocation2 + $0x10] sm:$0x3]
  %v2718 = vpack.c.bf16 %v2716, %v2715
  %v2719 = vpack.c.bf16 %v2717, %v2717
  %v2724 = vunpack.c.l.b16 %v2711
  %v2725 = vunpack.c.l.b16 %v2712
  %v2726 = vunpack.c.l.b16 %v2713
  %v2727 = vunpack.c.l.b16 %v2714
  %v2728 = vpack.c.b16 %v2725, %v2724
  %v2729 = vpack.c.b16 %v2727, %v2726
  %v2731 = vsel %vm627, %v2728, 0
  %v2734 = vsel %vm627, %v2729, 0
  %v2737 = vsel %vm634, %v2719, 0
  %2739 = vmatpush.bf16.msra.mxu0 0
  %2740 = vmatpush.bf16.msra.mxu0 0
  %2741 = vmatpush.bf16.msra.mxu0 0
  %2742 = vmatpush.bf16.msra.mxu0 0
  %2743 = vmatpush.bf16.msra.mxu0 0
  %2744 = vmatpush.bf16.msra.mxu0 0
  %2745 = vmatpush.bf16.msra.mxu0 %v2737
  %2746 = vmatpush.bf16.msra.mxu0 %v2718
  %2747 = vmatmul.bf16.gmra.mxu0 %v2731
  %v2748 = vpop.f32.mrf.mxu0
  %v2749 = vadd.f32 0.0, %v2748
  %v2750 = vpop.f32.mrf.mxu0
  %v2751 = vadd.f32 0.0, %v2750
  %2752 = vmatmul.bf16.gmra.mxu0 %v2734
  %v2753 = vpop.f32.mrf.mxu0
  %v2754 = vadd.f32 0.0, %v2753
  %v2755 = vpop.f32.mrf.mxu0
  %v2756 = vadd.f32 0.0, %v2755
  %2757 = vdwg.mxu0
  %v2758 = vadd.f32 %v2707, %v2749
  %v2759 = vadd.f32 %v2708, %v2751
  %v2760 = vadd.f32 %v2709, %v2754
  %v2761 = vadd.f32 %v2710, %v2756
  %v2762 = vmul.f32 %v2758, %v2758
  %v2763 = vmul.f32 %v2759, %v2759
  %v2764 = vmul.f32 %v2760, %v2760
  %v2765 = vmul.f32 %v2761, %v2761
  %v2766 = vmul.f32 %v2758, %v2762
  %v2767 = vmul.f32 %v2759, %v2763
  %v2768 = vmul.f32 %v2760, %v2764
  %v2769 = vmul.f32 %v2761, %v2765
  %v2770 = vmul.f32 %v2766, 0.044715
  %v2771 = vmul.f32 %v2767, 0.044715
  %v2772 = vmul.f32 %v2768, 0.044715
  %v2773 = vmul.f32 %v2769, 0.044715
  %v2774 = vadd.f32 %v2758, %v2770
  %v2775 = vadd.f32 %v2759, %v2771
  %v2776 = vadd.f32 %v2760, %v2772
  %v2777 = vadd.f32 %v2761, %v2773
  %v2778 = vmul.f32 %v2774, 0.7978846
  %v2779 = vmul.f32 %v2775, 0.7978846
  %v2780 = vmul.f32 %v2776, 0.7978846
  %v2781 = vmul.f32 %v2777, 0.7978846
  %v2782 = vtanh.pop %v2778
  %v2783 = vtanh.pop %v2779
  %v2784 = vtanh.pop %v2780
  %v2785 = vtanh.pop %v2781
  %v2786 = vadd.f32 %v2782, 1.0
  %v2787 = vadd.f32 %v2783, 1.0
  %v2788 = vadd.f32 %v2784, 1.0
  %v2789 = vadd.f32 %v2785, 1.0
  %v2790 = vmul.f32 %v2786, 0.5
  %v2791 = vmul.f32 %v2787, 0.5
  %v2792 = vmul.f32 %v2788, 0.5
  %v2793 = vmul.f32 %v2789, 0.5
  %v2794 = vmul.f32 %v2758, %v2790
  %v2795 = vmul.f32 %v2759, %v2791
  %v2796 = vmul.f32 %v2760, %v2792
  %v2797 = vmul.f32 %v2761, %v2793
  %v2798 = vld [vmem:[%s5] sm:$0x1]
  %v2799 = vpack.c.bf16 %v2795, %v2794
  %v2800 = vpack.c.bf16 %v2797, %v2796
  %v2801 = vld [vmem:[%s6] sm:$0x3]
  %2803 = vset.pattern.permute.xlu0 0
  %2804 = vperm.xlu0 %2803, %v2801
  %v2805 = vpop.permute.xlu0 %2804
  %v2808 = vsel %vm706, %v2798, 0
  %2810 = vmatpush.bf16.msra.mxu0 0
  %2811 = vmatpush.bf16.msra.mxu0 0
  %2812 = vmatpush.bf16.msra.mxu0 0
  %2813 = vmatpush.bf16.msra.mxu0 0
  %2814 = vmatpush.bf16.msra.mxu0 0
  %2815 = vmatpush.bf16.msra.mxu0 0
  %2816 = vmatpush.bf16.msra.mxu0 %v2800
  %2817 = vmatpush.bf16.msra.mxu0 %v2799
  %2818 = vmatmul.bf16.gmra.mxu0 %v2808
  %v2819 = vpop.f32.mrf.mxu0
  %v2820 = vadd.f32 %v2805, %v2819
  %v2821 = vpop.f32.mrf.mxu0
  %2822 = vdwg.mxu0
  %v2823 = vmax.f32 %v2820, -1.0
  %v2824 = vmin.f32 %v2823, 1.0
  %v2825 = vmul.f32 %v2824, 0.38755572
  %v2826 = vmul.f32 %v2130, 0.57127595
  %v2827 = vadd.f32 %v2825, %v2826
  %s2828 = scalar_lea.vmem %s2, 6
  %v2829 = vld [vmem:[%s2828] sm:$0x3]
  %v2830 = vadd.f32 %v2827, %v2829
  %v2831 = vpack.c.bf16 %v2830, %v2830
  %v2832 = vld [vmem:[%s3] sm:$0xff]
  %v2833 = vld [vmem:[%s3 + $0x8] sm:$0xff]
  %v2834 = vld [vmem:[%s3 + $0x10] sm:$0xff]
  %v2835 = vld [vmem:[%s3 + $0x18] sm:$0xff]
  %v2836 = vld [vmem:[%s3 + $0x20] sm:$0xf]
  %v2837 = vld [vmem:[%s3 + $0x24] sm:$0xff]
  %v2838 = vld [vmem:[%s3 + $0x2c] sm:$0xff]
  %v2839 = vld [vmem:[%s3 + $0x34] sm:$0xff]
  %v2840 = vld [vmem:[%s3 + $0x3c] sm:$0xff]
  %v2841 = vld [vmem:[%s3 + $0x44] sm:$0xf]
  %v2842 = vld [vmem:[%s3 + $0x48] sm:$0xff]
  %v2843 = vld [vmem:[%s3 + $0x50] sm:$0xff]
  %v2844 = vld [vmem:[%s3 + $0x58] sm:$0xff]
  %v2845 = vld [vmem:[%s3 + $0x60] sm:$0xff]
  %v2846 = vld [vmem:[%s3 + $0x68] sm:$0xf]
  %v2847 = vld [vmem:[%s3 + $0x6c] sm:$0xff]
  %v2848 = vld [vmem:[%s3 + $0x74] sm:$0xff]
  %v2849 = vld [vmem:[%s3 + $0x7c] sm:$0xff]
  %v2850 = vld [vmem:[%s3 + $0x84] sm:$0xff]
  %v2851 = vld [vmem:[%s3 + $0x8c] sm:$0xf]
  %v2852 = vld [vmem:[%s3 + $0x90] sm:$0xff]
  %v2853 = vld [vmem:[%s3 + $0x98] sm:$0xff]
  %v2854 = vld [vmem:[%s3 + $0xa0] sm:$0xff]
  %v2855 = vld [vmem:[%s3 + $0xa8] sm:$0xff]
  %v2856 = vld [vmem:[%s3 + $0xb0] sm:$0xf]
  %v2857 = vld [vmem:[%s3 + $0xb4] sm:$0xff]
  %v2858 = vld [vmem:[%s3 + $0xbc] sm:$0xff]
  %v2859 = vld [vmem:[%s3 + $0xc4] sm:$0xff]
  %v2860 = vld [vmem:[%s3 + $0xcc] sm:$0xff]
  %v2861 = vld [vmem:[%s3 + $0xd4] sm:$0xf]
  %v2862 = vld [vmem:[%s3 + $0xd8] sm:$0xff]
  %v2863 = vld [vmem:[%s3 + $0xe0] sm:$0xff]
  %v2864 = vld [vmem:[%s3 + $0xe8] sm:$0xff]
  %v2865 = vld [vmem:[%s3 + $0xf0] sm:$0xff]
  %v2866 = vld [vmem:[%s3 + $0xf8] sm:$0xf]
  %v2867 = vld [vmem:[%s3 + $0xfc] sm:$0xff]
  %v2868 = vld [vmem:[%s3 + $0x104] sm:$0xff]
  %v2869 = vld [vmem:[%s3 + $0x10c] sm:$0xff]
  %v2870 = vld [vmem:[%s3 + $0x114] sm:$0xff]
  %v2871 = vld [vmem:[%s3 + $0x11c] sm:$0xf]
  %v2872 = vld [vmem:[%s3 + $0x120] sm:$0xff]
  %v2873 = vld [vmem:[%s3 + $0x128] sm:$0xff]
  %v2874 = vld [vmem:[%s3 + $0x130] sm:$0xff]
  %v2875 = vld [vmem:[%s3 + $0x138] sm:$0xff]
  %v2876 = vld [vmem:[%s3 + $0x140] sm:$0xf]
  %v2877 = vld [vmem:[%s3 + $0x144] sm:$0xff]
  %v2878 = vld [vmem:[%s3 + $0x14c] sm:$0xff]
  %v2879 = vld [vmem:[%s3 + $0x154] sm:$0xff]
  %v2880 = vld [vmem:[%s3 + $0x15c] sm:$0xff]
  %v2881 = vld [vmem:[%s3 + $0x164] sm:$0xf]
  %v2882 = vld [vmem:[%s3 + $0x168] sm:$0xff]
  %v2883 = vld [vmem:[%s3 + $0x170] sm:$0xff]
  %v2884 = vld [vmem:[%s3 + $0x178] sm:$0xff]
  %v2885 = vld [vmem:[%s3 + $0x180] sm:$0xff]
  %v2886 = vld [vmem:[%s3 + $0x188] sm:$0xf]
  %v2887 = vld [vmem:[%s3 + $0x18c] sm:$0xff]
  %v2888 = vld [vmem:[%s3 + $0x194] sm:$0xff]
  %v2889 = vld [vmem:[%s3 + $0x19c] sm:$0xff]
  %v2890 = vld [vmem:[%s3 + $0x1a4] sm:$0xff]
  %v2891 = vld [vmem:[%s3 + $0x1ac] sm:$0xf]
  %v2892 = vld [vmem:[%s3 + $0x1b0] sm:$0xff]
  %v2893 = vld [vmem:[%s3 + $0x1b8] sm:$0xff]
  %v2894 = vld [vmem:[%s3 + $0x1c0] sm:$0xff]
  %v2895 = vld [vmem:[%s3 + $0x1c8] sm:$0xff]
  %v2896 = vld [vmem:[%s3 + $0x1d0] sm:$0xf]
  %v2897 = vld [vmem:[%s3 + $0x1d4] sm:$0xff]
  %v2898 = vld [vmem:[%s3 + $0x1dc] sm:$0xff]
  %v2899 = vld [vmem:[%s3 + $0x1e4] sm:$0xff]
  %v2900 = vld [vmem:[%s3 + $0x1ec] sm:$0xff]
  %v2901 = vld [vmem:[%s3 + $0x1f4] sm:$0xf]
  %v2902 = vld [vmem:[%s3 + $0x1f8] sm:$0xff]
  %v2903 = vld [vmem:[%s3 + $0x200] sm:$0xff]
  %v2904 = vld [vmem:[%s3 + $0x208] sm:$0xff]
  %v2905 = vld [vmem:[%s3 + $0x210] sm:$0xff]
  %v2906 = vld [vmem:[%s3 + $0x218] sm:$0xf]
  %v2907 = vld [vmem:[%s3 + $0x21c] sm:$0xff]
  %v2908 = vld [vmem:[%s3 + $0x224] sm:$0xff]
  %v2909 = vld [vmem:[%s3 + $0x22c] sm:$0xff]
  %v2910 = vld [vmem:[%s3 + $0x234] sm:$0xff]
  %v2911 = vld [vmem:[%s3 + $0x23c] sm:$0xf]
  %v2992 = vunpack.c.l.b16 %v2832
  %v2993 = vunpack.c.h.b16 %v2832
  %v2994 = vunpack.c.l.b16 %v2833
  %v2995 = vunpack.c.h.b16 %v2833
  %v2996 = vunpack.c.l.b16 %v2834
  %v2997 = vunpack.c.h.b16 %v2834
  %v2998 = vunpack.c.l.b16 %v2835
  %v2999 = vunpack.c.h.b16 %v2835
  %v3000 = vunpack.c.l.b16 %v2836
  %v3001 = vunpack.c.l.b16 %v2837
  %v3002 = vunpack.c.h.b16 %v2837
  %v3003 = vunpack.c.l.b16 %v2838
  %v3004 = vunpack.c.h.b16 %v2838
  %v3005 = vunpack.c.l.b16 %v2839
  %v3006 = vunpack.c.h.b16 %v2839
  %v3007 = vunpack.c.l.b16 %v2840
  %v3008 = vunpack.c.h.b16 %v2840
  %v3009 = vunpack.c.l.b16 %v2841
  %v3010 = vunpack.c.l.b16 %v2842
  %v3011 = vunpack.c.h.b16 %v2842
  %v3012 = vunpack.c.l.b16 %v2843
  %v3013 = vunpack.c.h.b16 %v2843
  %v3014 = vunpack.c.l.b16 %v2844
  %v3015 = vunpack.c.h.b16 %v2844
  %v3016 = vunpack.c.l.b16 %v2845
  %v3017 = vunpack.c.h.b16 %v2845
  %v3018 = vunpack.c.l.b16 %v2846
  %v3019 = vunpack.c.l.b16 %v2847
  %v3020 = vunpack.c.h.b16 %v2847
  %v3021 = vunpack.c.l.b16 %v2848
  %v3022 = vunpack.c.h.b16 %v2848
  %v3023 = vunpack.c.l.b16 %v2849
  %v3024 = vunpack.c.h.b16 %v2849
  %v3025 = vunpack.c.l.b16 %v2850
  %v3026 = vunpack.c.h.b16 %v2850
  %v3027 = vunpack.c.l.b16 %v2851
  %v3028 = vunpack.c.l.b16 %v2852
  %v3029 = vunpack.c.h.b16 %v2852
  %v3030 = vunpack.c.l.b16 %v2853
  %v3031 = vunpack.c.h.b16 %v2853
  %v3032 = vunpack.c.l.b16 %v2854
  %v3033 = vunpack.c.h.b16 %v2854
  %v3034 = vunpack.c.l.b16 %v2855
  %v3035 = vunpack.c.h.b16 %v2855
  %v3036 = vunpack.c.l.b16 %v2856
  %v3037 = vunpack.c.l.b16 %v2857
  %v3038 = vunpack.c.h.b16 %v2857
  %v3039 = vunpack.c.l.b16 %v2858
  %v3040 = vunpack.c.h.b16 %v2858
  %v3041 = vunpack.c.l.b16 %v2859
  %v3042 = vunpack.c.h.b16 %v2859
  %v3043 = vunpack.c.l.b16 %v2860
  %v3044 = vunpack.c.h.b16 %v2860
  %v3045 = vunpack.c.l.b16 %v2861
  %v3046 = vunpack.c.l.b16 %v2862
  %v3047 = vunpack.c.h.b16 %v2862
  %v3048 = vunpack.c.l.b16 %v2863
  %v3049 = vunpack.c.h.b16 %v2863
  %v3050 = vunpack.c.l.b16 %v2864
  %v3051 = vunpack.c.h.b16 %v2864
  %v3052 = vunpack.c.l.b16 %v2865
  %v3053 = vunpack.c.h.b16 %v2865
  %v3054 = vunpack.c.l.b16 %v2866
  %v3055 = vunpack.c.l.b16 %v2867
  %v3056 = vunpack.c.h.b16 %v2867
  %v3057 = vunpack.c.l.b16 %v2868
  %v3058 = vunpack.c.h.b16 %v2868
  %v3059 = vunpack.c.l.b16 %v2869
  %v3060 = vunpack.c.h.b16 %v2869
  %v3061 = vunpack.c.l.b16 %v2870
  %v3062 = vunpack.c.h.b16 %v2870
  %v3063 = vunpack.c.l.b16 %v2871
  %v3064 = vunpack.c.l.b16 %v2872
  %v3065 = vunpack.c.h.b16 %v2872
  %v3066 = vunpack.c.l.b16 %v2873
  %v3067 = vunpack.c.h.b16 %v2873
  %v3068 = vunpack.c.l.b16 %v2874
  %v3069 = vunpack.c.h.b16 %v2874
  %v3070 = vunpack.c.l.b16 %v2875
  %v3071 = vunpack.c.h.b16 %v2875
  %v3072 = vunpack.c.l.b16 %v2876
  %v3073 = vunpack.c.l.b16 %v2877
  %v3074 = vunpack.c.h.b16 %v2877
  %v3075 = vunpack.c.l.b16 %v2878
  %v3076 = vunpack.c.h.b16 %v2878
  %v3077 = vunpack.c.l.b16 %v2879
  %v3078 = vunpack.c.h.b16 %v2879
  %v3079 = vunpack.c.l.b16 %v2880
  %v3080 = vunpack.c.h.b16 %v2880
  %v3081 = vunpack.c.l.b16 %v2881
  %v3082 = vunpack.c.l.b16 %v2882
  %v3083 = vunpack.c.h.b16 %v2882
  %v3084 = vunpack.c.l.b16 %v2883
  %v3085 = vunpack.c.h.b16 %v2883
  %v3086 = vunpack.c.l.b16 %v2884
  %v3087 = vunpack.c.h.b16 %v2884
  %v3088 = vunpack.c.l.b16 %v2885
  %v3089 = vunpack.c.h.b16 %v2885
  %v3090 = vunpack.c.l.b16 %v2886
  %v3091 = vunpack.c.l.b16 %v2887
  %v3092 = vunpack.c.h.b16 %v2887
  %v3093 = vunpack.c.l.b16 %v2888
  %v3094 = vunpack.c.h.b16 %v2888
  %v3095 = vunpack.c.l.b16 %v2889
  %v3096 = vunpack.c.h.b16 %v2889
  %v3097 = vunpack.c.l.b16 %v2890
  %v3098 = vunpack.c.h.b16 %v2890
  %v3099 = vunpack.c.l.b16 %v2891
  %v3100 = vunpack.c.l.b16 %v2892
  %v3101 = vunpack.c.h.b16 %v2892
  %v3102 = vunpack.c.l.b16 %v2893
  %v3103 = vunpack.c.h.b16 %v2893
  %v3104 = vunpack.c.l.b16 %v2894
  %v3105 = vunpack.c.h.b16 %v2894
  %v3106 = vunpack.c.l.b16 %v2895
  %v3107 = vunpack.c.h.b16 %v2895
  %v3108 = vunpack.c.l.b16 %v2896
  %v3109 = vunpack.c.l.b16 %v2897
  %v3110 = vunpack.c.h.b16 %v2897
  %v3111 = vunpack.c.l.b16 %v2898
  %v3112 = vunpack.c.h.b16 %v2898
  %v3113 = vunpack.c.l.b16 %v2899
  %v3114 = vunpack.c.h.b16 %v2899
  %v3115 = vunpack.c.l.b16 %v2900
  %v3116 = vunpack.c.h.b16 %v2900
  %v3117 = vunpack.c.l.b16 %v2901
  %v3118 = vunpack.c.l.b16 %v2902
  %v3119 = vunpack.c.h.b16 %v2902
  %v3120 = vunpack.c.l.b16 %v2903
  %v3121 = vunpack.c.h.b16 %v2903
  %v3122 = vunpack.c.l.b16 %v2904
  %v3123 = vunpack.c.h.b16 %v2904
  %v3124 = vunpack.c.l.b16 %v2905
  %v3125 = vunpack.c.h.b16 %v2905
  %v3126 = vunpack.c.l.b16 %v2906
  %v3127 = vunpack.c.l.b16 %v2907
  %v3128 = vunpack.c.h.b16 %v2907
  %v3129 = vunpack.c.l.b16 %v2908
  %v3130 = vunpack.c.h.b16 %v2908
  %v3131 = vunpack.c.l.b16 %v2909
  %v3132 = vunpack.c.h.b16 %v2909
  %v3133 = vunpack.c.l.b16 %v2910
  %v3134 = vunpack.c.h.b16 %v2910
  %v3135 = vunpack.c.l.b16 %v2911
  %v3136 = vpack.c.b16 %v3001, %v2992
  %v3137 = vpack.c.b16 %v3002, %v2993
  %v3138 = vpack.c.b16 %v3003, %v2994
  %v3139 = vpack.c.b16 %v3004, %v2995
  %v3140 = vpack.c.b16 %v3005, %v2996
  %v3141 = vpack.c.b16 %v3006, %v2997
  %v3142 = vpack.c.b16 %v3007, %v2998
  %v3143 = vpack.c.b16 %v3008, %v2999
  %v3144 = vpack.c.b16 %v3009, %v3000
  %v3145 = vpack.c.b16 %v3019, %v3010
  %v3146 = vpack.c.b16 %v3020, %v3011
  %v3147 = vpack.c.b16 %v3021, %v3012
  %v3148 = vpack.c.b16 %v3022, %v3013
  %v3149 = vpack.c.b16 %v3023, %v3014
  %v3150 = vpack.c.b16 %v3024, %v3015
  %v3151 = vpack.c.b16 %v3025, %v3016
  %v3152 = vpack.c.b16 %v3026, %v3017
  %v3153 = vpack.c.b16 %v3027, %v3018
  %v3154 = vpack.c.b16 %v3037, %v3028
  %v3155 = vpack.c.b16 %v3038, %v3029
  %v3156 = vpack.c.b16 %v3039, %v3030
  %v3157 = vpack.c.b16 %v3040, %v3031
  %v3158 = vpack.c.b16 %v3041, %v3032
  %v3159 = vpack.c.b16 %v3042, %v3033
  %v3160 = vpack.c.b16 %v3043, %v3034
  %v3161 = vpack.c.b16 %v3044, %v3035
  %v3162 = vpack.c.b16 %v3045, %v3036
  %v3163 = vpack.c.b16 %v3055, %v3046
  %v3164 = vpack.c.b16 %v3056, %v3047
  %v3165 = vpack.c.b16 %v3057, %v3048
  %v3166 = vpack.c.b16 %v3058, %v3049
  %v3167 = vpack.c.b16 %v3059, %v3050
  %v3168 = vpack.c.b16 %v3060, %v3051
  %v3169 = vpack.c.b16 %v3061, %v3052
  %v3170 = vpack.c.b16 %v3062, %v3053
  %v3171 = vpack.c.b16 %v3063, %v3054
  %v3172 = vpack.c.b16 %v3073, %v3064
  %v3173 = vpack.c.b16 %v3074, %v3065
  %v3174 = vpack.c.b16 %v3075, %v3066
  %v3175 = vpack.c.b16 %v3076, %v3067
  %v3176 = vpack.c.b16 %v3077, %v3068
  %v3177 = vpack.c.b16 %v3078, %v3069
  %v3178 = vpack.c.b16 %v3079, %v3070
  %v3179 = vpack.c.b16 %v3080, %v3071
  %v3180 = vpack.c.b16 %v3081, %v3072
  %v3181 = vpack.c.b16 %v3091, %v3082
  %v3182 = vpack.c.b16 %v3092, %v3083
  %v3183 = vpack.c.b16 %v3093, %v3084
  %v3184 = vpack.c.b16 %v3094, %v3085
  %v3185 = vpack.c.b16 %v3095, %v3086
  %v3186 = vpack.c.b16 %v3096, %v3087
  %v3187 = vpack.c.b16 %v3097, %v3088
  %v3188 = vpack.c.b16 %v3098, %v3089
  %v3189 = vpack.c.b16 %v3099, %v3090
  %v3190 = vpack.c.b16 %v3109, %v3100
  %v3191 = vpack.c.b16 %v3110, %v3101
  %v3192 = vpack.c.b16 %v3111, %v3102
  %v3193 = vpack.c.b16 %v3112, %v3103
  %v3194 = vpack.c.b16 %v3113, %v3104
  %v3195 = vpack.c.b16 %v3114, %v3105
  %v3196 = vpack.c.b16 %v3115, %v3106
  %v3197 = vpack.c.b16 %v3116, %v3107
  %v3198 = vpack.c.b16 %v3117, %v3108
  %v3199 = vpack.c.b16 %v3127, %v3118
  %v3200 = vpack.c.b16 %v3128, %v3119
  %v3201 = vpack.c.b16 %v3129, %v3120
  %v3202 = vpack.c.b16 %v3130, %v3121
  %v3203 = vpack.c.b16 %v3131, %v3122
  %v3204 = vpack.c.b16 %v3132, %v3123
  %v3205 = vpack.c.b16 %v3133, %v3124
  %v3206 = vpack.c.b16 %v3134, %v3125
  %v3207 = vpack.c.b16 %v3135, %v3126
  %3280 = vmatpush.bf16.msra.mxu0 %v3199
  %3281 = vmatpush.bf16.msra.mxu0 %v3190
  %3282 = vmatpush.bf16.msra.mxu0 %v3181
  %3283 = vmatpush.bf16.msra.mxu0 %v3172
  %3284 = vmatpush.bf16.msra.mxu0 %v3163
  %3285 = vmatpush.bf16.msra.mxu0 %v3154
  %3286 = vmatpush.bf16.msra.mxu0 %v3145
  %3287 = vmatpush.bf16.msra.mxu0 %v3136
  %3288 = vmatmul.bf16.gmra.mxu0 %v2831
  %v3289 = vpop.f32.mrf.mxu0
  %v3290 = vadd.f32 0.0, %v3289
  %v3291 = vpop.f32.mrf.mxu0
  %3292 = vdwg.mxu0
  %3293 = vmatpush.bf16.msra.mxu0 %v3200
  %3294 = vmatpush.bf16.msra.mxu0 %v3191
  %3295 = vmatpush.bf16.msra.mxu0 %v3182
  %3296 = vmatpush.bf16.msra.mxu0 %v3173
  %3297 = vmatpush.bf16.msra.mxu0 %v3164
  %3298 = vmatpush.bf16.msra.mxu0 %v3155
  %3299 = vmatpush.bf16.msra.mxu0 %v3146
  %3300 = vmatpush.bf16.msra.mxu0 %v3137
  %3301 = vmatmul.bf16.gmra.mxu0 %v2831
  %v3302 = vpop.f32.mrf.mxu0
  %v3303 = vadd.f32 0.0, %v3302
  %v3304 = vpop.f32.mrf.mxu0
  %3305 = vdwg.mxu0
  %3306 = vmatpush.bf16.msra.mxu0 %v3201
  %3307 = vmatpush.bf16.msra.mxu0 %v3192
  %3308 = vmatpush.bf16.msra.mxu0 %v3183
  %3309 = vmatpush.bf16.msra.mxu0 %v3174
  %3310 = vmatpush.bf16.msra.mxu0 %v3165
  %3311 = vmatpush.bf16.msra.mxu0 %v3156
  %3312 = vmatpush.bf16.msra.mxu0 %v3147
  %3313 = vmatpush.bf16.msra.mxu0 %v3138
  %3314 = vmatmul.bf16.gmra.mxu0 %v2831
  %v3315 = vpop.f32.mrf.mxu0
  %v3316 = vadd.f32 0.0, %v3315
  %v3317 = vpop.f32.mrf.mxu0
  %3318 = vdwg.mxu0
  %3319 = vmatpush.bf16.msra.mxu0 %v3202
  %3320 = vmatpush.bf16.msra.mxu0 %v3193
  %3321 = vmatpush.bf16.msra.mxu0 %v3184
  %3322 = vmatpush.bf16.msra.mxu0 %v3175
  %3323 = vmatpush.bf16.msra.mxu0 %v3166
  %3324 = vmatpush.bf16.msra.mxu0 %v3157
  %3325 = vmatpush.bf16.msra.mxu0 %v3148
  %3326 = vmatpush.bf16.msra.mxu0 %v3139
  %3327 = vmatmul.bf16.gmra.mxu0 %v2831
  %v3328 = vpop.f32.mrf.mxu0
  %v3329 = vadd.f32 0.0, %v3328
  %v3330 = vpop.f32.mrf.mxu0
  %3331 = vdwg.mxu0
  %3332 = vmatpush.bf16.msra.mxu0 %v3203
  %3333 = vmatpush.bf16.msra.mxu0 %v3194
  %3334 = vmatpush.bf16.msra.mxu0 %v3185
  %3335 = vmatpush.bf16.msra.mxu0 %v3176
  %3336 = vmatpush.bf16.msra.mxu0 %v3167
  %3337 = vmatpush.bf16.msra.mxu0 %v3158
  %3338 = vmatpush.bf16.msra.mxu0 %v3149
  %3339 = vmatpush.bf16.msra.mxu0 %v3140
  %3340 = vmatmul.bf16.gmra.mxu0 %v2831
  %v3341 = vpop.f32.mrf.mxu0
  %v3342 = vadd.f32 0.0, %v3341
  %v3343 = vpop.f32.mrf.mxu0
  %3344 = vdwg.mxu0
  %3345 = vmatpush.bf16.msra.mxu0 %v3204
  %3346 = vmatpush.bf16.msra.mxu0 %v3195
  %3347 = vmatpush.bf16.msra.mxu0 %v3186
  %3348 = vmatpush.bf16.msra.mxu0 %v3177
  %3349 = vmatpush.bf16.msra.mxu0 %v3168
  %3350 = vmatpush.bf16.msra.mxu0 %v3159
  %3351 = vmatpush.bf16.msra.mxu0 %v3150
  %3352 = vmatpush.bf16.msra.mxu0 %v3141
  %3353 = vmatmul.bf16.gmra.mxu0 %v2831
  %v3354 = vpop.f32.mrf.mxu0
  %v3355 = vadd.f32 0.0, %v3354
  %v3356 = vpop.f32.mrf.mxu0
  %3357 = vdwg.mxu0
  %3358 = vmatpush.bf16.msra.mxu0 %v3205
  %3359 = vmatpush.bf16.msra.mxu0 %v3196
  %3360 = vmatpush.bf16.msra.mxu0 %v3187
  %3361 = vmatpush.bf16.msra.mxu0 %v3178
  %3362 = vmatpush.bf16.msra.mxu0 %v3169
  %3363 = vmatpush.bf16.msra.mxu0 %v3160
  %3364 = vmatpush.bf16.msra.mxu0 %v3151
  %3365 = vmatpush.bf16.msra.mxu0 %v3142
  %3366 = vmatmul.bf16.gmra.mxu0 %v2831
  %v3367 = vpop.f32.mrf.mxu0
  %v3368 = vadd.f32 0.0, %v3367
  %v3369 = vpop.f32.mrf.mxu0
  %3370 = vdwg.mxu0
  %3371 = vmatpush.bf16.msra.mxu0 %v3206
  %3372 = vmatpush.bf16.msra.mxu0 %v3197
  %3373 = vmatpush.bf16.msra.mxu0 %v3188
  %3374 = vmatpush.bf16.msra.mxu0 %v3179
  %3375 = vmatpush.bf16.msra.mxu0 %v3170
  %3376 = vmatpush.bf16.msra.mxu0 %v3161
  %3377 = vmatpush.bf16.msra.mxu0 %v3152
  %3378 = vmatpush.bf16.msra.mxu0 %v3143
  %3379 = vmatmul.bf16.gmra.mxu0 %v2831
  %v3380 = vpop.f32.mrf.mxu0
  %v3381 = vadd.f32 0.0, %v3380
  %v3382 = vpop.f32.mrf.mxu0
  %3383 = vdwg.mxu0
  %3384 = vmatpush.bf16.msra.mxu0 %v3207
  %3385 = vmatpush.bf16.msra.mxu0 %v3198
  %3386 = vmatpush.bf16.msra.mxu0 %v3189
  %3387 = vmatpush.bf16.msra.mxu0 %v3180
  %3388 = vmatpush.bf16.msra.mxu0 %v3171
  %3389 = vmatpush.bf16.msra.mxu0 %v3162
  %3390 = vmatpush.bf16.msra.mxu0 %v3153
  %3391 = vmatpush.bf16.msra.mxu0 %v3144
  %3392 = vmatmul.bf16.gmra.mxu0 %v2831
  %v3393 = vpop.f32.mrf.mxu0
  %v3394 = vadd.f32 0.0, %v3393
  %v3395 = vpop.f32.mrf.mxu0
  %3396 = vdwg.mxu0
  %3397 = vst [vmem:[#allocation2] sm:$0x3] %v3290
  %3398 = vst [vmem:[#allocation2 + $0x2] sm:$0x3] %v3303
  %3399 = vst [vmem:[#allocation2 + $0x4] sm:$0x3] %v3316
  %3400 = vst [vmem:[#allocation2 + $0x6] sm:$0x3] %v3329
  %3401 = vst [vmem:[#allocation2 + $0x8] sm:$0x3] %v3342
  %3402 = vst [vmem:[#allocation2 + $0xa] sm:$0x3] %v3355
  %3403 = vst [vmem:[#allocation2 + $0xc] sm:$0x3] %v3368
  %3404 = vst [vmem:[#allocation2 + $0xe] sm:$0x3] %v3381
  %3405 = vst [vmem:[#allocation2 + $0x10] sm:$0x3] %v3394
  %s3406 = scalar_lea.vmem %s0, 96
  %v3407 = vld [vmem:[%s3406] sm:$0xff]
  %v3408 = vld [vmem:[%s3406 + $0x8] sm:$0xff]
  %v3409 = vld [vmem:[%s3406 + $0x10] sm:$0xff]
  %v3410 = vld [vmem:[%s3406 + $0x18] sm:$0xff]
  %v3411 = vld [vmem:[%s4] sm:$0xf]
  %v3412 = vld [vmem:[%s4 + $0x4] sm:$0xf]
  %v3413 = vld [vmem:[%s4 + $0x8] sm:$0xf]
  %v3414 = vld [vmem:[%s4 + $0xc] sm:$0xf]
  %v3415 = vld [vmem:[#allocation2] sm:$0xff]
  %v3416 = vld [vmem:[#allocation2 + $0x8] sm:$0xff]
  %v3417 = vld [vmem:[#allocation2 + $0x10] sm:$0x3]
  %v3418 = vpack.c.bf16 %v3416, %v3415
  %v3419 = vpack.c.bf16 %v3417, %v3417
  %v3424 = vunpack.c.l.b16 %v3411
  %v3425 = vunpack.c.l.b16 %v3412
  %v3426 = vunpack.c.l.b16 %v3413
  %v3427 = vunpack.c.l.b16 %v3414
  %v3428 = vpack.c.b16 %v3425, %v3424
  %v3429 = vpack.c.b16 %v3427, %v3426
  %v3431 = vsel %vm627, %v3428, 0
  %v3434 = vsel %vm627, %v3429, 0
  %v3437 = vsel %vm634, %v3419, 0
  %3439 = vmatpush.bf16.msra.mxu0 0
  %3440 = vmatpush.bf16.msra.mxu0 0
  %3441 = vmatpush.bf16.msra.mxu0 0
  %3442 = vmatpush.bf16.msra.mxu0 0
  %3443 = vmatpush.bf16.msra.mxu0 0
  %3444 = vmatpush.bf16.msra.mxu0 0
  %3445 = vmatpush.bf16.msra.mxu0 %v3437
  %3446 = vmatpush.bf16.msra.mxu0 %v3418
  %3447 = vmatmul.bf16.gmra.mxu0 %v3431
  %v3448 = vpop.f32.mrf.mxu0
  %v3449 = vadd.f32 0.0, %v3448
  %v3450 = vpop.f32.mrf.mxu0
  %v3451 = vadd.f32 0.0, %v3450
  %3452 = vmatmul.bf16.gmra.mxu0 %v3434
  %v3453 = vpop.f32.mrf.mxu0
  %v3454 = vadd.f32 0.0, %v3453
  %v3455 = vpop.f32.mrf.mxu0
  %v3456 = vadd.f32 0.0, %v3455
  %3457 = vdwg.mxu0
  %v3458 = vadd.f32 %v3407, %v3449
  %v3459 = vadd.f32 %v3408, %v3451
  %v3460 = vadd.f32 %v3409, %v3454
  %v3461 = vadd.f32 %v3410, %v3456
  %v3462 = vmul.f32 %v3458, %v3458
  %v3463 = vmul.f32 %v3459, %v3459
  %v3464 = vmul.f32 %v3460, %v3460
  %v3465 = vmul.f32 %v3461, %v3461
  %v3466 = vmul.f32 %v3458, %v3462
  %v3467 = vmul.f32 %v3459, %v3463
  %v3468 = vmul.f32 %v3460, %v3464
  %v3469 = vmul.f32 %v3461, %v3465
  %v3470 = vmul.f32 %v3466, 0.044715
  %v3471 = vmul.f32 %v3467, 0.044715
  %v3472 = vmul.f32 %v3468, 0.044715
  %v3473 = vmul.f32 %v3469, 0.044715
  %v3474 = vadd.f32 %v3458, %v3470
  %v3475 = vadd.f32 %v3459, %v3471
  %v3476 = vadd.f32 %v3460, %v3472
  %v3477 = vadd.f32 %v3461, %v3473
  %v3478 = vmul.f32 %v3474, 0.7978846
  %v3479 = vmul.f32 %v3475, 0.7978846
  %v3480 = vmul.f32 %v3476, 0.7978846
  %v3481 = vmul.f32 %v3477, 0.7978846
  %v3482 = vtanh.pop %v3478
  %v3483 = vtanh.pop %v3479
  %v3484 = vtanh.pop %v3480
  %v3485 = vtanh.pop %v3481
  %v3486 = vadd.f32 %v3482, 1.0
  %v3487 = vadd.f32 %v3483, 1.0
  %v3488 = vadd.f32 %v3484, 1.0
  %v3489 = vadd.f32 %v3485, 1.0
  %v3490 = vmul.f32 %v3486, 0.5
  %v3491 = vmul.f32 %v3487, 0.5
  %v3492 = vmul.f32 %v3488, 0.5
  %v3493 = vmul.f32 %v3489, 0.5
  %v3494 = vmul.f32 %v3458, %v3490
  %v3495 = vmul.f32 %v3459, %v3491
  %v3496 = vmul.f32 %v3460, %v3492
  %v3497 = vmul.f32 %v3461, %v3493
  %v3498 = vld [vmem:[%s5] sm:$0x1]
  %v3499 = vpack.c.bf16 %v3495, %v3494
  %v3500 = vpack.c.bf16 %v3497, %v3496
  %v3501 = vld [vmem:[%s6] sm:$0x3]
  %3503 = vset.pattern.permute.xlu0 0
  %3504 = vperm.xlu0 %3503, %v3501
  %v3505 = vpop.permute.xlu0 %3504
  %v3508 = vsel %vm706, %v3498, 0
  %3510 = vmatpush.bf16.msra.mxu0 0
  %3511 = vmatpush.bf16.msra.mxu0 0
  %3512 = vmatpush.bf16.msra.mxu0 0
  %3513 = vmatpush.bf16.msra.mxu0 0
  %3514 = vmatpush.bf16.msra.mxu0 0
  %3515 = vmatpush.bf16.msra.mxu0 0
  %3516 = vmatpush.bf16.msra.mxu0 %v3500
  %3517 = vmatpush.bf16.msra.mxu0 %v3499
  %3518 = vmatmul.bf16.gmra.mxu0 %v3508
  %v3519 = vpop.f32.mrf.mxu0
  %v3520 = vadd.f32 %v3505, %v3519
  %v3521 = vpop.f32.mrf.mxu0
  %3522 = vdwg.mxu0
  %v3523 = vmax.f32 %v3520, -1.0
  %v3524 = vmin.f32 %v3523, 1.0
  %v3525 = vmul.f32 %v3524, 0.4547193
  %v3526 = vmul.f32 %v2830, 0.5300119
  %v3527 = vadd.f32 %v3525, %v3526
  %s3528 = scalar_lea.vmem %s2, 4
  %v3529 = vld [vmem:[%s3528] sm:$0x3]
  %v3530 = vadd.f32 %v3527, %v3529
  %v3531 = vpack.c.bf16 %v3530, %v3530
  %v3532 = vld [vmem:[%s3] sm:$0xff]
  %v3533 = vld [vmem:[%s3 + $0x8] sm:$0xff]
  %v3534 = vld [vmem:[%s3 + $0x10] sm:$0xff]
  %v3535 = vld [vmem:[%s3 + $0x18] sm:$0xff]
  %v3536 = vld [vmem:[%s3 + $0x20] sm:$0xf]
  %v3537 = vld [vmem:[%s3 + $0x24] sm:$0xff]
  %v3538 = vld [vmem:[%s3 + $0x2c] sm:$0xff]
  %v3539 = vld [vmem:[%s3 + $0x34] sm:$0xff]
  %v3540 = vld [vmem:[%s3 + $0x3c] sm:$0xff]
  %v3541 = vld [vmem:[%s3 + $0x44] sm:$0xf]
  %v3542 = vld [vmem:[%s3 + $0x48] sm:$0xff]
  %v3543 = vld [vmem:[%s3 + $0x50] sm:$0xff]
  %v3544 = vld [vmem:[%s3 + $0x58] sm:$0xff]
  %v3545 = vld [vmem:[%s3 + $0x60] sm:$0xff]
  %v3546 = vld [vmem:[%s3 + $0x68] sm:$0xf]
  %v3547 = vld [vmem:[%s3 + $0x6c] sm:$0xff]
  %v3548 = vld [vmem:[%s3 + $0x74] sm:$0xff]
  %v3549 = vld [vmem:[%s3 + $0x7c] sm:$0xff]
  %v3550 = vld [vmem:[%s3 + $0x84] sm:$0xff]
  %v3551 = vld [vmem:[%s3 + $0x8c] sm:$0xf]
  %v3552 = vld [vmem:[%s3 + $0x90] sm:$0xff]
  %v3553 = vld [vmem:[%s3 + $0x98] sm:$0xff]
  %v3554 = vld [vmem:[%s3 + $0xa0] sm:$0xff]
  %v3555 = vld [vmem:[%s3 + $0xa8] sm:$0xff]
  %v3556 = vld [vmem:[%s3 + $0xb0] sm:$0xf]
  %v3557 = vld [vmem:[%s3 + $0xb4] sm:$0xff]
  %v3558 = vld [vmem:[%s3 + $0xbc] sm:$0xff]
  %v3559 = vld [vmem:[%s3 + $0xc4] sm:$0xff]
  %v3560 = vld [vmem:[%s3 + $0xcc] sm:$0xff]
  %v3561 = vld [vmem:[%s3 + $0xd4] sm:$0xf]
  %v3562 = vld [vmem:[%s3 + $0xd8] sm:$0xff]
  %v3563 = vld [vmem:[%s3 + $0xe0] sm:$0xff]
  %v3564 = vld [vmem:[%s3 + $0xe8] sm:$0xff]
  %v3565 = vld [vmem:[%s3 + $0xf0] sm:$0xff]
  %v3566 = vld [vmem:[%s3 + $0xf8] sm:$0xf]
  %v3567 = vld [vmem:[%s3 + $0xfc] sm:$0xff]
  %v3568 = vld [vmem:[%s3 + $0x104] sm:$0xff]
  %v3569 = vld [vmem:[%s3 + $0x10c] sm:$0xff]
  %v3570 = vld [vmem:[%s3 + $0x114] sm:$0xff]
  %v3571 = vld [vmem:[%s3 + $0x11c] sm:$0xf]
  %v3572 = vld [vmem:[%s3 + $0x120] sm:$0xff]
  %v3573 = vld [vmem:[%s3 + $0x128] sm:$0xff]
  %v3574 = vld [vmem:[%s3 + $0x130] sm:$0xff]
  %v3575 = vld [vmem:[%s3 + $0x138] sm:$0xff]
  %v3576 = vld [vmem:[%s3 + $0x140] sm:$0xf]
  %v3577 = vld [vmem:[%s3 + $0x144] sm:$0xff]
  %v3578 = vld [vmem:[%s3 + $0x14c] sm:$0xff]
  %v3579 = vld [vmem:[%s3 + $0x154] sm:$0xff]
  %v3580 = vld [vmem:[%s3 + $0x15c] sm:$0xff]
  %v3581 = vld [vmem:[%s3 + $0x164] sm:$0xf]
  %v3582 = vld [vmem:[%s3 + $0x168] sm:$0xff]
  %v3583 = vld [vmem:[%s3 + $0x170] sm:$0xff]
  %v3584 = vld [vmem:[%s3 + $0x178] sm:$0xff]
  %v3585 = vld [vmem:[%s3 + $0x180] sm:$0xff]
  %v3586 = vld [vmem:[%s3 + $0x188] sm:$0xf]
  %v3587 = vld [vmem:[%s3 + $0x18c] sm:$0xff]
  %v3588 = vld [vmem:[%s3 + $0x194] sm:$0xff]
  %v3589 = vld [vmem:[%s3 + $0x19c] sm:$0xff]
  %v3590 = vld [vmem:[%s3 + $0x1a4] sm:$0xff]
  %v3591 = vld [vmem:[%s3 + $0x1ac] sm:$0xf]
  %v3592 = vld [vmem:[%s3 + $0x1b0] sm:$0xff]
  %v3593 = vld [vmem:[%s3 + $0x1b8] sm:$0xff]
  %v3594 = vld [vmem:[%s3 + $0x1c0] sm:$0xff]
  %v3595 = vld [vmem:[%s3 + $0x1c8] sm:$0xff]
  %v3596 = vld [vmem:[%s3 + $0x1d0] sm:$0xf]
  %v3597 = vld [vmem:[%s3 + $0x1d4] sm:$0xff]
  %v3598 = vld [vmem:[%s3 + $0x1dc] sm:$0xff]
  %v3599 = vld [vmem:[%s3 + $0x1e4] sm:$0xff]
  %v3600 = vld [vmem:[%s3 + $0x1ec] sm:$0xff]
  %v3601 = vld [vmem:[%s3 + $0x1f4] sm:$0xf]
  %v3602 = vld [vmem:[%s3 + $0x1f8] sm:$0xff]
  %v3603 = vld [vmem:[%s3 + $0x200] sm:$0xff]
  %v3604 = vld [vmem:[%s3 + $0x208] sm:$0xff]
  %v3605 = vld [vmem:[%s3 + $0x210] sm:$0xff]
  %v3606 = vld [vmem:[%s3 + $0x218] sm:$0xf]
  %v3607 = vld [vmem:[%s3 + $0x21c] sm:$0xff]
  %v3608 = vld [vmem:[%s3 + $0x224] sm:$0xff]
  %v3609 = vld [vmem:[%s3 + $0x22c] sm:$0xff]
  %v3610 = vld [vmem:[%s3 + $0x234] sm:$0xff]
  %v3611 = vld [vmem:[%s3 + $0x23c] sm:$0xf]
  %v3692 = vunpack.c.l.b16 %v3532
  %v3693 = vunpack.c.h.b16 %v3532
  %v3694 = vunpack.c.l.b16 %v3533
  %v3695 = vunpack.c.h.b16 %v3533
  %v3696 = vunpack.c.l.b16 %v3534
  %v3697 = vunpack.c.h.b16 %v3534
  %v3698 = vunpack.c.l.b16 %v3535
  %v3699 = vunpack.c.h.b16 %v3535
  %v3700 = vunpack.c.l.b16 %v3536
  %v3701 = vunpack.c.l.b16 %v3537
  %v3702 = vunpack.c.h.b16 %v3537
  %v3703 = vunpack.c.l.b16 %v3538
  %v3704 = vunpack.c.h.b16 %v3538
  %v3705 = vunpack.c.l.b16 %v3539
  %v3706 = vunpack.c.h.b16 %v3539
  %v3707 = vunpack.c.l.b16 %v3540
  %v3708 = vunpack.c.h.b16 %v3540
  %v3709 = vunpack.c.l.b16 %v3541
  %v3710 = vunpack.c.l.b16 %v3542
  %v3711 = vunpack.c.h.b16 %v3542
  %v3712 = vunpack.c.l.b16 %v3543
  %v3713 = vunpack.c.h.b16 %v3543
  %v3714 = vunpack.c.l.b16 %v3544
  %v3715 = vunpack.c.h.b16 %v3544
  %v3716 = vunpack.c.l.b16 %v3545
  %v3717 = vunpack.c.h.b16 %v3545
  %v3718 = vunpack.c.l.b16 %v3546
  %v3719 = vunpack.c.l.b16 %v3547
  %v3720 = vunpack.c.h.b16 %v3547
  %v3721 = vunpack.c.l.b16 %v3548
  %v3722 = vunpack.c.h.b16 %v3548
  %v3723 = vunpack.c.l.b16 %v3549
  %v3724 = vunpack.c.h.b16 %v3549
  %v3725 = vunpack.c.l.b16 %v3550
  %v3726 = vunpack.c.h.b16 %v3550
  %v3727 = vunpack.c.l.b16 %v3551
  %v3728 = vunpack.c.l.b16 %v3552
  %v3729 = vunpack.c.h.b16 %v3552
  %v3730 = vunpack.c.l.b16 %v3553
  %v3731 = vunpack.c.h.b16 %v3553
  %v3732 = vunpack.c.l.b16 %v3554
  %v3733 = vunpack.c.h.b16 %v3554
  %v3734 = vunpack.c.l.b16 %v3555
  %v3735 = vunpack.c.h.b16 %v3555
  %v3736 = vunpack.c.l.b16 %v3556
  %v3737 = vunpack.c.l.b16 %v3557
  %v3738 = vunpack.c.h.b16 %v3557
  %v3739 = vunpack.c.l.b16 %v3558
  %v3740 = vunpack.c.h.b16 %v3558
  %v3741 = vunpack.c.l.b16 %v3559
  %v3742 = vunpack.c.h.b16 %v3559
  %v3743 = vunpack.c.l.b16 %v3560
  %v3744 = vunpack.c.h.b16 %v3560
  %v3745 = vunpack.c.l.b16 %v3561
  %v3746 = vunpack.c.l.b16 %v3562
  %v3747 = vunpack.c.h.b16 %v3562
  %v3748 = vunpack.c.l.b16 %v3563
  %v3749 = vunpack.c.h.b16 %v3563
  %v3750 = vunpack.c.l.b16 %v3564
  %v3751 = vunpack.c.h.b16 %v3564
  %v3752 = vunpack.c.l.b16 %v3565
  %v3753 = vunpack.c.h.b16 %v3565
  %v3754 = vunpack.c.l.b16 %v3566
  %v3755 = vunpack.c.l.b16 %v3567
  %v3756 = vunpack.c.h.b16 %v3567
  %v3757 = vunpack.c.l.b16 %v3568
  %v3758 = vunpack.c.h.b16 %v3568
  %v3759 = vunpack.c.l.b16 %v3569
  %v3760 = vunpack.c.h.b16 %v3569
  %v3761 = vunpack.c.l.b16 %v3570
  %v3762 = vunpack.c.h.b16 %v3570
  %v3763 = vunpack.c.l.b16 %v3571
  %v3764 = vunpack.c.l.b16 %v3572
  %v3765 = vunpack.c.h.b16 %v3572
  %v3766 = vunpack.c.l.b16 %v3573
  %v3767 = vunpack.c.h.b16 %v3573
  %v3768 = vunpack.c.l.b16 %v3574
  %v3769 = vunpack.c.h.b16 %v3574
  %v3770 = vunpack.c.l.b16 %v3575
  %v3771 = vunpack.c.h.b16 %v3575
  %v3772 = vunpack.c.l.b16 %v3576
  %v3773 = vunpack.c.l.b16 %v3577
  %v3774 = vunpack.c.h.b16 %v3577
  %v3775 = vunpack.c.l.b16 %v3578
  %v3776 = vunpack.c.h.b16 %v3578
  %v3777 = vunpack.c.l.b16 %v3579
  %v3778 = vunpack.c.h.b16 %v3579
  %v3779 = vunpack.c.l.b16 %v3580
  %v3780 = vunpack.c.h.b16 %v3580
  %v3781 = vunpack.c.l.b16 %v3581
  %v3782 = vunpack.c.l.b16 %v3582
  %v3783 = vunpack.c.h.b16 %v3582
  %v3784 = vunpack.c.l.b16 %v3583
  %v3785 = vunpack.c.h.b16 %v3583
  %v3786 = vunpack.c.l.b16 %v3584
  %v3787 = vunpack.c.h.b16 %v3584
  %v3788 = vunpack.c.l.b16 %v3585
  %v3789 = vunpack.c.h.b16 %v3585
  %v3790 = vunpack.c.l.b16 %v3586
  %v3791 = vunpack.c.l.b16 %v3587
  %v3792 = vunpack.c.h.b16 %v3587
  %v3793 = vunpack.c.l.b16 %v3588
  %v3794 = vunpack.c.h.b16 %v3588
  %v3795 = vunpack.c.l.b16 %v3589
  %v3796 = vunpack.c.h.b16 %v3589
  %v3797 = vunpack.c.l.b16 %v3590
  %v3798 = vunpack.c.h.b16 %v3590
  %v3799 = vunpack.c.l.b16 %v3591
  %v3800 = vunpack.c.l.b16 %v3592
  %v3801 = vunpack.c.h.b16 %v3592
  %v3802 = vunpack.c.l.b16 %v3593
  %v3803 = vunpack.c.h.b16 %v3593
  %v3804 = vunpack.c.l.b16 %v3594
  %v3805 = vunpack.c.h.b16 %v3594
  %v3806 = vunpack.c.l.b16 %v3595
  %v3807 = vunpack.c.h.b16 %v3595
  %v3808 = vunpack.c.l.b16 %v3596
  %v3809 = vunpack.c.l.b16 %v3597
  %v3810 = vunpack.c.h.b16 %v3597
  %v3811 = vunpack.c.l.b16 %v3598
  %v3812 = vunpack.c.h.b16 %v3598
  %v3813 = vunpack.c.l.b16 %v3599
  %v3814 = vunpack.c.h.b16 %v3599
  %v3815 = vunpack.c.l.b16 %v3600
  %v3816 = vunpack.c.h.b16 %v3600
  %v3817 = vunpack.c.l.b16 %v3601
  %v3818 = vunpack.c.l.b16 %v3602
  %v3819 = vunpack.c.h.b16 %v3602
  %v3820 = vunpack.c.l.b16 %v3603
  %v3821 = vunpack.c.h.b16 %v3603
  %v3822 = vunpack.c.l.b16 %v3604
  %v3823 = vunpack.c.h.b16 %v3604
  %v3824 = vunpack.c.l.b16 %v3605
  %v3825 = vunpack.c.h.b16 %v3605
  %v3826 = vunpack.c.l.b16 %v3606
  %v3827 = vunpack.c.l.b16 %v3607
  %v3828 = vunpack.c.h.b16 %v3607
  %v3829 = vunpack.c.l.b16 %v3608
  %v3830 = vunpack.c.h.b16 %v3608
  %v3831 = vunpack.c.l.b16 %v3609
  %v3832 = vunpack.c.h.b16 %v3609
  %v3833 = vunpack.c.l.b16 %v3610
  %v3834 = vunpack.c.h.b16 %v3610
  %v3835 = vunpack.c.l.b16 %v3611
  %v3836 = vpack.c.b16 %v3701, %v3692
  %v3837 = vpack.c.b16 %v3702, %v3693
  %v3838 = vpack.c.b16 %v3703, %v3694
  %v3839 = vpack.c.b16 %v3704, %v3695
  %v3840 = vpack.c.b16 %v3705, %v3696
  %v3841 = vpack.c.b16 %v3706, %v3697
  %v3842 = vpack.c.b16 %v3707, %v3698
  %v3843 = vpack.c.b16 %v3708, %v3699
  %v3844 = vpack.c.b16 %v3709, %v3700
  %v3845 = vpack.c.b16 %v3719, %v3710
  %v3846 = vpack.c.b16 %v3720, %v3711
  %v3847 = vpack.c.b16 %v3721, %v3712
  %v3848 = vpack.c.b16 %v3722, %v3713
  %v3849 = vpack.c.b16 %v3723, %v3714
  %v3850 = vpack.c.b16 %v3724, %v3715
  %v3851 = vpack.c.b16 %v3725, %v3716
  %v3852 = vpack.c.b16 %v3726, %v3717
  %v3853 = vpack.c.b16 %v3727, %v3718
  %v3854 = vpack.c.b16 %v3737, %v3728
  %v3855 = vpack.c.b16 %v3738, %v3729
  %v3856 = vpack.c.b16 %v3739, %v3730
  %v3857 = vpack.c.b16 %v3740, %v3731
  %v3858 = vpack.c.b16 %v3741, %v3732
  %v3859 = vpack.c.b16 %v3742, %v3733
  %v3860 = vpack.c.b16 %v3743, %v3734
  %v3861 = vpack.c.b16 %v3744, %v3735
  %v3862 = vpack.c.b16 %v3745, %v3736
  %v3863 = vpack.c.b16 %v3755, %v3746
  %v3864 = vpack.c.b16 %v3756, %v3747
  %v3865 = vpack.c.b16 %v3757, %v3748
  %v3866 = vpack.c.b16 %v3758, %v3749
  %v3867 = vpack.c.b16 %v3759, %v3750
  %v3868 = vpack.c.b16 %v3760, %v3751
  %v3869 = vpack.c.b16 %v3761, %v3752
  %v3870 = vpack.c.b16 %v3762, %v3753
  %v3871 = vpack.c.b16 %v3763, %v3754
  %v3872 = vpack.c.b16 %v3773, %v3764
  %v3873 = vpack.c.b16 %v3774, %v3765
  %v3874 = vpack.c.b16 %v3775, %v3766
  %v3875 = vpack.c.b16 %v3776, %v3767
  %v3876 = vpack.c.b16 %v3777, %v3768
  %v3877 = vpack.c.b16 %v3778, %v3769
  %v3878 = vpack.c.b16 %v3779, %v3770
  %v3879 = vpack.c.b16 %v3780, %v3771
  %v3880 = vpack.c.b16 %v3781, %v3772
  %v3881 = vpack.c.b16 %v3791, %v3782
  %v3882 = vpack.c.b16 %v3792, %v3783
  %v3883 = vpack.c.b16 %v3793, %v3784
  %v3884 = vpack.c.b16 %v3794, %v3785
  %v3885 = vpack.c.b16 %v3795, %v3786
  %v3886 = vpack.c.b16 %v3796, %v3787
  %v3887 = vpack.c.b16 %v3797, %v3788
  %v3888 = vpack.c.b16 %v3798, %v3789
  %v3889 = vpack.c.b16 %v3799, %v3790
  %v3890 = vpack.c.b16 %v3809, %v3800
  %v3891 = vpack.c.b16 %v3810, %v3801
  %v3892 = vpack.c.b16 %v3811, %v3802
  %v3893 = vpack.c.b16 %v3812, %v3803
  %v3894 = vpack.c.b16 %v3813, %v3804
  %v3895 = vpack.c.b16 %v3814, %v3805
  %v3896 = vpack.c.b16 %v3815, %v3806
  %v3897 = vpack.c.b16 %v3816, %v3807
  %v3898 = vpack.c.b16 %v3817, %v3808
  %v3899 = vpack.c.b16 %v3827, %v3818
  %v3900 = vpack.c.b16 %v3828, %v3819
  %v3901 = vpack.c.b16 %v3829, %v3820
  %v3902 = vpack.c.b16 %v3830, %v3821
  %v3903 = vpack.c.b16 %v3831, %v3822
  %v3904 = vpack.c.b16 %v3832, %v3823
  %v3905 = vpack.c.b16 %v3833, %v3824
  %v3906 = vpack.c.b16 %v3834, %v3825
  %v3907 = vpack.c.b16 %v3835, %v3826
  %3980 = vmatpush.bf16.msra.mxu0 %v3899
  %3981 = vmatpush.bf16.msra.mxu0 %v3890
  %3982 = vmatpush.bf16.msra.mxu0 %v3881
  %3983 = vmatpush.bf16.msra.mxu0 %v3872
  %3984 = vmatpush.bf16.msra.mxu0 %v3863
  %3985 = vmatpush.bf16.msra.mxu0 %v3854
  %3986 = vmatpush.bf16.msra.mxu0 %v3845
  %3987 = vmatpush.bf16.msra.mxu0 %v3836
  %3988 = vmatmul.bf16.gmra.mxu0 %v3531
  %v3989 = vpop.f32.mrf.mxu0
  %v3990 = vadd.f32 0.0, %v3989
  %v3991 = vpop.f32.mrf.mxu0
  %3992 = vdwg.mxu0
  %3993 = vmatpush.bf16.msra.mxu0 %v3900
  %3994 = vmatpush.bf16.msra.mxu0 %v3891
  %3995 = vmatpush.bf16.msra.mxu0 %v3882
  %3996 = vmatpush.bf16.msra.mxu0 %v3873
  %3997 = vmatpush.bf16.msra.mxu0 %v3864
  %3998 = vmatpush.bf16.msra.mxu0 %v3855
  %3999 = vmatpush.bf16.msra.mxu0 %v3846
  %4000 = vmatpush.bf16.msra.mxu0 %v3837
  %4001 = vmatmul.bf16.gmra.mxu0 %v3531
  %v4002 = vpop.f32.mrf.mxu0
  %v4003 = vadd.f32 0.0, %v4002
  %v4004 = vpop.f32.mrf.mxu0
  %4005 = vdwg.mxu0
  %4006 = vmatpush.bf16.msra.mxu0 %v3901
  %4007 = vmatpush.bf16.msra.mxu0 %v3892
  %4008 = vmatpush.bf16.msra.mxu0 %v3883
  %4009 = vmatpush.bf16.msra.mxu0 %v3874
  %4010 = vmatpush.bf16.msra.mxu0 %v3865
  %4011 = vmatpush.bf16.msra.mxu0 %v3856
  %4012 = vmatpush.bf16.msra.mxu0 %v3847
  %4013 = vmatpush.bf16.msra.mxu0 %v3838
  %4014 = vmatmul.bf16.gmra.mxu0 %v3531
  %v4015 = vpop.f32.mrf.mxu0
  %v4016 = vadd.f32 0.0, %v4015
  %v4017 = vpop.f32.mrf.mxu0
  %4018 = vdwg.mxu0
  %4019 = vmatpush.bf16.msra.mxu0 %v3902
  %4020 = vmatpush.bf16.msra.mxu0 %v3893
  %4021 = vmatpush.bf16.msra.mxu0 %v3884
  %4022 = vmatpush.bf16.msra.mxu0 %v3875
  %4023 = vmatpush.bf16.msra.mxu0 %v3866
  %4024 = vmatpush.bf16.msra.mxu0 %v3857
  %4025 = vmatpush.bf16.msra.mxu0 %v3848
  %4026 = vmatpush.bf16.msra.mxu0 %v3839
  %4027 = vmatmul.bf16.gmra.mxu0 %v3531
  %v4028 = vpop.f32.mrf.mxu0
  %v4029 = vadd.f32 0.0, %v4028
  %v4030 = vpop.f32.mrf.mxu0
  %4031 = vdwg.mxu0
  %4032 = vmatpush.bf16.msra.mxu0 %v3903
  %4033 = vmatpush.bf16.msra.mxu0 %v3894
  %4034 = vmatpush.bf16.msra.mxu0 %v3885
  %4035 = vmatpush.bf16.msra.mxu0 %v3876
  %4036 = vmatpush.bf16.msra.mxu0 %v3867
  %4037 = vmatpush.bf16.msra.mxu0 %v3858
  %4038 = vmatpush.bf16.msra.mxu0 %v3849
  %4039 = vmatpush.bf16.msra.mxu0 %v3840
  %4040 = vmatmul.bf16.gmra.mxu0 %v3531
  %v4041 = vpop.f32.mrf.mxu0
  %v4042 = vadd.f32 0.0, %v4041
  %v4043 = vpop.f32.mrf.mxu0
  %4044 = vdwg.mxu0
  %4045 = vmatpush.bf16.msra.mxu0 %v3904
  %4046 = vmatpush.bf16.msra.mxu0 %v3895
  %4047 = vmatpush.bf16.msra.mxu0 %v3886
  %4048 = vmatpush.bf16.msra.mxu0 %v3877
  %4049 = vmatpush.bf16.msra.mxu0 %v3868
  %4050 = vmatpush.bf16.msra.mxu0 %v3859
  %4051 = vmatpush.bf16.msra.mxu0 %v3850
  %4052 = vmatpush.bf16.msra.mxu0 %v3841
  %4053 = vmatmul.bf16.gmra.mxu0 %v3531
  %v4054 = vpop.f32.mrf.mxu0
  %v4055 = vadd.f32 0.0, %v4054
  %v4056 = vpop.f32.mrf.mxu0
  %4057 = vdwg.mxu0
  %4058 = vmatpush.bf16.msra.mxu0 %v3905
  %4059 = vmatpush.bf16.msra.mxu0 %v3896
  %4060 = vmatpush.bf16.msra.mxu0 %v3887
  %4061 = vmatpush.bf16.msra.mxu0 %v3878
  %4062 = vmatpush.bf16.msra.mxu0 %v3869
  %4063 = vmatpush.bf16.msra.mxu0 %v3860
  %4064 = vmatpush.bf16.msra.mxu0 %v3851
  %4065 = vmatpush.bf16.msra.mxu0 %v3842
  %4066 = vmatmul.bf16.gmra.mxu0 %v3531
  %v4067 = vpop.f32.mrf.mxu0
  %v4068 = vadd.f32 0.0, %v4067
  %v4069 = vpop.f32.mrf.mxu0
  %4070 = vdwg.mxu0
  %4071 = vmatpush.bf16.msra.mxu0 %v3906
  %4072 = vmatpush.bf16.msra.mxu0 %v3897
  %4073 = vmatpush.bf16.msra.mxu0 %v3888
  %4074 = vmatpush.bf16.msra.mxu0 %v3879
  %4075 = vmatpush.bf16.msra.mxu0 %v3870
  %4076 = vmatpush.bf16.msra.mxu0 %v3861
  %4077 = vmatpush.bf16.msra.mxu0 %v3852
  %4078 = vmatpush.bf16.msra.mxu0 %v3843
  %4079 = vmatmul.bf16.gmra.mxu0 %v3531
  %v4080 = vpop.f32.mrf.mxu0
  %v4081 = vadd.f32 0.0, %v4080
  %v4082 = vpop.f32.mrf.mxu0
  %4083 = vdwg.mxu0
  %4084 = vmatpush.bf16.msra.mxu0 %v3907
  %4085 = vmatpush.bf16.msra.mxu0 %v3898
  %4086 = vmatpush.bf16.msra.mxu0 %v3889
  %4087 = vmatpush.bf16.msra.mxu0 %v3880
  %4088 = vmatpush.bf16.msra.mxu0 %v3871
  %4089 = vmatpush.bf16.msra.mxu0 %v3862
  %4090 = vmatpush.bf16.msra.mxu0 %v3853
  %4091 = vmatpush.bf16.msra.mxu0 %v3844
  %4092 = vmatmul.bf16.gmra.mxu0 %v3531
  %v4093 = vpop.f32.mrf.mxu0
  %v4094 = vadd.f32 0.0, %v4093
  %v4095 = vpop.f32.mrf.mxu0
  %4096 = vdwg.mxu0
  %4097 = vst [vmem:[#allocation2] sm:$0x3] %v3990
  %4098 = vst [vmem:[#allocation2 + $0x2] sm:$0x3] %v4003
  %4099 = vst [vmem:[#allocation2 + $0x4] sm:$0x3] %v4016
  %4100 = vst [vmem:[#allocation2 + $0x6] sm:$0x3] %v4029
  %4101 = vst [vmem:[#allocation2 + $0x8] sm:$0x3] %v4042
  %4102 = vst [vmem:[#allocation2 + $0xa] sm:$0x3] %v4055
  %4103 = vst [vmem:[#allocation2 + $0xc] sm:$0x3] %v4068
  %4104 = vst [vmem:[#allocation2 + $0xe] sm:$0x3] %v4081
  %4105 = vst [vmem:[#allocation2 + $0x10] sm:$0x3] %v4094
  %s4106 = scalar_lea.vmem %s0, 64
  %v4107 = vld [vmem:[%s4106] sm:$0xff]
  %v4108 = vld [vmem:[%s4106 + $0x8] sm:$0xff]
  %v4109 = vld [vmem:[%s4106 + $0x10] sm:$0xff]
  %v4110 = vld [vmem:[%s4106 + $0x18] sm:$0xff]
  %v4111 = vld [vmem:[%s4] sm:$0xf]
  %v4112 = vld [vmem:[%s4 + $0x4] sm:$0xf]
  %v4113 = vld [vmem:[%s4 + $0x8] sm:$0xf]
  %v4114 = vld [vmem:[%s4 + $0xc] sm:$0xf]
  %v4115 = vld [vmem:[#allocation2] sm:$0xff]
  %v4116 = vld [vmem:[#allocation2 + $0x8] sm:$0xff]
  %v4117 = vld [vmem:[#allocation2 + $0x10] sm:$0x3]
  %v4118 = vpack.c.bf16 %v4116, %v4115
  %v4119 = vpack.c.bf16 %v4117, %v4117
  %v4124 = vunpack.c.l.b16 %v4111
  %v4125 = vunpack.c.l.b16 %v4112
  %v4126 = vunpack.c.l.b16 %v4113
  %v4127 = vunpack.c.l.b16 %v4114
  %v4128 = vpack.c.b16 %v4125, %v4124
  %v4129 = vpack.c.b16 %v4127, %v4126
  %v4131 = vsel %vm627, %v4128, 0
  %v4134 = vsel %vm627, %v4129, 0
  %v4137 = vsel %vm634, %v4119, 0
  %4139 = vmatpush.bf16.msra.mxu0 0
  %4140 = vmatpush.bf16.msra.mxu0 0
  %4141 = vmatpush.bf16.msra.mxu0 0
  %4142 = vmatpush.bf16.msra.mxu0 0
  %4143 = vmatpush.bf16.msra.mxu0 0
  %4144 = vmatpush.bf16.msra.mxu0 0
  %4145 = vmatpush.bf16.msra.mxu0 %v4137
  %4146 = vmatpush.bf16.msra.mxu0 %v4118
  %4147 = vmatmul.bf16.gmra.mxu0 %v4131
  %v4148 = vpop.f32.mrf.mxu0
  %v4149 = vadd.f32 0.0, %v4148
  %v4150 = vpop.f32.mrf.mxu0
  %v4151 = vadd.f32 0.0, %v4150
  %4152 = vmatmul.bf16.gmra.mxu0 %v4134
  %v4153 = vpop.f32.mrf.mxu0
  %v4154 = vadd.f32 0.0, %v4153
  %v4155 = vpop.f32.mrf.mxu0
  %v4156 = vadd.f32 0.0, %v4155
  %4157 = vdwg.mxu0
  %v4158 = vadd.f32 %v4107, %v4149
  %v4159 = vadd.f32 %v4108, %v4151
  %v4160 = vadd.f32 %v4109, %v4154
  %v4161 = vadd.f32 %v4110, %v4156
  %v4162 = vmul.f32 %v4158, %v4158
  %v4163 = vmul.f32 %v4159, %v4159
  %v4164 = vmul.f32 %v4160, %v4160
  %v4165 = vmul.f32 %v4161, %v4161
  %v4166 = vmul.f32 %v4158, %v4162
  %v4167 = vmul.f32 %v4159, %v4163
  %v4168 = vmul.f32 %v4160, %v4164
  %v4169 = vmul.f32 %v4161, %v4165
  %v4170 = vmul.f32 %v4166, 0.044715
  %v4171 = vmul.f32 %v4167, 0.044715
  %v4172 = vmul.f32 %v4168, 0.044715
  %v4173 = vmul.f32 %v4169, 0.044715
  %v4174 = vadd.f32 %v4158, %v4170
  %v4175 = vadd.f32 %v4159, %v4171
  %v4176 = vadd.f32 %v4160, %v4172
  %v4177 = vadd.f32 %v4161, %v4173
  %v4178 = vmul.f32 %v4174, 0.7978846
  %v4179 = vmul.f32 %v4175, 0.7978846
  %v4180 = vmul.f32 %v4176, 0.7978846
  %v4181 = vmul.f32 %v4177, 0.7978846
  %v4182 = vtanh.pop %v4178
  %v4183 = vtanh.pop %v4179
  %v4184 = vtanh.pop %v4180
  %v4185 = vtanh.pop %v4181
  %v4186 = vadd.f32 %v4182, 1.0
  %v4187 = vadd.f32 %v4183, 1.0
  %v4188 = vadd.f32 %v4184, 1.0
  %v4189 = vadd.f32 %v4185, 1.0
  %v4190 = vmul.f32 %v4186, 0.5
  %v4191 = vmul.f32 %v4187, 0.5
  %v4192 = vmul.f32 %v4188, 0.5
  %v4193 = vmul.f32 %v4189, 0.5
  %v4194 = vmul.f32 %v4158, %v4190
  %v4195 = vmul.f32 %v4159, %v4191
  %v4196 = vmul.f32 %v4160, %v4192
  %v4197 = vmul.f32 %v4161, %v4193
  %v4198 = vld [vmem:[%s5] sm:$0x1]
  %v4199 = vpack.c.bf16 %v4195, %v4194
  %v4200 = vpack.c.bf16 %v4197, %v4196
  %v4201 = vld [vmem:[%s6] sm:$0x3]
  %4203 = vset.pattern.permute.xlu0 0
  %4204 = vperm.xlu0 %4203, %v4201
  %v4205 = vpop.permute.xlu0 %4204
  %v4208 = vsel %vm706, %v4198, 0
  %4210 = vmatpush.bf16.msra.mxu0 0
  %4211 = vmatpush.bf16.msra.mxu0 0
  %4212 = vmatpush.bf16.msra.mxu0 0
  %4213 = vmatpush.bf16.msra.mxu0 0
  %4214 = vmatpush.bf16.msra.mxu0 0
  %4215 = vmatpush.bf16.msra.mxu0 0
  %4216 = vmatpush.bf16.msra.mxu0 %v4200
  %4217 = vmatpush.bf16.msra.mxu0 %v4199
  %4218 = vmatmul.bf16.gmra.mxu0 %v4208
  %v4219 = vpop.f32.mrf.mxu0
  %v4220 = vadd.f32 %v4205, %v4219
  %v4221 = vpop.f32.mrf.mxu0
  %4222 = vdwg.mxu0
  %v4223 = vmax.f32 %v4220, -1.0
  %v4224 = vmin.f32 %v4223, 1.0
  %v4225 = vmul.f32 %v4224, 0.5601387
  %v4226 = vmul.f32 %v3530, 0.43544817
  %v4227 = vadd.f32 %v4225, %v4226
  %s4228 = scalar_lea.vmem %s2, 2
  %v4229 = vld [vmem:[%s4228] sm:$0x3]
  %v4230 = vadd.f32 %v4227, %v4229
  %v4231 = vpack.c.bf16 %v4230, %v4230
  %v4232 = vld [vmem:[%s3] sm:$0xff]
  %v4233 = vld [vmem:[%s3 + $0x8] sm:$0xff]
  %v4234 = vld [vmem:[%s3 + $0x10] sm:$0xff]
  %v4235 = vld [vmem:[%s3 + $0x18] sm:$0xff]
  %v4236 = vld [vmem:[%s3 + $0x20] sm:$0xf]
  %v4237 = vld [vmem:[%s3 + $0x24] sm:$0xff]
  %v4238 = vld [vmem:[%s3 + $0x2c] sm:$0xff]
  %v4239 = vld [vmem:[%s3 + $0x34] sm:$0xff]
  %v4240 = vld [vmem:[%s3 + $0x3c] sm:$0xff]
  %v4241 = vld [vmem:[%s3 + $0x44] sm:$0xf]
  %v4242 = vld [vmem:[%s3 + $0x48] sm:$0xff]
  %v4243 = vld [vmem:[%s3 + $0x50] sm:$0xff]
  %v4244 = vld [vmem:[%s3 + $0x58] sm:$0xff]
  %v4245 = vld [vmem:[%s3 + $0x60] sm:$0xff]
  %v4246 = vld [vmem:[%s3 + $0x68] sm:$0xf]
  %v4247 = vld [vmem:[%s3 + $0x6c] sm:$0xff]
  %v4248 = vld [vmem:[%s3 + $0x74] sm:$0xff]
  %v4249 = vld [vmem:[%s3 + $0x7c] sm:$0xff]
  %v4250 = vld [vmem:[%s3 + $0x84] sm:$0xff]
  %v4251 = vld [vmem:[%s3 + $0x8c] sm:$0xf]
  %v4252 = vld [vmem:[%s3 + $0x90] sm:$0xff]
  %v4253 = vld [vmem:[%s3 + $0x98] sm:$0xff]
  %v4254 = vld [vmem:[%s3 + $0xa0] sm:$0xff]
  %v4255 = vld [vmem:[%s3 + $0xa8] sm:$0xff]
  %v4256 = vld [vmem:[%s3 + $0xb0] sm:$0xf]
  %v4257 = vld [vmem:[%s3 + $0xb4] sm:$0xff]
  %v4258 = vld [vmem:[%s3 + $0xbc] sm:$0xff]
  %v4259 = vld [vmem:[%s3 + $0xc4] sm:$0xff]
  %v4260 = vld [vmem:[%s3 + $0xcc] sm:$0xff]
  %v4261 = vld [vmem:[%s3 + $0xd4] sm:$0xf]
  %v4262 = vld [vmem:[%s3 + $0xd8] sm:$0xff]
  %v4263 = vld [vmem:[%s3 + $0xe0] sm:$0xff]
  %v4264 = vld [vmem:[%s3 + $0xe8] sm:$0xff]
  %v4265 = vld [vmem:[%s3 + $0xf0] sm:$0xff]
  %v4266 = vld [vmem:[%s3 + $0xf8] sm:$0xf]
  %v4267 = vld [vmem:[%s3 + $0xfc] sm:$0xff]
  %v4268 = vld [vmem:[%s3 + $0x104] sm:$0xff]
  %v4269 = vld [vmem:[%s3 + $0x10c] sm:$0xff]
  %v4270 = vld [vmem:[%s3 + $0x114] sm:$0xff]
  %v4271 = vld [vmem:[%s3 + $0x11c] sm:$0xf]
  %v4272 = vld [vmem:[%s3 + $0x120] sm:$0xff]
  %v4273 = vld [vmem:[%s3 + $0x128] sm:$0xff]
  %v4274 = vld [vmem:[%s3 + $0x130] sm:$0xff]
  %v4275 = vld [vmem:[%s3 + $0x138] sm:$0xff]
  %v4276 = vld [vmem:[%s3 + $0x140] sm:$0xf]
  %v4277 = vld [vmem:[%s3 + $0x144] sm:$0xff]
  %v4278 = vld [vmem:[%s3 + $0x14c] sm:$0xff]
  %v4279 = vld [vmem:[%s3 + $0x154] sm:$0xff]
  %v4280 = vld [vmem:[%s3 + $0x15c] sm:$0xff]
  %v4281 = vld [vmem:[%s3 + $0x164] sm:$0xf]
  %v4282 = vld [vmem:[%s3 + $0x168] sm:$0xff]
  %v4283 = vld [vmem:[%s3 + $0x170] sm:$0xff]
  %v4284 = vld [vmem:[%s3 + $0x178] sm:$0xff]
  %v4285 = vld [vmem:[%s3 + $0x180] sm:$0xff]
  %v4286 = vld [vmem:[%s3 + $0x188] sm:$0xf]
  %v4287 = vld [vmem:[%s3 + $0x18c] sm:$0xff]
  %v4288 = vld [vmem:[%s3 + $0x194] sm:$0xff]
  %v4289 = vld [vmem:[%s3 + $0x19c] sm:$0xff]
  %v4290 = vld [vmem:[%s3 + $0x1a4] sm:$0xff]
  %v4291 = vld [vmem:[%s3 + $0x1ac] sm:$0xf]
  %v4292 = vld [vmem:[%s3 + $0x1b0] sm:$0xff]
  %v4293 = vld [vmem:[%s3 + $0x1b8] sm:$0xff]
  %v4294 = vld [vmem:[%s3 + $0x1c0] sm:$0xff]
  %v4295 = vld [vmem:[%s3 + $0x1c8] sm:$0xff]
  %v4296 = vld [vmem:[%s3 + $0x1d0] sm:$0xf]
  %v4297 = vld [vmem:[%s3 + $0x1d4] sm:$0xff]
  %v4298 = vld [vmem:[%s3 + $0x1dc] sm:$0xff]
  %v4299 = vld [vmem:[%s3 + $0x1e4] sm:$0xff]
  %v4300 = vld [vmem:[%s3 + $0x1ec] sm:$0xff]
  %v4301 = vld [vmem:[%s3 + $0x1f4] sm:$0xf]
  %v4302 = vld [vmem:[%s3 + $0x1f8] sm:$0xff]
  %v4303 = vld [vmem:[%s3 + $0x200] sm:$0xff]
  %v4304 = vld [vmem:[%s3 + $0x208] sm:$0xff]
  %v4305 = vld [vmem:[%s3 + $0x210] sm:$0xff]
  %v4306 = vld [vmem:[%s3 + $0x218] sm:$0xf]
  %v4307 = vld [vmem:[%s3 + $0x21c] sm:$0xff]
  %v4308 = vld [vmem:[%s3 + $0x224] sm:$0xff]
  %v4309 = vld [vmem:[%s3 + $0x22c] sm:$0xff]
  %v4310 = vld [vmem:[%s3 + $0x234] sm:$0xff]
  %v4311 = vld [vmem:[%s3 + $0x23c] sm:$0xf]
  %v4392 = vunpack.c.l.b16 %v4232
  %v4393 = vunpack.c.h.b16 %v4232
  %v4394 = vunpack.c.l.b16 %v4233
  %v4395 = vunpack.c.h.b16 %v4233
  %v4396 = vunpack.c.l.b16 %v4234
  %v4397 = vunpack.c.h.b16 %v4234
  %v4398 = vunpack.c.l.b16 %v4235
  %v4399 = vunpack.c.h.b16 %v4235
  %v4400 = vunpack.c.l.b16 %v4236
  %v4401 = vunpack.c.l.b16 %v4237
  %v4402 = vunpack.c.h.b16 %v4237
  %v4403 = vunpack.c.l.b16 %v4238
  %v4404 = vunpack.c.h.b16 %v4238
  %v4405 = vunpack.c.l.b16 %v4239
  %v4406 = vunpack.c.h.b16 %v4239
  %v4407 = vunpack.c.l.b16 %v4240
  %v4408 = vunpack.c.h.b16 %v4240
  %v4409 = vunpack.c.l.b16 %v4241
  %v4410 = vunpack.c.l.b16 %v4242
  %v4411 = vunpack.c.h.b16 %v4242
  %v4412 = vunpack.c.l.b16 %v4243
  %v4413 = vunpack.c.h.b16 %v4243
  %v4414 = vunpack.c.l.b16 %v4244
  %v4415 = vunpack.c.h.b16 %v4244
  %v4416 = vunpack.c.l.b16 %v4245
  %v4417 = vunpack.c.h.b16 %v4245
  %v4418 = vunpack.c.l.b16 %v4246
  %v4419 = vunpack.c.l.b16 %v4247
  %v4420 = vunpack.c.h.b16 %v4247
  %v4421 = vunpack.c.l.b16 %v4248
  %v4422 = vunpack.c.h.b16 %v4248
  %v4423 = vunpack.c.l.b16 %v4249
  %v4424 = vunpack.c.h.b16 %v4249
  %v4425 = vunpack.c.l.b16 %v4250
  %v4426 = vunpack.c.h.b16 %v4250
  %v4427 = vunpack.c.l.b16 %v4251
  %v4428 = vunpack.c.l.b16 %v4252
  %v4429 = vunpack.c.h.b16 %v4252
  %v4430 = vunpack.c.l.b16 %v4253
  %v4431 = vunpack.c.h.b16 %v4253
  %v4432 = vunpack.c.l.b16 %v4254
  %v4433 = vunpack.c.h.b16 %v4254
  %v4434 = vunpack.c.l.b16 %v4255
  %v4435 = vunpack.c.h.b16 %v4255
  %v4436 = vunpack.c.l.b16 %v4256
  %v4437 = vunpack.c.l.b16 %v4257
  %v4438 = vunpack.c.h.b16 %v4257
  %v4439 = vunpack.c.l.b16 %v4258
  %v4440 = vunpack.c.h.b16 %v4258
  %v4441 = vunpack.c.l.b16 %v4259
  %v4442 = vunpack.c.h.b16 %v4259
  %v4443 = vunpack.c.l.b16 %v4260
  %v4444 = vunpack.c.h.b16 %v4260
  %v4445 = vunpack.c.l.b16 %v4261
  %v4446 = vunpack.c.l.b16 %v4262
  %v4447 = vunpack.c.h.b16 %v4262
  %v4448 = vunpack.c.l.b16 %v4263
  %v4449 = vunpack.c.h.b16 %v4263
  %v4450 = vunpack.c.l.b16 %v4264
  %v4451 = vunpack.c.h.b16 %v4264
  %v4452 = vunpack.c.l.b16 %v4265
  %v4453 = vunpack.c.h.b16 %v4265
  %v4454 = vunpack.c.l.b16 %v4266
  %v4455 = vunpack.c.l.b16 %v4267
  %v4456 = vunpack.c.h.b16 %v4267
  %v4457 = vunpack.c.l.b16 %v4268
  %v4458 = vunpack.c.h.b16 %v4268
  %v4459 = vunpack.c.l.b16 %v4269
  %v4460 = vunpack.c.h.b16 %v4269
  %v4461 = vunpack.c.l.b16 %v4270
  %v4462 = vunpack.c.h.b16 %v4270
  %v4463 = vunpack.c.l.b16 %v4271
  %v4464 = vunpack.c.l.b16 %v4272
  %v4465 = vunpack.c.h.b16 %v4272
  %v4466 = vunpack.c.l.b16 %v4273
  %v4467 = vunpack.c.h.b16 %v4273
  %v4468 = vunpack.c.l.b16 %v4274
  %v4469 = vunpack.c.h.b16 %v4274
  %v4470 = vunpack.c.l.b16 %v4275
  %v4471 = vunpack.c.h.b16 %v4275
  %v4472 = vunpack.c.l.b16 %v4276
  %v4473 = vunpack.c.l.b16 %v4277
  %v4474 = vunpack.c.h.b16 %v4277
  %v4475 = vunpack.c.l.b16 %v4278
  %v4476 = vunpack.c.h.b16 %v4278
  %v4477 = vunpack.c.l.b16 %v4279
  %v4478 = vunpack.c.h.b16 %v4279
  %v4479 = vunpack.c.l.b16 %v4280
  %v4480 = vunpack.c.h.b16 %v4280
  %v4481 = vunpack.c.l.b16 %v4281
  %v4482 = vunpack.c.l.b16 %v4282
  %v4483 = vunpack.c.h.b16 %v4282
  %v4484 = vunpack.c.l.b16 %v4283
  %v4485 = vunpack.c.h.b16 %v4283
  %v4486 = vunpack.c.l.b16 %v4284
  %v4487 = vunpack.c.h.b16 %v4284
  %v4488 = vunpack.c.l.b16 %v4285
  %v4489 = vunpack.c.h.b16 %v4285
  %v4490 = vunpack.c.l.b16 %v4286
  %v4491 = vunpack.c.l.b16 %v4287
  %v4492 = vunpack.c.h.b16 %v4287
  %v4493 = vunpack.c.l.b16 %v4288
  %v4494 = vunpack.c.h.b16 %v4288
  %v4495 = vunpack.c.l.b16 %v4289
  %v4496 = vunpack.c.h.b16 %v4289
  %v4497 = vunpack.c.l.b16 %v4290
  %v4498 = vunpack.c.h.b16 %v4290
  %v4499 = vunpack.c.l.b16 %v4291
  %v4500 = vunpack.c.l.b16 %v4292
  %v4501 = vunpack.c.h.b16 %v4292
  %v4502 = vunpack.c.l.b16 %v4293
  %v4503 = vunpack.c.h.b16 %v4293
  %v4504 = vunpack.c.l.b16 %v4294
  %v4505 = vunpack.c.h.b16 %v4294
  %v4506 = vunpack.c.l.b16 %v4295
  %v4507 = vunpack.c.h.b16 %v4295
  %v4508 = vunpack.c.l.b16 %v4296
  %v4509 = vunpack.c.l.b16 %v4297
  %v4510 = vunpack.c.h.b16 %v4297
  %v4511 = vunpack.c.l.b16 %v4298
  %v4512 = vunpack.c.h.b16 %v4298
  %v4513 = vunpack.c.l.b16 %v4299
  %v4514 = vunpack.c.h.b16 %v4299
  %v4515 = vunpack.c.l.b16 %v4300
  %v4516 = vunpack.c.h.b16 %v4300
  %v4517 = vunpack.c.l.b16 %v4301
  %v4518 = vunpack.c.l.b16 %v4302
  %v4519 = vunpack.c.h.b16 %v4302
  %v4520 = vunpack.c.l.b16 %v4303
  %v4521 = vunpack.c.h.b16 %v4303
  %v4522 = vunpack.c.l.b16 %v4304
  %v4523 = vunpack.c.h.b16 %v4304
  %v4524 = vunpack.c.l.b16 %v4305
  %v4525 = vunpack.c.h.b16 %v4305
  %v4526 = vunpack.c.l.b16 %v4306
  %v4527 = vunpack.c.l.b16 %v4307
  %v4528 = vunpack.c.h.b16 %v4307
  %v4529 = vunpack.c.l.b16 %v4308
  %v4530 = vunpack.c.h.b16 %v4308
  %v4531 = vunpack.c.l.b16 %v4309
  %v4532 = vunpack.c.h.b16 %v4309
  %v4533 = vunpack.c.l.b16 %v4310
  %v4534 = vunpack.c.h.b16 %v4310
  %v4535 = vunpack.c.l.b16 %v4311
  %v4536 = vpack.c.b16 %v4401, %v4392
  %v4537 = vpack.c.b16 %v4402, %v4393
  %v4538 = vpack.c.b16 %v4403, %v4394
  %v4539 = vpack.c.b16 %v4404, %v4395
  %v4540 = vpack.c.b16 %v4405, %v4396
  %v4541 = vpack.c.b16 %v4406, %v4397
  %v4542 = vpack.c.b16 %v4407, %v4398
  %v4543 = vpack.c.b16 %v4408, %v4399
  %v4544 = vpack.c.b16 %v4409, %v4400
  %v4545 = vpack.c.b16 %v4419, %v4410
  %v4546 = vpack.c.b16 %v4420, %v4411
  %v4547 = vpack.c.b16 %v4421, %v4412
  %v4548 = vpack.c.b16 %v4422, %v4413
  %v4549 = vpack.c.b16 %v4423, %v4414
  %v4550 = vpack.c.b16 %v4424, %v4415
  %v4551 = vpack.c.b16 %v4425, %v4416
  %v4552 = vpack.c.b16 %v4426, %v4417
  %v4553 = vpack.c.b16 %v4427, %v4418
  %v4554 = vpack.c.b16 %v4437, %v4428
  %v4555 = vpack.c.b16 %v4438, %v4429
  %v4556 = vpack.c.b16 %v4439, %v4430
  %v4557 = vpack.c.b16 %v4440, %v4431
  %v4558 = vpack.c.b16 %v4441, %v4432
  %v4559 = vpack.c.b16 %v4442, %v4433
  %v4560 = vpack.c.b16 %v4443, %v4434
  %v4561 = vpack.c.b16 %v4444, %v4435
  %v4562 = vpack.c.b16 %v4445, %v4436
  %v4563 = vpack.c.b16 %v4455, %v4446
  %v4564 = vpack.c.b16 %v4456, %v4447
  %v4565 = vpack.c.b16 %v4457, %v4448
  %v4566 = vpack.c.b16 %v4458, %v4449
  %v4567 = vpack.c.b16 %v4459, %v4450
  %v4568 = vpack.c.b16 %v4460, %v4451
  %v4569 = vpack.c.b16 %v4461, %v4452
  %v4570 = vpack.c.b16 %v4462, %v4453
  %v4571 = vpack.c.b16 %v4463, %v4454
  %v4572 = vpack.c.b16 %v4473, %v4464
  %v4573 = vpack.c.b16 %v4474, %v4465
  %v4574 = vpack.c.b16 %v4475, %v4466
  %v4575 = vpack.c.b16 %v4476, %v4467
  %v4576 = vpack.c.b16 %v4477, %v4468
  %v4577 = vpack.c.b16 %v4478, %v4469
  %v4578 = vpack.c.b16 %v4479, %v4470
  %v4579 = vpack.c.b16 %v4480, %v4471
  %v4580 = vpack.c.b16 %v4481, %v4472
  %v4581 = vpack.c.b16 %v4491, %v4482
  %v4582 = vpack.c.b16 %v4492, %v4483
  %v4583 = vpack.c.b16 %v4493, %v4484
  %v4584 = vpack.c.b16 %v4494, %v4485
  %v4585 = vpack.c.b16 %v4495, %v4486
  %v4586 = vpack.c.b16 %v4496, %v4487
  %v4587 = vpack.c.b16 %v4497, %v4488
  %v4588 = vpack.c.b16 %v4498, %v4489
  %v4589 = vpack.c.b16 %v4499, %v4490
  %v4590 = vpack.c.b16 %v4509, %v4500
  %v4591 = vpack.c.b16 %v4510, %v4501
  %v4592 = vpack.c.b16 %v4511, %v4502
  %v4593 = vpack.c.b16 %v4512, %v4503
  %v4594 = vpack.c.b16 %v4513, %v4504
  %v4595 = vpack.c.b16 %v4514, %v4505
  %v4596 = vpack.c.b16 %v4515, %v4506
  %v4597 = vpack.c.b16 %v4516, %v4507
  %v4598 = vpack.c.b16 %v4517, %v4508
  %v4599 = vpack.c.b16 %v4527, %v4518
  %v4600 = vpack.c.b16 %v4528, %v4519
  %v4601 = vpack.c.b16 %v4529, %v4520
  %v4602 = vpack.c.b16 %v4530, %v4521
  %v4603 = vpack.c.b16 %v4531, %v4522
  %v4604 = vpack.c.b16 %v4532, %v4523
  %v4605 = vpack.c.b16 %v4533, %v4524
  %v4606 = vpack.c.b16 %v4534, %v4525
  %v4607 = vpack.c.b16 %v4535, %v4526
  %4680 = vmatpush.bf16.msra.mxu0 %v4599
  %4681 = vmatpush.bf16.msra.mxu0 %v4590
  %4682 = vmatpush.bf16.msra.mxu0 %v4581
  %4683 = vmatpush.bf16.msra.mxu0 %v4572
  %4684 = vmatpush.bf16.msra.mxu0 %v4563
  %4685 = vmatpush.bf16.msra.mxu0 %v4554
  %4686 = vmatpush.bf16.msra.mxu0 %v4545
  %4687 = vmatpush.bf16.msra.mxu0 %v4536
  %4688 = vmatmul.bf16.gmra.mxu0 %v4231
  %v4689 = vpop.f32.mrf.mxu0
  %v4690 = vadd.f32 0.0, %v4689
  %v4691 = vpop.f32.mrf.mxu0
  %4692 = vdwg.mxu0
  %4693 = vmatpush.bf16.msra.mxu0 %v4600
  %4694 = vmatpush.bf16.msra.mxu0 %v4591
  %4695 = vmatpush.bf16.msra.mxu0 %v4582
  %4696 = vmatpush.bf16.msra.mxu0 %v4573
  %4697 = vmatpush.bf16.msra.mxu0 %v4564
  %4698 = vmatpush.bf16.msra.mxu0 %v4555
  %4699 = vmatpush.bf16.msra.mxu0 %v4546
  %4700 = vmatpush.bf16.msra.mxu0 %v4537
  %4701 = vmatmul.bf16.gmra.mxu0 %v4231
  %v4702 = vpop.f32.mrf.mxu0
  %v4703 = vadd.f32 0.0, %v4702
  %v4704 = vpop.f32.mrf.mxu0
  %4705 = vdwg.mxu0
  %4706 = vmatpush.bf16.msra.mxu0 %v4601
  %4707 = vmatpush.bf16.msra.mxu0 %v4592
  %4708 = vmatpush.bf16.msra.mxu0 %v4583
  %4709 = vmatpush.bf16.msra.mxu0 %v4574
  %4710 = vmatpush.bf16.msra.mxu0 %v4565
  %4711 = vmatpush.bf16.msra.mxu0 %v4556
  %4712 = vmatpush.bf16.msra.mxu0 %v4547
  %4713 = vmatpush.bf16.msra.mxu0 %v4538
  %4714 = vmatmul.bf16.gmra.mxu0 %v4231
  %v4715 = vpop.f32.mrf.mxu0
  %v4716 = vadd.f32 0.0, %v4715
  %v4717 = vpop.f32.mrf.mxu0
  %4718 = vdwg.mxu0
  %4719 = vmatpush.bf16.msra.mxu0 %v4602
  %4720 = vmatpush.bf16.msra.mxu0 %v4593
  %4721 = vmatpush.bf16.msra.mxu0 %v4584
  %4722 = vmatpush.bf16.msra.mxu0 %v4575
  %4723 = vmatpush.bf16.msra.mxu0 %v4566
  %4724 = vmatpush.bf16.msra.mxu0 %v4557
  %4725 = vmatpush.bf16.msra.mxu0 %v4548
  %4726 = vmatpush.bf16.msra.mxu0 %v4539
  %4727 = vmatmul.bf16.gmra.mxu0 %v4231
  %v4728 = vpop.f32.mrf.mxu0
  %v4729 = vadd.f32 0.0, %v4728
  %v4730 = vpop.f32.mrf.mxu0
  %4731 = vdwg.mxu0
  %4732 = vmatpush.bf16.msra.mxu0 %v4603
  %4733 = vmatpush.bf16.msra.mxu0 %v4594
  %4734 = vmatpush.bf16.msra.mxu0 %v4585
  %4735 = vmatpush.bf16.msra.mxu0 %v4576
  %4736 = vmatpush.bf16.msra.mxu0 %v4567
  %4737 = vmatpush.bf16.msra.mxu0 %v4558
  %4738 = vmatpush.bf16.msra.mxu0 %v4549
  %4739 = vmatpush.bf16.msra.mxu0 %v4540
  %4740 = vmatmul.bf16.gmra.mxu0 %v4231
  %v4741 = vpop.f32.mrf.mxu0
  %v4742 = vadd.f32 0.0, %v4741
  %v4743 = vpop.f32.mrf.mxu0
  %4744 = vdwg.mxu0
  %4745 = vmatpush.bf16.msra.mxu0 %v4604
  %4746 = vmatpush.bf16.msra.mxu0 %v4595
  %4747 = vmatpush.bf16.msra.mxu0 %v4586
  %4748 = vmatpush.bf16.msra.mxu0 %v4577
  %4749 = vmatpush.bf16.msra.mxu0 %v4568
  %4750 = vmatpush.bf16.msra.mxu0 %v4559
  %4751 = vmatpush.bf16.msra.mxu0 %v4550
  %4752 = vmatpush.bf16.msra.mxu0 %v4541
  %4753 = vmatmul.bf16.gmra.mxu0 %v4231
  %v4754 = vpop.f32.mrf.mxu0
  %v4755 = vadd.f32 0.0, %v4754
  %v4756 = vpop.f32.mrf.mxu0
  %4757 = vdwg.mxu0
  %4758 = vmatpush.bf16.msra.mxu0 %v4605
  %4759 = vmatpush.bf16.msra.mxu0 %v4596
  %4760 = vmatpush.bf16.msra.mxu0 %v4587
  %4761 = vmatpush.bf16.msra.mxu0 %v4578
  %4762 = vmatpush.bf16.msra.mxu0 %v4569
  %4763 = vmatpush.bf16.msra.mxu0 %v4560
  %4764 = vmatpush.bf16.msra.mxu0 %v4551
  %4765 = vmatpush.bf16.msra.mxu0 %v4542
  %4766 = vmatmul.bf16.gmra.mxu0 %v4231
  %v4767 = vpop.f32.mrf.mxu0
  %v4768 = vadd.f32 0.0, %v4767
  %v4769 = vpop.f32.mrf.mxu0
  %4770 = vdwg.mxu0
  %4771 = vmatpush.bf16.msra.mxu0 %v4606
  %4772 = vmatpush.bf16.msra.mxu0 %v4597
  %4773 = vmatpush.bf16.msra.mxu0 %v4588
  %4774 = vmatpush.bf16.msra.mxu0 %v4579
  %4775 = vmatpush.bf16.msra.mxu0 %v4570
  %4776 = vmatpush.bf16.msra.mxu0 %v4561
  %4777 = vmatpush.bf16.msra.mxu0 %v4552
  %4778 = vmatpush.bf16.msra.mxu0 %v4543
  %4779 = vmatmul.bf16.gmra.mxu0 %v4231
  %v4780 = vpop.f32.mrf.mxu0
  %v4781 = vadd.f32 0.0, %v4780
  %v4782 = vpop.f32.mrf.mxu0
  %4783 = vdwg.mxu0
  %4784 = vmatpush.bf16.msra.mxu0 %v4607
  %4785 = vmatpush.bf16.msra.mxu0 %v4598
  %4786 = vmatpush.bf16.msra.mxu0 %v4589
  %4787 = vmatpush.bf16.msra.mxu0 %v4580
  %4788 = vmatpush.bf16.msra.mxu0 %v4571
  %4789 = vmatpush.bf16.msra.mxu0 %v4562
  %4790 = vmatpush.bf16.msra.mxu0 %v4553
  %4791 = vmatpush.bf16.msra.mxu0 %v4544
  %4792 = vmatmul.bf16.gmra.mxu0 %v4231
  %v4793 = vpop.f32.mrf.mxu0
  %v4794 = vadd.f32 0.0, %v4793
  %v4795 = vpop.f32.mrf.mxu0
  %4796 = vdwg.mxu0
  %4797 = vst [vmem:[#allocation2] sm:$0x3] %v4690
  %4798 = vst [vmem:[#allocation2 + $0x2] sm:$0x3] %v4703
  %4799 = vst [vmem:[#allocation2 + $0x4] sm:$0x3] %v4716
  %4800 = vst [vmem:[#allocation2 + $0x6] sm:$0x3] %v4729
  %4801 = vst [vmem:[#allocation2 + $0x8] sm:$0x3] %v4742
  %4802 = vst [vmem:[#allocation2 + $0xa] sm:$0x3] %v4755
  %4803 = vst [vmem:[#allocation2 + $0xc] sm:$0x3] %v4768
  %4804 = vst [vmem:[#allocation2 + $0xe] sm:$0x3] %v4781
  %4805 = vst [vmem:[#allocation2 + $0x10] sm:$0x3] %v4794
  %s4806 = scalar_lea.vmem %s0, 32
  %v4807 = vld [vmem:[%s4806] sm:$0xff]
  %v4808 = vld [vmem:[%s4806 + $0x8] sm:$0xff]
  %v4809 = vld [vmem:[%s4806 + $0x10] sm:$0xff]
  %v4810 = vld [vmem:[%s4806 + $0x18] sm:$0xff]
  %v4811 = vld [vmem:[%s4] sm:$0xf]
  %v4812 = vld [vmem:[%s4 + $0x4] sm:$0xf]
  %v4813 = vld [vmem:[%s4 + $0x8] sm:$0xf]
  %v4814 = vld [vmem:[%s4 + $0xc] sm:$0xf]
  %v4815 = vld [vmem:[#allocation2] sm:$0xff]
  %v4816 = vld [vmem:[#allocation2 + $0x8] sm:$0xff]
  %v4817 = vld [vmem:[#allocation2 + $0x10] sm:$0x3]
  %v4818 = vpack.c.bf16 %v4816, %v4815
  %v4819 = vpack.c.bf16 %v4817, %v4817
  %v4824 = vunpack.c.l.b16 %v4811
  %v4825 = vunpack.c.l.b16 %v4812
  %v4826 = vunpack.c.l.b16 %v4813
  %v4827 = vunpack.c.l.b16 %v4814
  %v4828 = vpack.c.b16 %v4825, %v4824
  %v4829 = vpack.c.b16 %v4827, %v4826
  %v4831 = vsel %vm627, %v4828, 0
  %v4834 = vsel %vm627, %v4829, 0
  %v4837 = vsel %vm634, %v4819, 0
  %4839 = vmatpush.bf16.msra.mxu0 0
  %4840 = vmatpush.bf16.msra.mxu0 0
  %4841 = vmatpush.bf16.msra.mxu0 0
  %4842 = vmatpush.bf16.msra.mxu0 0
  %4843 = vmatpush.bf16.msra.mxu0 0
  %4844 = vmatpush.bf16.msra.mxu0 0
  %4845 = vmatpush.bf16.msra.mxu0 %v4837
  %4846 = vmatpush.bf16.msra.mxu0 %v4818
  %4847 = vmatmul.bf16.gmra.mxu0 %v4831
  %v4848 = vpop.f32.mrf.mxu0
  %v4849 = vadd.f32 0.0, %v4848
  %v4850 = vpop.f32.mrf.mxu0
  %v4851 = vadd.f32 0.0, %v4850
  %4852 = vmatmul.bf16.gmra.mxu0 %v4834
  %v4853 = vpop.f32.mrf.mxu0
  %v4854 = vadd.f32 0.0, %v4853
  %v4855 = vpop.f32.mrf.mxu0
  %v4856 = vadd.f32 0.0, %v4855
  %4857 = vdwg.mxu0
  %v4858 = vadd.f32 %v4807, %v4849
  %v4859 = vadd.f32 %v4808, %v4851
  %v4860 = vadd.f32 %v4809, %v4854
  %v4861 = vadd.f32 %v4810, %v4856
  %v4862 = vmul.f32 %v4858, %v4858
  %v4863 = vmul.f32 %v4859, %v4859
  %v4864 = vmul.f32 %v4860, %v4860
  %v4865 = vmul.f32 %v4861, %v4861
  %v4866 = vmul.f32 %v4858, %v4862
  %v4867 = vmul.f32 %v4859, %v4863
  %v4868 = vmul.f32 %v4860, %v4864
  %v4869 = vmul.f32 %v4861, %v4865
  %v4870 = vmul.f32 %v4866, 0.044715
  %v4871 = vmul.f32 %v4867, 0.044715
  %v4872 = vmul.f32 %v4868, 0.044715
  %v4873 = vmul.f32 %v4869, 0.044715
  %v4874 = vadd.f32 %v4858, %v4870
  %v4875 = vadd.f32 %v4859, %v4871
  %v4876 = vadd.f32 %v4860, %v4872
  %v4877 = vadd.f32 %v4861, %v4873
  %v4878 = vmul.f32 %v4874, 0.7978846
  %v4879 = vmul.f32 %v4875, 0.7978846
  %v4880 = vmul.f32 %v4876, 0.7978846
  %v4881 = vmul.f32 %v4877, 0.7978846
  %v4882 = vtanh.pop %v4878
  %v4883 = vtanh.pop %v4879
  %v4884 = vtanh.pop %v4880
  %v4885 = vtanh.pop %v4881
  %v4886 = vadd.f32 %v4882, 1.0
  %v4887 = vadd.f32 %v4883, 1.0
  %v4888 = vadd.f32 %v4884, 1.0
  %v4889 = vadd.f32 %v4885, 1.0
  %v4890 = vmul.f32 %v4886, 0.5
  %v4891 = vmul.f32 %v4887, 0.5
  %v4892 = vmul.f32 %v4888, 0.5
  %v4893 = vmul.f32 %v4889, 0.5
  %v4894 = vmul.f32 %v4858, %v4890
  %v4895 = vmul.f32 %v4859, %v4891
  %v4896 = vmul.f32 %v4860, %v4892
  %v4897 = vmul.f32 %v4861, %v4893
  %v4898 = vld [vmem:[%s5] sm:$0x1]
  %v4899 = vpack.c.bf16 %v4895, %v4894
  %v4900 = vpack.c.bf16 %v4897, %v4896
  %v4901 = vld [vmem:[%s6] sm:$0x3]
  %4903 = vset.pattern.permute.xlu0 0
  %4904 = vperm.xlu0 %4903, %v4901
  %v4905 = vpop.permute.xlu0 %4904
  %v4908 = vsel %vm706, %v4898, 0
  %4910 = vmatpush.bf16.msra.mxu0 0
  %4911 = vmatpush.bf16.msra.mxu0 0
  %4912 = vmatpush.bf16.msra.mxu0 0
  %4913 = vmatpush.bf16.msra.mxu0 0
  %4914 = vmatpush.bf16.msra.mxu0 0
  %4915 = vmatpush.bf16.msra.mxu0 0
  %4916 = vmatpush.bf16.msra.mxu0 %v4900
  %4917 = vmatpush.bf16.msra.mxu0 %v4899
  %4918 = vmatmul.bf16.gmra.mxu0 %v4908
  %v4919 = vpop.f32.mrf.mxu0
  %v4920 = vadd.f32 %v4905, %v4919
  %v4921 = vpop.f32.mrf.mxu0
  %4922 = vdwg.mxu0
  %v4923 = vmax.f32 %v4920, -1.0
  %v4924 = vmin.f32 %v4923, 1.0
  %v4925 = vmul.f32 %v4924, 0.73997104
  %v4926 = vmul.f32 %v4230, 0.25936696
  %v4927 = vadd.f32 %v4925, %v4926
  %v4928 = vld [vmem:[%s2] sm:$0x3]
  %v4929 = vadd.f32 %v4927, %v4928
  %v4930 = vpack.c.bf16 %v4929, %v4929
  %v4931 = vld [vmem:[%s3] sm:$0xff]
  %v4932 = vld [vmem:[%s3 + $0x8] sm:$0xff]
  %v4933 = vld [vmem:[%s3 + $0x10] sm:$0xff]
  %v4934 = vld [vmem:[%s3 + $0x18] sm:$0xff]
  %v4935 = vld [vmem:[%s3 + $0x20] sm:$0xf]
  %v4936 = vld [vmem:[%s3 + $0x24] sm:$0xff]
  %v4937 = vld [vmem:[%s3 + $0x2c] sm:$0xff]
  %v4938 = vld [vmem:[%s3 + $0x34] sm:$0xff]
  %v4939 = vld [vmem:[%s3 + $0x3c] sm:$0xff]
  %v4940 = vld [vmem:[%s3 + $0x44] sm:$0xf]
  %v4941 = vld [vmem:[%s3 + $0x48] sm:$0xff]
  %v4942 = vld [vmem:[%s3 + $0x50] sm:$0xff]
  %v4943 = vld [vmem:[%s3 + $0x58] sm:$0xff]
  %v4944 = vld [vmem:[%s3 + $0x60] sm:$0xff]
  %v4945 = vld [vmem:[%s3 + $0x68] sm:$0xf]
  %v4946 = vld [vmem:[%s3 + $0x6c] sm:$0xff]
  %v4947 = vld [vmem:[%s3 + $0x74] sm:$0xff]
  %v4948 = vld [vmem:[%s3 + $0x7c] sm:$0xff]
  %v4949 = vld [vmem:[%s3 + $0x84] sm:$0xff]
  %v4950 = vld [vmem:[%s3 + $0x8c] sm:$0xf]
  %v4951 = vld [vmem:[%s3 + $0x90] sm:$0xff]
  %v4952 = vld [vmem:[%s3 + $0x98] sm:$0xff]
  %v4953 = vld [vmem:[%s3 + $0xa0] sm:$0xff]
  %v4954 = vld [vmem:[%s3 + $0xa8] sm:$0xff]
  %v4955 = vld [vmem:[%s3 + $0xb0] sm:$0xf]
  %v4956 = vld [vmem:[%s3 + $0xb4] sm:$0xff]
  %v4957 = vld [vmem:[%s3 + $0xbc] sm:$0xff]
  %v4958 = vld [vmem:[%s3 + $0xc4] sm:$0xff]
  %v4959 = vld [vmem:[%s3 + $0xcc] sm:$0xff]
  %v4960 = vld [vmem:[%s3 + $0xd4] sm:$0xf]
  %v4961 = vld [vmem:[%s3 + $0xd8] sm:$0xff]
  %v4962 = vld [vmem:[%s3 + $0xe0] sm:$0xff]
  %v4963 = vld [vmem:[%s3 + $0xe8] sm:$0xff]
  %v4964 = vld [vmem:[%s3 + $0xf0] sm:$0xff]
  %v4965 = vld [vmem:[%s3 + $0xf8] sm:$0xf]
  %v4966 = vld [vmem:[%s3 + $0xfc] sm:$0xff]
  %v4967 = vld [vmem:[%s3 + $0x104] sm:$0xff]
  %v4968 = vld [vmem:[%s3 + $0x10c] sm:$0xff]
  %v4969 = vld [vmem:[%s3 + $0x114] sm:$0xff]
  %v4970 = vld [vmem:[%s3 + $0x11c] sm:$0xf]
  %v4971 = vld [vmem:[%s3 + $0x120] sm:$0xff]
  %v4972 = vld [vmem:[%s3 + $0x128] sm:$0xff]
  %v4973 = vld [vmem:[%s3 + $0x130] sm:$0xff]
  %v4974 = vld [vmem:[%s3 + $0x138] sm:$0xff]
  %v4975 = vld [vmem:[%s3 + $0x140] sm:$0xf]
  %v4976 = vld [vmem:[%s3 + $0x144] sm:$0xff]
  %v4977 = vld [vmem:[%s3 + $0x14c] sm:$0xff]
  %v4978 = vld [vmem:[%s3 + $0x154] sm:$0xff]
  %v4979 = vld [vmem:[%s3 + $0x15c] sm:$0xff]
  %v4980 = vld [vmem:[%s3 + $0x164] sm:$0xf]
  %v4981 = vld [vmem:[%s3 + $0x168] sm:$0xff]
  %v4982 = vld [vmem:[%s3 + $0x170] sm:$0xff]
  %v4983 = vld [vmem:[%s3 + $0x178] sm:$0xff]
  %v4984 = vld [vmem:[%s3 + $0x180] sm:$0xff]
  %v4985 = vld [vmem:[%s3 + $0x188] sm:$0xf]
  %v4986 = vld [vmem:[%s3 + $0x18c] sm:$0xff]
  %v4987 = vld [vmem:[%s3 + $0x194] sm:$0xff]
  %v4988 = vld [vmem:[%s3 + $0x19c] sm:$0xff]
  %v4989 = vld [vmem:[%s3 + $0x1a4] sm:$0xff]
  %v4990 = vld [vmem:[%s3 + $0x1ac] sm:$0xf]
  %v4991 = vld [vmem:[%s3 + $0x1b0] sm:$0xff]
  %v4992 = vld [vmem:[%s3 + $0x1b8] sm:$0xff]
  %v4993 = vld [vmem:[%s3 + $0x1c0] sm:$0xff]
  %v4994 = vld [vmem:[%s3 + $0x1c8] sm:$0xff]
  %v4995 = vld [vmem:[%s3 + $0x1d0] sm:$0xf]
  %v4996 = vld [vmem:[%s3 + $0x1d4] sm:$0xff]
  %v4997 = vld [vmem:[%s3 + $0x1dc] sm:$0xff]
  %v4998 = vld [vmem:[%s3 + $0x1e4] sm:$0xff]
  %v4999 = vld [vmem:[%s3 + $0x1ec] sm:$0xff]
  %v5000 = vld [vmem:[%s3 + $0x1f4] sm:$0xf]
  %v5001 = vld [vmem:[%s3 + $0x1f8] sm:$0xff]
  %v5002 = vld [vmem:[%s3 + $0x200] sm:$0xff]
  %v5003 = vld [vmem:[%s3 + $0x208] sm:$0xff]
  %v5004 = vld [vmem:[%s3 + $0x210] sm:$0xff]
  %v5005 = vld [vmem:[%s3 + $0x218] sm:$0xf]
  %v5006 = vld [vmem:[%s3 + $0x21c] sm:$0xff]
  %v5007 = vld [vmem:[%s3 + $0x224] sm:$0xff]
  %v5008 = vld [vmem:[%s3 + $0x22c] sm:$0xff]
  %v5009 = vld [vmem:[%s3 + $0x234] sm:$0xff]
  %v5010 = vld [vmem:[%s3 + $0x23c] sm:$0xf]
  %v5091 = vunpack.c.l.b16 %v4931
  %v5092 = vunpack.c.h.b16 %v4931
  %v5093 = vunpack.c.l.b16 %v4932
  %v5094 = vunpack.c.h.b16 %v4932
  %v5095 = vunpack.c.l.b16 %v4933
  %v5096 = vunpack.c.h.b16 %v4933
  %v5097 = vunpack.c.l.b16 %v4934
  %v5098 = vunpack.c.h.b16 %v4934
  %v5099 = vunpack.c.l.b16 %v4935
  %v5100 = vunpack.c.l.b16 %v4936
  %v5101 = vunpack.c.h.b16 %v4936
  %v5102 = vunpack.c.l.b16 %v4937
  %v5103 = vunpack.c.h.b16 %v4937
  %v5104 = vunpack.c.l.b16 %v4938
  %v5105 = vunpack.c.h.b16 %v4938
  %v5106 = vunpack.c.l.b16 %v4939
  %v5107 = vunpack.c.h.b16 %v4939
  %v5108 = vunpack.c.l.b16 %v4940
  %v5109 = vunpack.c.l.b16 %v4941
  %v5110 = vunpack.c.h.b16 %v4941
  %v5111 = vunpack.c.l.b16 %v4942
  %v5112 = vunpack.c.h.b16 %v4942
  %v5113 = vunpack.c.l.b16 %v4943
  %v5114 = vunpack.c.h.b16 %v4943
  %v5115 = vunpack.c.l.b16 %v4944
  %v5116 = vunpack.c.h.b16 %v4944
  %v5117 = vunpack.c.l.b16 %v4945
  %v5118 = vunpack.c.l.b16 %v4946
  %v5119 = vunpack.c.h.b16 %v4946
  %v5120 = vunpack.c.l.b16 %v4947
  %v5121 = vunpack.c.h.b16 %v4947
  %v5122 = vunpack.c.l.b16 %v4948
  %v5123 = vunpack.c.h.b16 %v4948
  %v5124 = vunpack.c.l.b16 %v4949
  %v5125 = vunpack.c.h.b16 %v4949
  %v5126 = vunpack.c.l.b16 %v4950
  %v5127 = vunpack.c.l.b16 %v4951
  %v5128 = vunpack.c.h.b16 %v4951
  %v5129 = vunpack.c.l.b16 %v4952
  %v5130 = vunpack.c.h.b16 %v4952
  %v5131 = vunpack.c.l.b16 %v4953
  %v5132 = vunpack.c.h.b16 %v4953
  %v5133 = vunpack.c.l.b16 %v4954
  %v5134 = vunpack.c.h.b16 %v4954
  %v5135 = vunpack.c.l.b16 %v4955
  %v5136 = vunpack.c.l.b16 %v4956
  %v5137 = vunpack.c.h.b16 %v4956
  %v5138 = vunpack.c.l.b16 %v4957
  %v5139 = vunpack.c.h.b16 %v4957
  %v5140 = vunpack.c.l.b16 %v4958
  %v5141 = vunpack.c.h.b16 %v4958
  %v5142 = vunpack.c.l.b16 %v4959
  %v5143 = vunpack.c.h.b16 %v4959
  %v5144 = vunpack.c.l.b16 %v4960
  %v5145 = vunpack.c.l.b16 %v4961
  %v5146 = vunpack.c.h.b16 %v4961
  %v5147 = vunpack.c.l.b16 %v4962
  %v5148 = vunpack.c.h.b16 %v4962
  %v5149 = vunpack.c.l.b16 %v4963
  %v5150 = vunpack.c.h.b16 %v4963
  %v5151 = vunpack.c.l.b16 %v4964
  %v5152 = vunpack.c.h.b16 %v4964
  %v5153 = vunpack.c.l.b16 %v4965
  %v5154 = vunpack.c.l.b16 %v4966
  %v5155 = vunpack.c.h.b16 %v4966
  %v5156 = vunpack.c.l.b16 %v4967
  %v5157 = vunpack.c.h.b16 %v4967
  %v5158 = vunpack.c.l.b16 %v4968
  %v5159 = vunpack.c.h.b16 %v4968
  %v5160 = vunpack.c.l.b16 %v4969
  %v5161 = vunpack.c.h.b16 %v4969
  %v5162 = vunpack.c.l.b16 %v4970
  %v5163 = vunpack.c.l.b16 %v4971
  %v5164 = vunpack.c.h.b16 %v4971
  %v5165 = vunpack.c.l.b16 %v4972
  %v5166 = vunpack.c.h.b16 %v4972
  %v5167 = vunpack.c.l.b16 %v4973
  %v5168 = vunpack.c.h.b16 %v4973
  %v5169 = vunpack.c.l.b16 %v4974
  %v5170 = vunpack.c.h.b16 %v4974
  %v5171 = vunpack.c.l.b16 %v4975
  %v5172 = vunpack.c.l.b16 %v4976
  %v5173 = vunpack.c.h.b16 %v4976
  %v5174 = vunpack.c.l.b16 %v4977
  %v5175 = vunpack.c.h.b16 %v4977
  %v5176 = vunpack.c.l.b16 %v4978
  %v5177 = vunpack.c.h.b16 %v4978
  %v5178 = vunpack.c.l.b16 %v4979
  %v5179 = vunpack.c.h.b16 %v4979
  %v5180 = vunpack.c.l.b16 %v4980
  %v5181 = vunpack.c.l.b16 %v4981
  %v5182 = vunpack.c.h.b16 %v4981
  %v5183 = vunpack.c.l.b16 %v4982
  %v5184 = vunpack.c.h.b16 %v4982
  %v5185 = vunpack.c.l.b16 %v4983
  %v5186 = vunpack.c.h.b16 %v4983
  %v5187 = vunpack.c.l.b16 %v4984
  %v5188 = vunpack.c.h.b16 %v4984
  %v5189 = vunpack.c.l.b16 %v4985
  %v5190 = vunpack.c.l.b16 %v4986
  %v5191 = vunpack.c.h.b16 %v4986
  %v5192 = vunpack.c.l.b16 %v4987
  %v5193 = vunpack.c.h.b16 %v4987
  %v5194 = vunpack.c.l.b16 %v4988
  %v5195 = vunpack.c.h.b16 %v4988
  %v5196 = vunpack.c.l.b16 %v4989
  %v5197 = vunpack.c.h.b16 %v4989
  %v5198 = vunpack.c.l.b16 %v4990
  %v5199 = vunpack.c.l.b16 %v4991
  %v5200 = vunpack.c.h.b16 %v4991
  %v5201 = vunpack.c.l.b16 %v4992
  %v5202 = vunpack.c.h.b16 %v4992
  %v5203 = vunpack.c.l.b16 %v4993
  %v5204 = vunpack.c.h.b16 %v4993
  %v5205 = vunpack.c.l.b16 %v4994
  %v5206 = vunpack.c.h.b16 %v4994
  %v5207 = vunpack.c.l.b16 %v4995
  %v5208 = vunpack.c.l.b16 %v4996
  %v5209 = vunpack.c.h.b16 %v4996
  %v5210 = vunpack.c.l.b16 %v4997
  %v5211 = vunpack.c.h.b16 %v4997
  %v5212 = vunpack.c.l.b16 %v4998
  %v5213 = vunpack.c.h.b16 %v4998
  %v5214 = vunpack.c.l.b16 %v4999
  %v5215 = vunpack.c.h.b16 %v4999
  %v5216 = vunpack.c.l.b16 %v5000
  %v5217 = vunpack.c.l.b16 %v5001
  %v5218 = vunpack.c.h.b16 %v5001
  %v5219 = vunpack.c.l.b16 %v5002
  %v5220 = vunpack.c.h.b16 %v5002
  %v5221 = vunpack.c.l.b16 %v5003
  %v5222 = vunpack.c.h.b16 %v5003
  %v5223 = vunpack.c.l.b16 %v5004
  %v5224 = vunpack.c.h.b16 %v5004
  %v5225 = vunpack.c.l.b16 %v5005
  %v5226 = vunpack.c.l.b16 %v5006
  %v5227 = vunpack.c.h.b16 %v5006
  %v5228 = vunpack.c.l.b16 %v5007
  %v5229 = vunpack.c.h.b16 %v5007
  %v5230 = vunpack.c.l.b16 %v5008
  %v5231 = vunpack.c.h.b16 %v5008
  %v5232 = vunpack.c.l.b16 %v5009
  %v5233 = vunpack.c.h.b16 %v5009
  %v5234 = vunpack.c.l.b16 %v5010
  %v5235 = vpack.c.b16 %v5100, %v5091
  %v5236 = vpack.c.b16 %v5101, %v5092
  %v5237 = vpack.c.b16 %v5102, %v5093
  %v5238 = vpack.c.b16 %v5103, %v5094
  %v5239 = vpack.c.b16 %v5104, %v5095
  %v5240 = vpack.c.b16 %v5105, %v5096
  %v5241 = vpack.c.b16 %v5106, %v5097
  %v5242 = vpack.c.b16 %v5107, %v5098
  %v5243 = vpack.c.b16 %v5108, %v5099
  %v5244 = vpack.c.b16 %v5118, %v5109
  %v5245 = vpack.c.b16 %v5119, %v5110
  %v5246 = vpack.c.b16 %v5120, %v5111
  %v5247 = vpack.c.b16 %v5121, %v5112
  %v5248 = vpack.c.b16 %v5122, %v5113
  %v5249 = vpack.c.b16 %v5123, %v5114
  %v5250 = vpack.c.b16 %v5124, %v5115
  %v5251 = vpack.c.b16 %v5125, %v5116
  %v5252 = vpack.c.b16 %v5126, %v5117
  %v5253 = vpack.c.b16 %v5136, %v5127
  %v5254 = vpack.c.b16 %v5137, %v5128
  %v5255 = vpack.c.b16 %v5138, %v5129
  %v5256 = vpack.c.b16 %v5139, %v5130
  %v5257 = vpack.c.b16 %v5140, %v5131
  %v5258 = vpack.c.b16 %v5141, %v5132
  %v5259 = vpack.c.b16 %v5142, %v5133
  %v5260 = vpack.c.b16 %v5143, %v5134
  %v5261 = vpack.c.b16 %v5144, %v5135
  %v5262 = vpack.c.b16 %v5154, %v5145
  %v5263 = vpack.c.b16 %v5155, %v5146
  %v5264 = vpack.c.b16 %v5156, %v5147
  %v5265 = vpack.c.b16 %v5157, %v5148
  %v5266 = vpack.c.b16 %v5158, %v5149
  %v5267 = vpack.c.b16 %v5159, %v5150
  %v5268 = vpack.c.b16 %v5160, %v5151
  %v5269 = vpack.c.b16 %v5161, %v5152
  %v5270 = vpack.c.b16 %v5162, %v5153
  %v5271 = vpack.c.b16 %v5172, %v5163
  %v5272 = vpack.c.b16 %v5173, %v5164
  %v5273 = vpack.c.b16 %v5174, %v5165
  %v5274 = vpack.c.b16 %v5175, %v5166
  %v5275 = vpack.c.b16 %v5176, %v5167
  %v5276 = vpack.c.b16 %v5177, %v5168
  %v5277 = vpack.c.b16 %v5178, %v5169
  %v5278 = vpack.c.b16 %v5179, %v5170
  %v5279 = vpack.c.b16 %v5180, %v5171
  %v5280 = vpack.c.b16 %v5190, %v5181
  %v5281 = vpack.c.b16 %v5191, %v5182
  %v5282 = vpack.c.b16 %v5192, %v5183
  %v5283 = vpack.c.b16 %v5193, %v5184
  %v5284 = vpack.c.b16 %v5194, %v5185
  %v5285 = vpack.c.b16 %v5195, %v5186
  %v5286 = vpack.c.b16 %v5196, %v5187
  %v5287 = vpack.c.b16 %v5197, %v5188
  %v5288 = vpack.c.b16 %v5198, %v5189
  %v5289 = vpack.c.b16 %v5208, %v5199
  %v5290 = vpack.c.b16 %v5209, %v5200
  %v5291 = vpack.c.b16 %v5210, %v5201
  %v5292 = vpack.c.b16 %v5211, %v5202
  %v5293 = vpack.c.b16 %v5212, %v5203
  %v5294 = vpack.c.b16 %v5213, %v5204
  %v5295 = vpack.c.b16 %v5214, %v5205
  %v5296 = vpack.c.b16 %v5215, %v5206
  %v5297 = vpack.c.b16 %v5216, %v5207
  %v5298 = vpack.c.b16 %v5226, %v5217
  %v5299 = vpack.c.b16 %v5227, %v5218
  %v5300 = vpack.c.b16 %v5228, %v5219
  %v5301 = vpack.c.b16 %v5229, %v5220
  %v5302 = vpack.c.b16 %v5230, %v5221
  %v5303 = vpack.c.b16 %v5231, %v5222
  %v5304 = vpack.c.b16 %v5232, %v5223
  %v5305 = vpack.c.b16 %v5233, %v5224
  %v5306 = vpack.c.b16 %v5234, %v5225
  %5379 = vmatpush.bf16.msra.mxu0 %v5298
  %5380 = vmatpush.bf16.msra.mxu0 %v5289
  %5381 = vmatpush.bf16.msra.mxu0 %v5280
  %5382 = vmatpush.bf16.msra.mxu0 %v5271
  %5383 = vmatpush.bf16.msra.mxu0 %v5262
  %5384 = vmatpush.bf16.msra.mxu0 %v5253
  %5385 = vmatpush.bf16.msra.mxu0 %v5244
  %5386 = vmatpush.bf16.msra.mxu0 %v5235
  %5387 = vmatmul.bf16.gmra.mxu0 %v4930
  %v5388 = vpop.f32.mrf.mxu0
  %v5389 = vadd.f32 0.0, %v5388
  %v5390 = vpop.f32.mrf.mxu0
  %5391 = vdwg.mxu0
  %5392 = vmatpush.bf16.msra.mxu0 %v5299
  %5393 = vmatpush.bf16.msra.mxu0 %v5290
  %5394 = vmatpush.bf16.msra.mxu0 %v5281
  %5395 = vmatpush.bf16.msra.mxu0 %v5272
  %5396 = vmatpush.bf16.msra.mxu0 %v5263
  %5397 = vmatpush.bf16.msra.mxu0 %v5254
  %5398 = vmatpush.bf16.msra.mxu0 %v5245
  %5399 = vmatpush.bf16.msra.mxu0 %v5236
  %5400 = vmatmul.bf16.gmra.mxu0 %v4930
  %v5401 = vpop.f32.mrf.mxu0
  %v5402 = vadd.f32 0.0, %v5401
  %v5403 = vpop.f32.mrf.mxu0
  %5404 = vdwg.mxu0
  %5405 = vmatpush.bf16.msra.mxu0 %v5300
  %5406 = vmatpush.bf16.msra.mxu0 %v5291
  %5407 = vmatpush.bf16.msra.mxu0 %v5282
  %5408 = vmatpush.bf16.msra.mxu0 %v5273
  %5409 = vmatpush.bf16.msra.mxu0 %v5264
  %5410 = vmatpush.bf16.msra.mxu0 %v5255
  %5411 = vmatpush.bf16.msra.mxu0 %v5246
  %5412 = vmatpush.bf16.msra.mxu0 %v5237
  %5413 = vmatmul.bf16.gmra.mxu0 %v4930
  %v5414 = vpop.f32.mrf.mxu0
  %v5415 = vadd.f32 0.0, %v5414
  %v5416 = vpop.f32.mrf.mxu0
  %5417 = vdwg.mxu0
  %5418 = vmatpush.bf16.msra.mxu0 %v5301
  %5419 = vmatpush.bf16.msra.mxu0 %v5292
  %5420 = vmatpush.bf16.msra.mxu0 %v5283
  %5421 = vmatpush.bf16.msra.mxu0 %v5274
  %5422 = vmatpush.bf16.msra.mxu0 %v5265
  %5423 = vmatpush.bf16.msra.mxu0 %v5256
  %5424 = vmatpush.bf16.msra.mxu0 %v5247
  %5425 = vmatpush.bf16.msra.mxu0 %v5238
  %5426 = vmatmul.bf16.gmra.mxu0 %v4930
  %v5427 = vpop.f32.mrf.mxu0
  %v5428 = vadd.f32 0.0, %v5427
  %v5429 = vpop.f32.mrf.mxu0
  %5430 = vdwg.mxu0
  %5431 = vmatpush.bf16.msra.mxu0 %v5302
  %5432 = vmatpush.bf16.msra.mxu0 %v5293
  %5433 = vmatpush.bf16.msra.mxu0 %v5284
  %5434 = vmatpush.bf16.msra.mxu0 %v5275
  %5435 = vmatpush.bf16.msra.mxu0 %v5266
  %5436 = vmatpush.bf16.msra.mxu0 %v5257
  %5437 = vmatpush.bf16.msra.mxu0 %v5248
  %5438 = vmatpush.bf16.msra.mxu0 %v5239
  %5439 = vmatmul.bf16.gmra.mxu0 %v4930
  %v5440 = vpop.f32.mrf.mxu0
  %v5441 = vadd.f32 0.0, %v5440
  %v5442 = vpop.f32.mrf.mxu0
  %5443 = vdwg.mxu0
  %5444 = vmatpush.bf16.msra.mxu0 %v5303
  %5445 = vmatpush.bf16.msra.mxu0 %v5294
  %5446 = vmatpush.bf16.msra.mxu0 %v5285
  %5447 = vmatpush.bf16.msra.mxu0 %v5276
  %5448 = vmatpush.bf16.msra.mxu0 %v5267
  %5449 = vmatpush.bf16.msra.mxu0 %v5258
  %5450 = vmatpush.bf16.msra.mxu0 %v5249
  %5451 = vmatpush.bf16.msra.mxu0 %v5240
  %5452 = vmatmul.bf16.gmra.mxu0 %v4930
  %v5453 = vpop.f32.mrf.mxu0
  %v5454 = vadd.f32 0.0, %v5453
  %v5455 = vpop.f32.mrf.mxu0
  %5456 = vdwg.mxu0
  %5457 = vmatpush.bf16.msra.mxu0 %v5304
  %5458 = vmatpush.bf16.msra.mxu0 %v5295
  %5459 = vmatpush.bf16.msra.mxu0 %v5286
  %5460 = vmatpush.bf16.msra.mxu0 %v5277
  %5461 = vmatpush.bf16.msra.mxu0 %v5268
  %5462 = vmatpush.bf16.msra.mxu0 %v5259
  %5463 = vmatpush.bf16.msra.mxu0 %v5250
  %5464 = vmatpush.bf16.msra.mxu0 %v5241
  %5465 = vmatmul.bf16.gmra.mxu0 %v4930
  %v5466 = vpop.f32.mrf.mxu0
  %v5467 = vadd.f32 0.0, %v5466
  %v5468 = vpop.f32.mrf.mxu0
  %5469 = vdwg.mxu0
  %5470 = vmatpush.bf16.msra.mxu0 %v5305
  %5471 = vmatpush.bf16.msra.mxu0 %v5296
  %5472 = vmatpush.bf16.msra.mxu0 %v5287
  %5473 = vmatpush.bf16.msra.mxu0 %v5278
  %5474 = vmatpush.bf16.msra.mxu0 %v5269
  %5475 = vmatpush.bf16.msra.mxu0 %v5260
  %5476 = vmatpush.bf16.msra.mxu0 %v5251
  %5477 = vmatpush.bf16.msra.mxu0 %v5242
  %5478 = vmatmul.bf16.gmra.mxu0 %v4930
  %v5479 = vpop.f32.mrf.mxu0
  %v5480 = vadd.f32 0.0, %v5479
  %v5481 = vpop.f32.mrf.mxu0
  %5482 = vdwg.mxu0
  %5483 = vmatpush.bf16.msra.mxu0 %v5306
  %5484 = vmatpush.bf16.msra.mxu0 %v5297
  %5485 = vmatpush.bf16.msra.mxu0 %v5288
  %5486 = vmatpush.bf16.msra.mxu0 %v5279
  %5487 = vmatpush.bf16.msra.mxu0 %v5270
  %5488 = vmatpush.bf16.msra.mxu0 %v5261
  %5489 = vmatpush.bf16.msra.mxu0 %v5252
  %5490 = vmatpush.bf16.msra.mxu0 %v5243
  %5491 = vmatmul.bf16.gmra.mxu0 %v4930
  %v5492 = vpop.f32.mrf.mxu0
  %v5493 = vadd.f32 0.0, %v5492
  %v5494 = vpop.f32.mrf.mxu0
  %5495 = vdwg.mxu0
  %5496 = vst [vmem:[#allocation2] sm:$0x3] %v5389
  %5497 = vst [vmem:[#allocation2 + $0x2] sm:$0x3] %v5402
  %5498 = vst [vmem:[#allocation2 + $0x4] sm:$0x3] %v5415
  %5499 = vst [vmem:[#allocation2 + $0x6] sm:$0x3] %v5428
  %5500 = vst [vmem:[#allocation2 + $0x8] sm:$0x3] %v5441
  %5501 = vst [vmem:[#allocation2 + $0xa] sm:$0x3] %v5454
  %5502 = vst [vmem:[#allocation2 + $0xc] sm:$0x3] %v5467
  %5503 = vst [vmem:[#allocation2 + $0xe] sm:$0x3] %v5480
  %5504 = vst [vmem:[#allocation2 + $0x10] sm:$0x3] %v5493
  %v5505 = vld [vmem:[%s0] sm:$0xff]
  %v5506 = vld [vmem:[%s0 + $0x8] sm:$0xff]
  %v5507 = vld [vmem:[%s0 + $0x10] sm:$0xff]
  %v5508 = vld [vmem:[%s0 + $0x18] sm:$0xff]
  %v5509 = vld [vmem:[%s4] sm:$0xf]
  %v5510 = vld [vmem:[%s4 + $0x4] sm:$0xf]
  %v5511 = vld [vmem:[%s4 + $0x8] sm:$0xf]
  %v5512 = vld [vmem:[%s4 + $0xc] sm:$0xf]
  %v5513 = vld [vmem:[#allocation2] sm:$0xff]
  %v5514 = vld [vmem:[#allocation2 + $0x8] sm:$0xff]
  %v5515 = vld [vmem:[#allocation2 + $0x10] sm:$0x3]
  %v5516 = vpack.c.bf16 %v5514, %v5513
  %v5517 = vpack.c.bf16 %v5515, %v5515
  %v5522 = vunpack.c.l.b16 %v5509
  %v5523 = vunpack.c.l.b16 %v5510
  %v5524 = vunpack.c.l.b16 %v5511
  %v5525 = vunpack.c.l.b16 %v5512
  %v5526 = vpack.c.b16 %v5523, %v5522
  %v5527 = vpack.c.b16 %v5525, %v5524
  %v5529 = vsel %vm627, %v5526, 0
  %v5532 = vsel %vm627, %v5527, 0
  %v5535 = vsel %vm634, %v5517, 0
  %5537 = vmatpush.bf16.msra.mxu0 0
  %5538 = vmatpush.bf16.msra.mxu0 0
  %5539 = vmatpush.bf16.msra.mxu0 0
  %5540 = vmatpush.bf16.msra.mxu0 0
  %5541 = vmatpush.bf16.msra.mxu0 0
  %5542 = vmatpush.bf16.msra.mxu0 0
  %5543 = vmatpush.bf16.msra.mxu0 %v5535
  %5544 = vmatpush.bf16.msra.mxu0 %v5516
  %5545 = vmatmul.bf16.gmra.mxu0 %v5529
  %v5546 = vpop.f32.mrf.mxu0
  %v5547 = vadd.f32 0.0, %v5546
  %v5548 = vpop.f32.mrf.mxu0
  %v5549 = vadd.f32 0.0, %v5548
  %5550 = vmatmul.bf16.gmra.mxu0 %v5532
  %v5551 = vpop.f32.mrf.mxu0
  %v5552 = vadd.f32 0.0, %v5551
  %v5553 = vpop.f32.mrf.mxu0
  %v5554 = vadd.f32 0.0, %v5553
  %5555 = vdwg.mxu0
  %v5556 = vadd.f32 %v5505, %v5547
  %v5557 = vadd.f32 %v5506, %v5549
  %v5558 = vadd.f32 %v5507, %v5552
  %v5559 = vadd.f32 %v5508, %v5554
  %v5560 = vmul.f32 %v5556, %v5556
  %v5561 = vmul.f32 %v5557, %v5557
  %v5562 = vmul.f32 %v5558, %v5558
  %v5563 = vmul.f32 %v5559, %v5559
  %v5564 = vmul.f32 %v5556, %v5560
  %v5565 = vmul.f32 %v5557, %v5561
  %v5566 = vmul.f32 %v5558, %v5562
  %v5567 = vmul.f32 %v5559, %v5563
  %v5568 = vmul.f32 %v5564, 0.044715
  %v5569 = vmul.f32 %v5565, 0.044715
  %v5570 = vmul.f32 %v5566, 0.044715
  %v5571 = vmul.f32 %v5567, 0.044715
  %v5572 = vadd.f32 %v5556, %v5568
  %v5573 = vadd.f32 %v5557, %v5569
  %v5574 = vadd.f32 %v5558, %v5570
  %v5575 = vadd.f32 %v5559, %v5571
  %v5576 = vmul.f32 %v5572, 0.7978846
  %v5577 = vmul.f32 %v5573, 0.7978846
  %v5578 = vmul.f32 %v5574, 0.7978846
  %v5579 = vmul.f32 %v5575, 0.7978846
  %v5580 = vtanh.pop %v5576
  %v5581 = vtanh.pop %v5577
  %v5582 = vtanh.pop %v5578
  %v5583 = vtanh.pop %v5579
  %v5584 = vadd.f32 %v5580, 1.0
  %v5585 = vadd.f32 %v5581, 1.0
  %v5586 = vadd.f32 %v5582, 1.0
  %v5587 = vadd.f32 %v5583, 1.0
  %v5588 = vmul.f32 %v5584, 0.5
  %v5589 = vmul.f32 %v5585, 0.5
  %v5590 = vmul.f32 %v5586, 0.5
  %v5591 = vmul.f32 %v5587, 0.5
  %v5592 = vmul.f32 %v5556, %v5588
  %v5593 = vmul.f32 %v5557, %v5589
  %v5594 = vmul.f32 %v5558, %v5590
  %v5595 = vmul.f32 %v5559, %v5591
  %v5596 = vld [vmem:[%s5] sm:$0x1]
  %v5597 = vpack.c.bf16 %v5593, %v5592
  %v5598 = vpack.c.bf16 %v5595, %v5594
  %v5599 = vld [vmem:[%s6] sm:$0x3]
  %5601 = vset.pattern.permute.xlu0 0
  %5602 = vperm.xlu0 %5601, %v5599
  %v5603 = vpop.permute.xlu0 %5602
  %v5606 = vsel %vm706, %v5596, 0
  %5608 = vmatpush.bf16.msra.mxu0 0
  %5609 = vmatpush.bf16.msra.mxu0 0
  %5610 = vmatpush.bf16.msra.mxu0 0
  %5611 = vmatpush.bf16.msra.mxu0 0
  %5612 = vmatpush.bf16.msra.mxu0 0
  %5613 = vmatpush.bf16.msra.mxu0 0
  %5614 = vmatpush.bf16.msra.mxu0 %v5598
  %5615 = vmatpush.bf16.msra.mxu0 %v5597
  %5616 = vmatmul.bf16.gmra.mxu0 %v5606
  %v5617 = vpop.f32.mrf.mxu0
  %v5618 = vadd.f32 %v5603, %v5617
  %v5619 = vpop.f32.mrf.mxu0
  %5620 = vdwg.mxu0
  %v5621 = vmax.f32 %v5618, -1.0
  %v5622 = vmin.f32 %v5621, 1.0
  %v5623 = vmul.f32 %v4929, 0.0
  %v5624 = vadd.f32 %v5622, %v5623
  %5625 = vst [vmem:[%s7] sm:$0x3] %v5624
  // Predicated region
  $region30: #{diffusion_denoise_forward.1} parent=0 // pred_check
    _
  $region31: #{diffusion_denoise_forward.1} parent=0 // pred_check_branch
    %5627 = sbr.rel (0) target = $region33
  $region32: #{diffusion_denoise_forward.1} parent=0 // pred_region
    _
  $region33: #{diffusion_denoise_forward.1} parent=0 // pred_fallthru
    _
  // Predicated region
  $region34: #{diffusion_denoise_forward.1} parent=0 // pred_check
    _
  $region35: #{diffusion_denoise_forward.1} parent=0 // pred_check_branch
    %5629 = sbr.rel (0) target = $region37
  $region36: #{diffusion_denoise_forward.1} parent=0 // pred_region
    _
  $region37: #{diffusion_denoise_forward.1} parent=0 // pred_fallthru
    _

</llo_original>
